<compile_context>
chip_gen: v7x
topology: tpu7x:2x2x1
jax: 0.10.0
libtpu: 0.0.40
codegen_flags: <defaults>
</compile_context>

<pallas_src>
import jax
import jax.numpy as jnp
from jax import lax
from jax.experimental import pallas as pl
from jax.experimental.pallas import tpu as pltpu


def _make_adapter_kernel(heads: int):
    """Builds the kernel; `heads` is a static closure constant."""

    def kernel(x_ref, wbig_ref, bbig_ref, wout_ref, bout_ref, o_ref):
        b_blk, S, D = x_ref.shape
        N = b_blk * S
        ds = wbig_ref.shape[1] // 4
        hd = ds // heads
        eps = 1e-5
        mm_dtype = wbig_ref.dtype

        x = x_ref[...].reshape(N, D)                      # (N, D) f32, batch in rows

        # ---- shared LayerNorm core (gamma/beta folded into fused weights) ----
        mu = jnp.mean(x, axis=-1, keepdims=True)
        xc = x - mu
        var = jnp.mean(xc * xc, axis=-1, keepdims=True)
        xn = xc * lax.rsqrt(var + eps)                    # (N, D) f32

        # ---- fused projection: [q*sqrt(D) | k | v | h1_pre] in one matmul ----
        qkvh1 = jnp.dot(xn.astype(mm_dtype), wbig_ref[...],
                        preferred_element_type=jnp.float32) + bbig_ref[...]
        q = qkvh1[:, 0 * ds:1 * ds]
        k = qkvh1[:, 1 * ds:2 * ds]
        v = qkvh1[:, 2 * ds:3 * ds]
        h1 = jnp.maximum(qkvh1[:, 3 * ds:4 * ds], 0.0)    # ReLU(LN_f(x) @ W1 + b1)

        # ---- attention: all (head, batch-element) problems in one batched einsum ----
        def split_heads(t):   # (N, ds) -> (heads*b_blk, S, hd), batch index = h*b_blk + b
            return jnp.concatenate(
                [t[:, h * hd:(h + 1) * hd].reshape(b_blk, S, hd)
                 for h in range(heads)], axis=0)

        qb, kb, vb = split_heads(q), split_heads(k), split_heads(v)
        dots = jnp.einsum('bqd,bkd->bqk', qb, kb,
                          preferred_element_type=jnp.float32)        # (BH, S, S)
        row = lax.broadcasted_iota(jnp.int32, (S, S), 0)
        col = lax.broadcasted_iota(jnp.int32, (S, S), 1)
        neg = jnp.float32(-jnp.finfo(jnp.float32).max)
        dots = jnp.where((col > row)[None, :, :], neg, dots)         # causal mask
        dots = dots - jnp.max(dots, axis=-1, keepdims=True)
        p = jnp.exp(dots)
        p = p * pl.reciprocal(jnp.sum(p, axis=-1, keepdims=True), approx=True)
        # TODO(synk): attention dropout omitted (eval-mode semantics: identity).
        ctx = jnp.einsum('bqk,bkd->bqd', p, vb,
                         preferred_element_type=jnp.float32)         # (BH, S, hd)

        # merge heads back to (N, ds), column order (h, d) matching Wo's rows
        ctx_m = jnp.concatenate(
            [ctx[h * b_blk:(h + 1) * b_blk].reshape(N, hd) for h in range(heads)],
            axis=1)

        # ---- fused output projection: [ctx | relu(h1)] @ [Wo ; W2] + b2 ----
        cat = jnp.concatenate([ctx_m, h1], axis=1).astype(mm_dtype)  # (N, 2*ds)
        adapters = jnp.dot(cat, wout_ref[...],
                           preferred_element_type=jnp.float32) + bout_ref[...]
        # TODO(synk): ff dropout omitted (eval-mode semantics: identity).

        o_ref[...] = (x + adapters).reshape(b_blk, S, D)

    return kernel


def _fuse_params(p, dim):
    """Fold LN gamma/beta and the softmax scale into concatenated matmul operands."""
    sqrt_d = jnp.float32(dim) ** 0.5          # torch: dots = q @ k.T / dim**-0.5
    ga, ba = p["gamma_a"][0], p["beta_a"][0]
    gf, bf = p["gamma_f"][0], p["beta_f"][0]
    w_big = jnp.concatenate([
        ga[:, None] * p["wq"] * sqrt_d,
        ga[:, None] * p["wk"],
        ga[:, None] * p["wv"],
        gf[:, None] * p["w1"],
    ], axis=1)                                 # (D, 4*ds)
    b_big = jnp.concatenate([
        (ba @ p["wq"]) * sqrt_d,
        ba @ p["wk"],
        ba @ p["wv"],
        bf @ p["w1"] + p["b1"][0],
    ], axis=0)[None, :]                        # (1, 4*ds)
    w_out = jnp.concatenate([p["wo"], p["w2"]], axis=0)   # (2*ds, D)
    b_out = p["b2"]                            # (1, D)
    return (w_big.astype(jnp.bfloat16), b_big.astype(jnp.float32),
            w_out.astype(jnp.bfloat16), b_out.astype(jnp.float32))


def attention_adapter_forward(x, params, heads, num_batch_blocks=1):
    """num_batch_blocks=1 collapses the grid to one step (v5e/v6e: single TC);
    use num_batch_blocks=2 on v7x to spread the batch across both TensorCores."""
    B, S, D = x.shape
    ds = params["wq"].shape[1]
    assert ds % heads == 0
    assert B % num_batch_blocks == 0
    b_blk = B // num_batch_blocks

    w_big, b_big, w_out, b_out = _fuse_params(params, D)
    kernel = _make_adapter_kernel(heads)

    grid_spec = pltpu.PrefetchScalarGridSpec(
        num_scalar_prefetch=0,
        grid=(num_batch_blocks,),
        in_specs=[
            pl.BlockSpec((b_blk, S, D), lambda b: (b, 0, 0)),     # x
            pl.BlockSpec((D, 4 * ds), lambda b: (0, 0)),          # fused in-proj weight
            pl.BlockSpec((1, 4 * ds), lambda b: (0, 0)),          # fused in-proj bias
            pl.BlockSpec((2 * ds, D), lambda b: (0, 0)),          # fused out-proj weight
            pl.BlockSpec((1, D), lambda b: (0, 0)),               # out-proj bias (b2)
        ],
        out_specs=pl.BlockSpec((b_blk, S, D), lambda b: (b, 0, 0)),
    )
    return pl.pallas_call(
        kernel,
        out_shape=jax.ShapeDtypeStruct((B, S, D), jnp.float32),
        grid_spec=grid_spec,
        compiler_params=pltpu.CompilerParams(dimension_semantics=("parallel",)),
    )(x, w_big, b_big, w_out, b_out)


def init_params(key, dim, downsample_factor=12, std=1e-3):
    """Synthetic init matching init_weights (normal std=1e-3, zero bias, LN weight=1 /
    bias=0).  Linear weights stored pre-transposed as (in_features, out_features)."""
    ds = dim // downsample_factor
    ks = jax.random.split(key, 6)
    f32 = jnp.float32
    return {
        "gamma_a": jnp.ones((1, dim), f32),
        "beta_a":  jnp.zeros((1, dim), f32),
        "wq": (jax.random.normal(ks[0], (dim, ds)) * std).astype(f32),
        "wk": (jax.random.normal(ks[1], (dim, ds)) * std).astype(f32),
        "wv": (jax.random.normal(ks[2], (dim, ds)) * std).astype(f32),
        "wo": (jax.random.normal(ks[3], (ds, dim)) * std).astype(f32),
        "gamma_f": jnp.ones((1, dim), f32),
        "beta_f":  jnp.zeros((1, dim), f32),
        "w1": (jax.random.normal(ks[4], (dim, ds)) * std).astype(f32),
        "b1": jnp.zeros((1, ds), f32),
        "w2": (jax.random.normal(ks[5], (ds, dim)) * std).astype(f32),
        "b2": jnp.zeros((1, dim), f32),
    }


def reference_forward(x, p, heads):
    """Pure-JAX reference mirroring the PyTorch forward exactly (eval mode, f32)."""
    def ln(z, g, b):
        mu = jnp.mean(z, -1, keepdims=True)
        var = jnp.mean((z - mu) ** 2, -1, keepdims=True)
        return (z - mu) * lax.rsqrt(var + 1e-5) * g + b

    B, S, D = x.shape
    ds = p["wq"].shape[1]
    hd = ds // heads
    xa = ln(x, p["gamma_a"][0], p["beta_a"][0])
    q = (xa @ p["wq"]).reshape(B, S, heads, hd).transpose(0, 2, 1, 3)
    k = (xa @ p["wk"]).reshape(B, S, heads, hd).transpose(0, 2, 1, 3)
    v = (xa @ p["wv"]).reshape(B, S, heads, hd).transpose(0, 2, 1, 3)
    dots = jnp.einsum("bhid,bhjd->bhij", q, k) / (D ** (-0.5))
    causal = jnp.arange(S)[:, None] < jnp.arange(S)[None, :]
    dots = jnp.where(causal[None, None], -jnp.finfo(jnp.float32).max, dots)
    attn = jax.nn.softmax(dots, axis=-1)
    ctx = jnp.einsum("bhij,bhjd->bhid", attn, v).transpose(0, 2, 1, 3).reshape(B, S, ds)
    attn_out = ctx @ p["wo"]
    xf = ln(x, p["gamma_f"][0], p["beta_f"][0])
    ff_out = jnp.maximum(xf @ p["w1"] + p["b1"][0], 0.0) @ p["w2"] + p["b2"][0]
    return x + attn_out + ff_out


if __name__ == "__main__":
    dim, downsample_factor, heads = 384, 12, 8     # downsample_dim = 32, head_dim = 4
    B, S = 2, 8

    key = jax.random.PRNGKey(0)
    kx, kp = jax.random.split(key)
    x = jax.random.normal(kx, (B, S, dim), dtype=jnp.float32)
    params = init_params(kp, dim, downsample_factor)

    out = attention_adapter_forward(x, params, heads)
    out = jax.block_until_ready(out)

    ref = reference_forward(x, params, heads)
    assert out.shape == (B, S, dim)
    max_err = float(jnp.max(jnp.abs(out - ref)))
    assert jnp.allclose(out, ref, atol=1e-4, rtol=1e-4), f"max abs err = {max_err}"
    print("KERNEL_OK")
</pallas_src>

<mosaic_0001>
module attributes {stable_mosaic.version = 11 : i64} {
  func.func @kernel(%arg0: i32, %arg1: memref<2x8x384xf32, #tpu.memory_space<vmem>>, %arg2: memref<384x128xbf16, #tpu.memory_space<vmem>>, %arg3: memref<1x128xf32, #tpu.memory_space<vmem>>, %arg4: memref<64x384xbf16, #tpu.memory_space<vmem>>, %arg5: memref<1x384xf32, #tpu.memory_space<vmem>>, %arg6: memref<2x8x384xf32, #tpu.memory_space<vmem>>) attributes {dimension_semantics = [#tpu.dimension_semantics<parallel>], iteration_bounds = array<i64: 1>, scalar_prefetch = 0 : i64, scratch_operands = 0 : i64, tpu.core_type = #tpu.core_type<tc>, window_params = [{transform_indices = @transform_0, window_bounds = array<i64: 2, 8, 384>}, {pipeline_mode = #tpu.pipeline_mode<synchronous>, transform_indices = @transform_1, window_bounds = array<i64: 384, 128>}, {pipeline_mode = #tpu.pipeline_mode<synchronous>, transform_indices = @transform_2, window_bounds = array<i64: 1, 128>}, {pipeline_mode = #tpu.pipeline_mode<synchronous>, transform_indices = @transform_3, window_bounds = array<i64: 64, 384>}, {pipeline_mode = #tpu.pipeline_mode<synchronous>, transform_indices = @transform_4, window_bounds = array<i64: 1, 384>}, {transform_indices = @transform_5, window_bounds = array<i64: 2, 8, 384>}]} {
    %c0 = arith.constant 0 : index
    %c0_0 = arith.constant 0 : index
    %c0_1 = arith.constant 0 : index
    %0 = vector.load %arg1[%c0, %c0_0, %c0_1] : memref<2x8x384xf32, #tpu.memory_space<vmem>>, vector<2x8x384xf32>
    %1 = vector.shape_cast %0 : vector<2x8x384xf32> to vector<16x384xf32>
    %cst = arith.constant dense<0.000000e+00> : vector<16xf32>
    %2 = vector.multi_reduction <add>, %1, %cst [1] : vector<16x384xf32> to vector<16xf32>
    %3 = vector.shape_cast %2 : vector<16xf32> to vector<16x1xf32>
    %cst_2 = arith.constant 3.840000e+02 : f32
    %4 = vector.broadcast %cst_2 : f32 to vector<16x1xf32>
    %5 = arith.divf %3, %4 : vector<16x1xf32>
    %6 = vector.broadcast %5 : vector<16x1xf32> to vector<16x384xf32>
    %7 = arith.subf %1, %6 : vector<16x384xf32>
    %8 = arith.mulf %7, %7 : vector<16x384xf32>
    %cst_3 = arith.constant dense<0.000000e+00> : vector<16xf32>
    %9 = vector.multi_reduction <add>, %8, %cst_3 [1] : vector<16x384xf32> to vector<16xf32>
    %10 = vector.shape_cast %9 : vector<16xf32> to vector<16x1xf32>
    %cst_4 = arith.constant 3.840000e+02 : f32
    %11 = vector.broadcast %cst_4 : f32 to vector<16x1xf32>
    %12 = arith.divf %10, %11 : vector<16x1xf32>
    %cst_5 = arith.constant 9.99999974E-6 : f32
    %13 = vector.broadcast %cst_5 : f32 to vector<16x1xf32>
    %14 = arith.addf %12, %13 : vector<16x1xf32>
    %15 = math.rsqrt %14 : vector<16x1xf32>
    %16 = vector.broadcast %15 : vector<16x1xf32> to vector<16x384xf32>
    %17 = arith.mulf %7, %16 : vector<16x384xf32>
    %18 = arith.truncf %17 : vector<16x384xf32> to vector<16x384xbf16>
    %c0_6 = arith.constant 0 : index
    %c0_7 = arith.constant 0 : index
    %19 = vector.load %arg2[%c0_6, %c0_7] : memref<384x128xbf16, #tpu.memory_space<vmem>>, vector<384x128xbf16>
    %cst_8 = arith.constant dense<0.000000e+00> : vector<16x128xf32>
    %20 = tpu.matmul %18, %19, %cst_8 {dimension_numbers = #tpu.dot_dimension_numbers<[1], [0], [0], [1], [0, 0, 1, 1], [], []>} : vector<16x384xbf16>, vector<384x128xbf16>, vector<16x128xf32> -> vector<16x128xf32>
    %c0_9 = arith.constant 0 : index
    %c0_10 = arith.constant 0 : index
    %21 = vector.load %arg3[%c0_9, %c0_10] : memref<1x128xf32, #tpu.memory_space<vmem>>, vector<1x128xf32>
    %22 = vector.broadcast %21 : vector<1x128xf32> to vector<16x128xf32>
    %23 = arith.addf %20, %22 : vector<16x128xf32>
    %24 = vector.extract_strided_slice %23 {offsets = [0, 0], sizes = [16, 32], strides = [1, 1]} : vector<16x128xf32> to vector<16x32xf32>
    %25 = vector.extract_strided_slice %23 {offsets = [0, 32], sizes = [16, 32], strides = [1, 1]} : vector<16x128xf32> to vector<16x32xf32>
    %26 = vector.extract_strided_slice %23 {offsets = [0, 64], sizes = [16, 32], strides = [1, 1]} : vector<16x128xf32> to vector<16x32xf32>
    %27 = vector.extract_strided_slice %23 {offsets = [0, 96], sizes = [16, 32], strides = [1, 1]} : vector<16x128xf32> to vector<16x32xf32>
    %cst_11 = arith.constant 0.000000e+00 : f32
    %28 = vector.broadcast %cst_11 : f32 to vector<16x32xf32>
    %29 = arith.maximumf %27, %28 : vector<16x32xf32>
    %30 = vector.extract_strided_slice %24 {offsets = [0, 0], sizes = [16, 4], strides = [1, 1]} : vector<16x32xf32> to vector<16x4xf32>
    %31 = vector.shape_cast %30 : vector<16x4xf32> to vector<2x8x4xf32>
    %32 = vector.extract_strided_slice %24 {offsets = [0, 4], sizes = [16, 4], strides = [1, 1]} : vector<16x32xf32> to vector<16x4xf32>
    %33 = vector.shape_cast %32 : vector<16x4xf32> to vector<2x8x4xf32>
    %34 = vector.extract_strided_slice %24 {offsets = [0, 8], sizes = [16, 4], strides = [1, 1]} : vector<16x32xf32> to vector<16x4xf32>
    %35 = vector.shape_cast %34 : vector<16x4xf32> to vector<2x8x4xf32>
    %36 = vector.extract_strided_slice %24 {offsets = [0, 12], sizes = [16, 4], strides = [1, 1]} : vector<16x32xf32> to vector<16x4xf32>
    %37 = vector.shape_cast %36 : vector<16x4xf32> to vector<2x8x4xf32>
    %38 = vector.extract_strided_slice %24 {offsets = [0, 16], sizes = [16, 4], strides = [1, 1]} : vector<16x32xf32> to vector<16x4xf32>
    %39 = vector.shape_cast %38 : vector<16x4xf32> to vector<2x8x4xf32>
    %40 = vector.extract_strided_slice %24 {offsets = [0, 20], sizes = [16, 4], strides = [1, 1]} : vector<16x32xf32> to vector<16x4xf32>
    %41 = vector.shape_cast %40 : vector<16x4xf32> to vector<2x8x4xf32>
    %42 = vector.extract_strided_slice %24 {offsets = [0, 24], sizes = [16, 4], strides = [1, 1]} : vector<16x32xf32> to vector<16x4xf32>
    %43 = vector.shape_cast %42 : vector<16x4xf32> to vector<2x8x4xf32>
    %44 = vector.extract_strided_slice %24 {offsets = [0, 28], sizes = [16, 4], strides = [1, 1]} : vector<16x32xf32> to vector<16x4xf32>
    %45 = vector.shape_cast %44 : vector<16x4xf32> to vector<2x8x4xf32>
    %46 = tpu.concatenate %31, %33, %35, %37, %39, %41, %43, %45 in 0 : vector<2x8x4xf32>, vector<2x8x4xf32>, vector<2x8x4xf32>, vector<2x8x4xf32>, vector<2x8x4xf32>, vector<2x8x4xf32>, vector<2x8x4xf32>, vector<2x8x4xf32> -> vector<16x8x4xf32>
    %47 = vector.extract_strided_slice %25 {offsets = [0, 0], sizes = [16, 4], strides = [1, 1]} : vector<16x32xf32> to vector<16x4xf32>
    %48 = vector.shape_cast %47 : vector<16x4xf32> to vector<2x8x4xf32>
    %49 = vector.extract_strided_slice %25 {offsets = [0, 4], sizes = [16, 4], strides = [1, 1]} : vector<16x32xf32> to vector<16x4xf32>
    %50 = vector.shape_cast %49 : vector<16x4xf32> to vector<2x8x4xf32>
    %51 = vector.extract_strided_slice %25 {offsets = [0, 8], sizes = [16, 4], strides = [1, 1]} : vector<16x32xf32> to vector<16x4xf32>
    %52 = vector.shape_cast %51 : vector<16x4xf32> to vector<2x8x4xf32>
    %53 = vector.extract_strided_slice %25 {offsets = [0, 12], sizes = [16, 4], strides = [1, 1]} : vector<16x32xf32> to vector<16x4xf32>
    %54 = vector.shape_cast %53 : vector<16x4xf32> to vector<2x8x4xf32>
    %55 = vector.extract_strided_slice %25 {offsets = [0, 16], sizes = [16, 4], strides = [1, 1]} : vector<16x32xf32> to vector<16x4xf32>
    %56 = vector.shape_cast %55 : vector<16x4xf32> to vector<2x8x4xf32>
    %57 = vector.extract_strided_slice %25 {offsets = [0, 20], sizes = [16, 4], strides = [1, 1]} : vector<16x32xf32> to vector<16x4xf32>
    %58 = vector.shape_cast %57 : vector<16x4xf32> to vector<2x8x4xf32>
    %59 = vector.extract_strided_slice %25 {offsets = [0, 24], sizes = [16, 4], strides = [1, 1]} : vector<16x32xf32> to vector<16x4xf32>
    %60 = vector.shape_cast %59 : vector<16x4xf32> to vector<2x8x4xf32>
    %61 = vector.extract_strided_slice %25 {offsets = [0, 28], sizes = [16, 4], strides = [1, 1]} : vector<16x32xf32> to vector<16x4xf32>
    %62 = vector.shape_cast %61 : vector<16x4xf32> to vector<2x8x4xf32>
    %63 = tpu.concatenate %48, %50, %52, %54, %56, %58, %60, %62 in 0 : vector<2x8x4xf32>, vector<2x8x4xf32>, vector<2x8x4xf32>, vector<2x8x4xf32>, vector<2x8x4xf32>, vector<2x8x4xf32>, vector<2x8x4xf32>, vector<2x8x4xf32> -> vector<16x8x4xf32>
    %64 = vector.extract_strided_slice %26 {offsets = [0, 0], sizes = [16, 4], strides = [1, 1]} : vector<16x32xf32> to vector<16x4xf32>
    %65 = vector.shape_cast %64 : vector<16x4xf32> to vector<2x8x4xf32>
    %66 = vector.extract_strided_slice %26 {offsets = [0, 4], sizes = [16, 4], strides = [1, 1]} : vector<16x32xf32> to vector<16x4xf32>
    %67 = vector.shape_cast %66 : vector<16x4xf32> to vector<2x8x4xf32>
    %68 = vector.extract_strided_slice %26 {offsets = [0, 8], sizes = [16, 4], strides = [1, 1]} : vector<16x32xf32> to vector<16x4xf32>
    %69 = vector.shape_cast %68 : vector<16x4xf32> to vector<2x8x4xf32>
    %70 = vector.extract_strided_slice %26 {offsets = [0, 12], sizes = [16, 4], strides = [1, 1]} : vector<16x32xf32> to vector<16x4xf32>
    %71 = vector.shape_cast %70 : vector<16x4xf32> to vector<2x8x4xf32>
    %72 = vector.extract_strided_slice %26 {offsets = [0, 16], sizes = [16, 4], strides = [1, 1]} : vector<16x32xf32> to vector<16x4xf32>
    %73 = vector.shape_cast %72 : vector<16x4xf32> to vector<2x8x4xf32>
    %74 = vector.extract_strided_slice %26 {offsets = [0, 20], sizes = [16, 4], strides = [1, 1]} : vector<16x32xf32> to vector<16x4xf32>
    %75 = vector.shape_cast %74 : vector<16x4xf32> to vector<2x8x4xf32>
    %76 = vector.extract_strided_slice %26 {offsets = [0, 24], sizes = [16, 4], strides = [1, 1]} : vector<16x32xf32> to vector<16x4xf32>
    %77 = vector.shape_cast %76 : vector<16x4xf32> to vector<2x8x4xf32>
    %78 = vector.extract_strided_slice %26 {offsets = [0, 28], sizes = [16, 4], strides = [1, 1]} : vector<16x32xf32> to vector<16x4xf32>
    %79 = vector.shape_cast %78 : vector<16x4xf32> to vector<2x8x4xf32>
    %80 = tpu.concatenate %65, %67, %69, %71, %73, %75, %77, %79 in 0 : vector<2x8x4xf32>, vector<2x8x4xf32>, vector<2x8x4xf32>, vector<2x8x4xf32>, vector<2x8x4xf32>, vector<2x8x4xf32>, vector<2x8x4xf32>, vector<2x8x4xf32> -> vector<16x8x4xf32>
    "tpu.trace_start"() <{level = 10 : i32, message = "bqd,bkd->bqk"}> : () -> ()
    %cst_12 = arith.constant dense<0.000000e+00> : vector<16x8x8xf32>
    %81 = tpu.matmul %46, %63, %cst_12 {dimension_numbers = #tpu.dot_dimension_numbers<[2], [2], [1], [1], [0, 0, 0, 1, 1, 1], [0], [0]>} : vector<16x8x4xf32>, vector<16x8x4xf32>, vector<16x8x8xf32> -> vector<16x8x8xf32>
    "tpu.trace_stop"() : () -> ()
    %82 = tpu.iota {dimensions = array<i32: 0>} : vector<8x8xi32>
    %83 = tpu.iota {dimensions = array<i32: 1>} : vector<8x8xi32>
    %84 = arith.cmpi sgt, %83, %82 : vector<8x8xi32>
    %85 = vector.shape_cast %84 : vector<8x8xi1> to vector<1x8x8xi1>
    %cst_13 = arith.constant -3.40282347E+38 : f32
    %86 = vector.shape_cast %85 : vector<1x8x8xi1> to vector<1x8x8xi1>
    %87 = vector.broadcast %86 : vector<1x8x8xi1> to vector<16x8x8xi1>
    %88 = vector.broadcast %cst_13 : f32 to vector<16x8x8xf32>
    %89 = arith.select %87, %88, %81 : vector<16x8x8xi1>, vector<16x8x8xf32>
    %cst_14 = arith.constant dense<0xFF800000> : vector<16x8xf32>
    %90 = vector.multi_reduction <maximumf>, %89, %cst_14 [2] : vector<16x8x8xf32> to vector<16x8xf32>
    %91 = vector.shape_cast %90 : vector<16x8xf32> to vector<16x8x1xf32>
    %92 = vector.broadcast %91 : vector<16x8x1xf32> to vector<16x8x8xf32>
    %93 = arith.subf %89, %92 : vector<16x8x8xf32>
    %94 = math.exp %93 : vector<16x8x8xf32>
    %cst_15 = arith.constant dense<0.000000e+00> : vector<16x8xf32>
    %95 = vector.multi_reduction <add>, %94, %cst_15 [2] : vector<16x8x8xf32> to vector<16x8xf32>
    %96 = vector.shape_cast %95 : vector<16x8xf32> to vector<16x8x1xf32>
    %97 = tpu.reciprocal %96 {approx = true} : vector<16x8x1xf32> -> vector<16x8x1xf32>
    %98 = vector.broadcast %97 : vector<16x8x1xf32> to vector<16x8x8xf32>
    %99 = arith.mulf %94, %98 : vector<16x8x8xf32>
    "tpu.trace_start"() <{level = 10 : i32, message = "bqk,bkd->bqd"}> : () -> ()
    %cst_16 = arith.constant dense<0.000000e+00> : vector<16x8x4xf32>
    %100 = tpu.matmul %99, %80, %cst_16 {dimension_numbers = #tpu.dot_dimension_numbers<[2], [1], [1], [2], [0, 0, 0, 1, 1, 2], [0], [0]>} : vector<16x8x8xf32>, vector<16x8x4xf32>, vector<16x8x4xf32> -> vector<16x8x4xf32>
    "tpu.trace_stop"() : () -> ()
    %101 = vector.extract_strided_slice %100 {offsets = [0, 0, 0], sizes = [2, 8, 4], strides = [1, 1, 1]} : vector<16x8x4xf32> to vector<2x8x4xf32>
    %102 = vector.shape_cast %101 : vector<2x8x4xf32> to vector<16x4xf32>
    %103 = vector.extract_strided_slice %100 {offsets = [2, 0, 0], sizes = [2, 8, 4], strides = [1, 1, 1]} : vector<16x8x4xf32> to vector<2x8x4xf32>
    %104 = vector.shape_cast %103 : vector<2x8x4xf32> to vector<16x4xf32>
    %105 = vector.extract_strided_slice %100 {offsets = [4, 0, 0], sizes = [2, 8, 4], strides = [1, 1, 1]} : vector<16x8x4xf32> to vector<2x8x4xf32>
    %106 = vector.shape_cast %105 : vector<2x8x4xf32> to vector<16x4xf32>
    %107 = vector.extract_strided_slice %100 {offsets = [6, 0, 0], sizes = [2, 8, 4], strides = [1, 1, 1]} : vector<16x8x4xf32> to vector<2x8x4xf32>
    %108 = vector.shape_cast %107 : vector<2x8x4xf32> to vector<16x4xf32>
    %109 = vector.extract_strided_slice %100 {offsets = [8, 0, 0], sizes = [2, 8, 4], strides = [1, 1, 1]} : vector<16x8x4xf32> to vector<2x8x4xf32>
    %110 = vector.shape_cast %109 : vector<2x8x4xf32> to vector<16x4xf32>
    %111 = vector.extract_strided_slice %100 {offsets = [10, 0, 0], sizes = [2, 8, 4], strides = [1, 1, 1]} : vector<16x8x4xf32> to vector<2x8x4xf32>
    %112 = vector.shape_cast %111 : vector<2x8x4xf32> to vector<16x4xf32>
    %113 = vector.extract_strided_slice %100 {offsets = [12, 0, 0], sizes = [2, 8, 4], strides = [1, 1, 1]} : vector<16x8x4xf32> to vector<2x8x4xf32>
    %114 = vector.shape_cast %113 : vector<2x8x4xf32> to vector<16x4xf32>
    %115 = vector.extract_strided_slice %100 {offsets = [14, 0, 0], sizes = [2, 8, 4], strides = [1, 1, 1]} : vector<16x8x4xf32> to vector<2x8x4xf32>
    %116 = vector.shape_cast %115 : vector<2x8x4xf32> to vector<16x4xf32>
    %117 = tpu.concatenate %102, %104, %106, %108, %110, %112, %114, %116 in 1 : vector<16x4xf32>, vector<16x4xf32>, vector<16x4xf32>, vector<16x4xf32>, vector<16x4xf32>, vector<16x4xf32>, vector<16x4xf32>, vector<16x4xf32> -> vector<16x32xf32>
    %118 = tpu.concatenate %117, %29 in 1 : vector<16x32xf32>, vector<16x32xf32> -> vector<16x64xf32>
    %119 = arith.truncf %118 : vector<16x64xf32> to vector<16x64xbf16>
    %c0_17 = arith.constant 0 : index
    %c0_18 = arith.constant 0 : index
    %120 = vector.load %arg4[%c0_17, %c0_18] : memref<64x384xbf16, #tpu.memory_space<vmem>>, vector<64x384xbf16>
    %cst_19 = arith.constant dense<0.000000e+00> : vector<16x384xf32>
    %121 = tpu.matmul %119, %120, %cst_19 {dimension_numbers = #tpu.dot_dimension_numbers<[1], [0], [0], [1], [0, 0, 1, 1], [], []>} : vector<16x64xbf16>, vector<64x384xbf16>, vector<16x384xf32> -> vector<16x384xf32>
    %c0_20 = arith.constant 0 : index
    %c0_21 = arith.constant 0 : index
    %122 = vector.load %arg5[%c0_20, %c0_21] : memref<1x384xf32, #tpu.memory_space<vmem>>, vector<1x384xf32>
    %123 = vector.broadcast %122 : vector<1x384xf32> to vector<16x384xf32>
    %124 = arith.addf %121, %123 : vector<16x384xf32>
    %125 = arith.addf %1, %124 : vector<16x384xf32>
    %126 = vector.shape_cast %125 : vector<16x384xf32> to vector<2x8x384xf32>
    %c0_22 = arith.constant 0 : index
    %c0_23 = arith.constant 0 : index
    %c0_24 = arith.constant 0 : index
    %127 = vector.load %arg6[%c0_22, %c0_23, %c0_24] : memref<2x8x384xf32, #tpu.memory_space<vmem>>, vector<2x8x384xf32>
    tpu.vector_store %arg6[%c0_22, %c0_23, %c0_24], %126 {strides = array<i32>} : memref<2x8x384xf32, #tpu.memory_space<vmem>>, vector<2x8x384xf32>,
    return
  }
  func.func @transform_0(%arg0: i32) -> (i32, i32, i32) {
    %c0_i32 = arith.constant 0 : i32
    %c0_i32_0 = arith.constant 0 : i32
    %c0_i32_1 = arith.constant 0 : i32
    return %arg0, %c0_i32, %c0_i32_0 : i32, i32, i32
  }
  func.func @transform_1(%arg0: i32) -> (i32, i32) {
    %c0_i32 = arith.constant 0 : i32
    %c0_i32_0 = arith.constant 0 : i32
    %c0_i32_1 = arith.constant 0 : i32
    return %c0_i32, %c0_i32_0 : i32, i32
  }
  func.func @transform_2(%arg0: i32) -> (i32, i32) {
    %c0_i32 = arith.constant 0 : i32
    %c0_i32_0 = arith.constant 0 : i32
    %c0_i32_1 = arith.constant 0 : i32
    return %c0_i32, %c0_i32_0 : i32, i32
  }
  func.func @transform_3(%arg0: i32) -> (i32, i32) {
    %c0_i32 = arith.constant 0 : i32
    %c0_i32_0 = arith.constant 0 : i32
    %c0_i32_1 = arith.constant 0 : i32
    return %c0_i32, %c0_i32_0 : i32, i32
  }
  func.func @transform_4(%arg0: i32) -> (i32, i32) {
    %c0_i32 = arith.constant 0 : i32
    %c0_i32_0 = arith.constant 0 : i32
    %c0_i32_1 = arith.constant 0 : i32
    return %c0_i32, %c0_i32_0 : i32, i32
  }
  func.func @transform_5(%arg0: i32) -> (i32, i32, i32) {
    %c0_i32 = arith.constant 0 : i32
    %c0_i32_0 = arith.constant 0 : i32
    %c0_i32_1 = arith.constant 0 : i32
    return %arg0, %c0_i32, %c0_i32_0 : i32, i32, i32
  }
}

</mosaic_0001>

<llo_original>
// kernel: tpu_custom_call.1
$region0: #{tpu_custom_call.1}
  #allocation0 [shape = 'u32[]', space=smem, size = 0x4, offset = 0x4, fixed_abs, tag = 'smem constant byte address 0x4 - core index']
  #allocation1 [shape = 'u32[144,128]{1,0:T(1,128)}', space=vmem, size = 0x12000, scoped, tag = 'internal scratch']
  %s0 = inlined_call_operand.hbm [shape: f32[2,8,384], index: 0, kind: input, shape index: {}]
  %s1 = inlined_call_operand.hbm [shape: bf16[384,128], index: 1, kind: input, shape index: {}]
  %s2 = inlined_call_operand.vmem [shape: f32[1,128], index: 2, kind: input, shape index: {}]
  %s3 = inlined_call_operand.hbm [shape: bf16[64,384], index: 3, kind: input, shape index: {}]
  %s4 = inlined_call_operand.vmem [shape: f32[1,384], index: 4, kind: input, shape index: {}]
  %s5 = inlined_call_operand.hbm [shape: f32[2,8,384], index: 5, kind: output, shape index: {}]
  %s6 = sld [smem:[#allocation0]]
  $region42: #{tpu_custom_call.1} parent=0
    _
  %s8 = ssub.s32 1, %s6
  %s9 = scalar_select 0, %s8, %s6
  $region1: #{tpu_custom_call.1} parent=0
    #allocation2 [shape = 'u8[24576]{0}', space=vmem, size = 0x6000, scoped, tag = 'input window, operand 0, single buffered']
    #allocation3 [shape = 's32[1]{0}', space=sflag, size = 0x4, scoped, tag = 'scoped memory for tpu_custom_call.1']
    #allocation4 [shape = 's32[1]{0}', space=sflag, size = 0x4, scoped, tag = 'scoped memory for tpu_custom_call.1']
    #allocation5 [shape = 'u8[98304]{0}', space=vmem, size = 0x18000, scoped, tag = 'input window, operand 1, single buffered']
    #allocation6 [shape = 's32[1]{0}', space=sflag, size = 0x4, scoped, tag = 'scoped memory for tpu_custom_call.1']
    #allocation7 [shape = 'u8[49152]{0}', space=vmem, size = 0xc000, scoped, tag = 'input window, operand 3, single buffered']
    #allocation8 [shape = 'u8[24576]{0}', space=vmem, size = 0x6000, scoped, tag = 'output window, operand 0, single buffered']
    %10 = vsyncpa [#allocation3], 0
    %11 = vsyncpa [#allocation6], 0
    %12 = vsyncpa [#allocation4], 0
    // Predicated region
    $region2: #{tpu_custom_call.1} parent=1 // pred_check
      _
    $region3: #{tpu_custom_call.1} parent=1 // pred_check_branch
      %14 = sbr.rel (0) target = $region5
    $region4: #{tpu_custom_call.1} parent=1 // pred_region
      %s16 = ssub.s32 768, 768
      %17 = vsyncadd [#allocation3], %s16
      %s18 = sshll.u32 [#allocation2], 4
      %s19 = int_to_ptr.vmem [resolvable:$true] %s18
      %24 = dma.hbm_to_vmem [thread:$0]  %s0, 768, %s19, [#allocation3], 384, 384, 24
    $region5: #{tpu_custom_call.1} parent=1 // pred_fallthru
      _
    // Predicated region
    $region6: #{tpu_custom_call.1} parent=1 // pred_check
      _
    $region7: #{tpu_custom_call.1} parent=1 // pred_check_branch
      %26 = sbr.rel (0) target = $region9
    $region8: #{tpu_custom_call.1} parent=1 // pred_region
      %s28 = ssub.s32 3072, 3072
      %29 = vsyncadd [#allocation6], %s28
      %s30 = sshll.u32 [#allocation5], 4
      %s31 = int_to_ptr.vmem [resolvable:$true] %s30
      %36 = dma.hbm_to_vmem [thread:$0]  %s1, 3072, %s31, [#allocation6], 64, 64, 4
    $region9: #{tpu_custom_call.1} parent=1 // pred_fallthru
      _
    // Predicated region
    $region10: #{tpu_custom_call.1} parent=1 // pred_check
      _
    $region11: #{tpu_custom_call.1} parent=1 // pred_check_branch
      %38 = sbr.rel (0) target = $region13
    $region12: #{tpu_custom_call.1} parent=1 // pred_region
      _
    $region13: #{tpu_custom_call.1} parent=1 // pred_fallthru
      _
    // Predicated region
    $region14: #{tpu_custom_call.1} parent=1 // pred_check
      _
    $region15: #{tpu_custom_call.1} parent=1 // pred_check_branch
      %40 = sbr.rel (0) target = $region17
    $region16: #{tpu_custom_call.1} parent=1 // pred_region
      %s42 = ssub.s32 1536, 1536
      %43 = vsyncadd [#allocation6], %s42
      %s44 = sshll.u32 [#allocation7], 4
      %s45 = int_to_ptr.vmem [resolvable:$true] %s44
      %50 = dma.hbm_to_vmem [thread:$0]  %s3, 1536, %s45, [#allocation6], 192, 192, 12
    $region17: #{tpu_custom_call.1} parent=1 // pred_fallthru
      _
    // Predicated region
    $region18: #{tpu_custom_call.1} parent=1 // pred_check
      _
    $region19: #{tpu_custom_call.1} parent=1 // pred_check_branch
      %52 = sbr.rel (0) target = $region21
    $region20: #{tpu_custom_call.1} parent=1 // pred_region
      _
    $region21: #{tpu_custom_call.1} parent=1 // pred_fallthru
      _
    // Predicated region
    $region22: #{tpu_custom_call.1} parent=1 // pred_check
      _
    $region23: #{tpu_custom_call.1} parent=1 // pred_check_branch
      %54 = sbr.rel (0) target = $region25
    $region24: #{tpu_custom_call.1} parent=1 // pred_region
      %55 = dma.done [#allocation3], 768
    $region25: #{tpu_custom_call.1} parent=1 // pred_fallthru
      _
    // Predicated region
    $region26: #{tpu_custom_call.1} parent=1 // pred_check
      _
    $region27: #{tpu_custom_call.1} parent=1 // pred_check_branch
      %57 = sbr.rel (0) target = $region29
    $region28: #{tpu_custom_call.1} parent=1 // pred_region
      %58 = dma.done [#allocation6], 3072
    $region29: #{tpu_custom_call.1} parent=1 // pred_fallthru
      _
    // Predicated region
    $region30: #{tpu_custom_call.1} parent=1 // pred_check
      _
    $region31: #{tpu_custom_call.1} parent=1 // pred_check_branch
      %60 = sbr.rel (0) target = $region33
    $region32: #{tpu_custom_call.1} parent=1 // pred_region
      %61 = dma.done [#allocation6], 1536
    $region33: #{tpu_custom_call.1} parent=1 // pred_fallthru
      _
    %v63 = vld [vmem:[#allocation2] sm:$0xff]
    %v64 = vld [vmem:[#allocation2 + $0x8] sm:$0xff]
    %v65 = vld [vmem:[#allocation2 + $0x10] sm:$0xff]
    %v66 = vld [vmem:[#allocation2 + $0x18] sm:$0xff]
    %v67 = vld [vmem:[#allocation2 + $0x20] sm:$0xff]
    %v68 = vld [vmem:[#allocation2 + $0x28] sm:$0xff]
    %v69 = vadd.f32 %v63, %v64
    %v70 = vadd.f32 %v69, %v65
    %71 = vadd.xlane.f32.xlu0 %v70
    %v72 = vpop.xlane.xlu0 %71
    %v73 = vadd.f32 %v66, %v67
    %v74 = vadd.f32 %v73, %v68
    %75 = vadd.xlane.f32.xlu0 %v74
    %v76 = vpop.xlane.xlu0 %75
    %v77 = vrcp.pop 384.0
    %v78 = vmul.f32 %v72, %v77
    %v79 = vmul.f32 %v76, %v77
    %v80 = vsub.f32 %v63, %v78
    %v81 = vsub.f32 %v64, %v78
    %v82 = vsub.f32 %v65, %v78
    %v83 = vsub.f32 %v66, %v79
    %v84 = vsub.f32 %v67, %v79
    %v85 = vsub.f32 %v68, %v79
    %v86 = vmul.f32 %v80, %v80
    %v87 = vmul.f32 %v81, %v81
    %v88 = vmul.f32 %v82, %v82
    %v89 = vmul.f32 %v83, %v83
    %v90 = vmul.f32 %v84, %v84
    %v91 = vmul.f32 %v85, %v85
    %v92 = vadd.f32 %v86, %v87
    %v93 = vadd.f32 %v92, %v88
    %94 = vadd.xlane.f32.xlu0 %v93
    %v95 = vpop.xlane.xlu0 %94
    %v96 = vadd.f32 %v89, %v90
    %v97 = vadd.f32 %v96, %v91
    %98 = vadd.xlane.f32.xlu0 %v97
    %v99 = vpop.xlane.xlu0 %98
    %v100 = vmul.f32 %v95, %v77
    %v101 = vmul.f32 %v99, %v77
    %v102 = vadd.f32 %v100, 1e-05
    %v103 = vadd.f32 %v101, 1e-05
    %v104 = vrsqrt.pop %v102
    %v105 = vrsqrt.pop %v103
    %v106 = vmul.f32 %v80, %v104
    %v107 = vmul.f32 %v81, %v104
    %v108 = vmul.f32 %v82, %v104
    %v109 = vmul.f32 %v83, %v105
    %v110 = vmul.f32 %v84, %v105
    %v111 = vmul.f32 %v85, %v105
    %v112 = vpack.c.bf16 %v109, %v106
    %v113 = vpack.c.bf16 %v110, %v107
    %v114 = vpack.c.bf16 %v111, %v108
    %v115 = vld [vmem:[#allocation5] sm:$0xf]
    %v116 = vld [vmem:[#allocation5 + $0x4] sm:$0xf]
    %v117 = vld [vmem:[#allocation5 + $0x8] sm:$0xf]
    %v118 = vld [vmem:[#allocation5 + $0xc] sm:$0xf]
    %v119 = vld [vmem:[#allocation5 + $0x10] sm:$0xf]
    %v120 = vld [vmem:[#allocation5 + $0x14] sm:$0xf]
    %v121 = vld [vmem:[#allocation5 + $0x18] sm:$0xf]
    %v122 = vld [vmem:[#allocation5 + $0x1c] sm:$0xf]
    %v123 = vld [vmem:[#allocation5 + $0x20] sm:$0xf]
    %v124 = vld [vmem:[#allocation5 + $0x24] sm:$0xf]
    %v125 = vld [vmem:[#allocation5 + $0x28] sm:$0xf]
    %v126 = vld [vmem:[#allocation5 + $0x2c] sm:$0xf]
    %v127 = vld [vmem:[#allocation5 + $0x30] sm:$0xf]
    %v128 = vld [vmem:[#allocation5 + $0x34] sm:$0xf]
    %v129 = vld [vmem:[#allocation5 + $0x38] sm:$0xf]
    %v130 = vld [vmem:[#allocation5 + $0x3c] sm:$0xf]
    %v131 = vld [vmem:[#allocation5 + $0x40] sm:$0xf]
    %v132 = vld [vmem:[#allocation5 + $0x44] sm:$0xf]
    %v133 = vld [vmem:[#allocation5 + $0x48] sm:$0xf]
    %v134 = vld [vmem:[#allocation5 + $0x4c] sm:$0xf]
    %v135 = vld [vmem:[#allocation5 + $0x50] sm:$0xf]
    %v136 = vld [vmem:[#allocation5 + $0x54] sm:$0xf]
    %v137 = vld [vmem:[#allocation5 + $0x58] sm:$0xf]
    %v138 = vld [vmem:[#allocation5 + $0x5c] sm:$0xf]
    %v139 = vld [vmem:[#allocation5 + $0x60] sm:$0xf]
    %v140 = vld [vmem:[#allocation5 + $0x64] sm:$0xf]
    %v141 = vld [vmem:[#allocation5 + $0x68] sm:$0xf]
    %v142 = vld [vmem:[#allocation5 + $0x6c] sm:$0xf]
    %v143 = vld [vmem:[#allocation5 + $0x70] sm:$0xf]
    %v144 = vld [vmem:[#allocation5 + $0x74] sm:$0xf]
    %v145 = vld [vmem:[#allocation5 + $0x78] sm:$0xf]
    %v146 = vld [vmem:[#allocation5 + $0x7c] sm:$0xf]
    %v147 = vld [vmem:[#allocation5 + $0x80] sm:$0xf]
    %v148 = vld [vmem:[#allocation5 + $0x84] sm:$0xf]
    %v149 = vld [vmem:[#allocation5 + $0x88] sm:$0xf]
    %v150 = vld [vmem:[#allocation5 + $0x8c] sm:$0xf]
    %v151 = vld [vmem:[#allocation5 + $0x90] sm:$0xf]
    %v152 = vld [vmem:[#allocation5 + $0x94] sm:$0xf]
    %v153 = vld [vmem:[#allocation5 + $0x98] sm:$0xf]
    %v154 = vld [vmem:[#allocation5 + $0x9c] sm:$0xf]
    %v155 = vld [vmem:[#allocation5 + $0xa0] sm:$0xf]
    %v156 = vld [vmem:[#allocation5 + $0xa4] sm:$0xf]
    %v157 = vld [vmem:[#allocation5 + $0xa8] sm:$0xf]
    %v158 = vld [vmem:[#allocation5 + $0xac] sm:$0xf]
    %v159 = vld [vmem:[#allocation5 + $0xb0] sm:$0xf]
    %v160 = vld [vmem:[#allocation5 + $0xb4] sm:$0xf]
    %v161 = vld [vmem:[#allocation5 + $0xb8] sm:$0xf]
    %v162 = vld [vmem:[#allocation5 + $0xbc] sm:$0xf]
    %v163 = vld [vmem:[%s2] sm:$0x1]
    %v165 = vlaneseq
    %v166 = vshrl.u32 %v165, 7
    %v167 = vsub.s32 0, %v166
    %v168 = vrot.slane %v163, %v167
    %v218 = vunpack.c.l.b16 %v115
    %v219 = vunpack.c.l.b16 %v116
    %v220 = vunpack.c.l.b16 %v117
    %v221 = vunpack.c.l.b16 %v118
    %v222 = vunpack.c.l.b16 %v119
    %v223 = vunpack.c.l.b16 %v120
    %v224 = vunpack.c.l.b16 %v121
    %v225 = vunpack.c.l.b16 %v122
    %v226 = vunpack.c.l.b16 %v123
    %v227 = vunpack.c.l.b16 %v124
    %v228 = vunpack.c.l.b16 %v125
    %v229 = vunpack.c.l.b16 %v126
    %v230 = vunpack.c.l.b16 %v127
    %v231 = vunpack.c.l.b16 %v128
    %v232 = vunpack.c.l.b16 %v129
    %v233 = vunpack.c.l.b16 %v130
    %v234 = vunpack.c.l.b16 %v131
    %v235 = vunpack.c.l.b16 %v132
    %v236 = vunpack.c.l.b16 %v133
    %v237 = vunpack.c.l.b16 %v134
    %v238 = vunpack.c.l.b16 %v135
    %v239 = vunpack.c.l.b16 %v136
    %v240 = vunpack.c.l.b16 %v137
    %v241 = vunpack.c.l.b16 %v138
    %v242 = vunpack.c.l.b16 %v139
    %v243 = vunpack.c.l.b16 %v140
    %v244 = vunpack.c.l.b16 %v141
    %v245 = vunpack.c.l.b16 %v142
    %v246 = vunpack.c.l.b16 %v143
    %v247 = vunpack.c.l.b16 %v144
    %v248 = vunpack.c.l.b16 %v145
    %v249 = vunpack.c.l.b16 %v146
    %v250 = vunpack.c.l.b16 %v147
    %v251 = vunpack.c.l.b16 %v148
    %v252 = vunpack.c.l.b16 %v149
    %v253 = vunpack.c.l.b16 %v150
    %v254 = vunpack.c.l.b16 %v151
    %v255 = vunpack.c.l.b16 %v152
    %v256 = vunpack.c.l.b16 %v153
    %v257 = vunpack.c.l.b16 %v154
    %v258 = vunpack.c.l.b16 %v155
    %v259 = vunpack.c.l.b16 %v156
    %v260 = vunpack.c.l.b16 %v157
    %v261 = vunpack.c.l.b16 %v158
    %v262 = vunpack.c.l.b16 %v159
    %v263 = vunpack.c.l.b16 %v160
    %v264 = vunpack.c.l.b16 %v161
    %v265 = vunpack.c.l.b16 %v162
    %v266 = vpack.c.b16 %v219, %v218
    %v267 = vpack.c.b16 %v221, %v220
    %v268 = vpack.c.b16 %v223, %v222
    %v269 = vpack.c.b16 %v225, %v224
    %v270 = vpack.c.b16 %v227, %v226
    %v271 = vpack.c.b16 %v229, %v228
    %v272 = vpack.c.b16 %v231, %v230
    %v273 = vpack.c.b16 %v233, %v232
    %v274 = vpack.c.b16 %v235, %v234
    %v275 = vpack.c.b16 %v237, %v236
    %v276 = vpack.c.b16 %v239, %v238
    %v277 = vpack.c.b16 %v241, %v240
    %v278 = vpack.c.b16 %v243, %v242
    %v279 = vpack.c.b16 %v245, %v244
    %v280 = vpack.c.b16 %v247, %v246
    %v281 = vpack.c.b16 %v249, %v248
    %v282 = vpack.c.b16 %v251, %v250
    %v283 = vpack.c.b16 %v253, %v252
    %v284 = vpack.c.b16 %v255, %v254
    %v285 = vpack.c.b16 %v257, %v256
    %v286 = vpack.c.b16 %v259, %v258
    %v287 = vpack.c.b16 %v261, %v260
    %v288 = vpack.c.b16 %v263, %v262
    %v289 = vpack.c.b16 %v265, %v264
    %314 = vmatprep.subr.bf16.mxu0 0
    %315 = vmatpush1.bf16.msra.mxu0 %v266
    %316 = vmatprep.subr.bf16.mxu0 0
    %317 = vmatpush1.bf16.msra.mxu0 %v267
    %318 = vmatprep.subr.bf16.mxu0 0
    %319 = vmatpush1.bf16.msra.mxu0 %v268
    %320 = vmatprep.subr.bf16.mxu0 0
    %321 = vmatpush1.bf16.msra.mxu0 %v269
    %322 = vmatprep.subr.bf16.mxu0 0
    %323 = vmatpush1.bf16.msra.mxu0 %v270
    %324 = vmatprep.subr.bf16.mxu0 0
    %325 = vmatpush1.bf16.msra.mxu0 %v271
    %326 = vmatprep.subr.bf16.mxu0 0
    %327 = vmatpush1.bf16.msra.mxu0 %v272
    %328 = vmatprep.subr.bf16.mxu0 0
    %329 = vmatpush1.bf16.msra.mxu0 %v273
    %330 = vmatprep.subr.bf16.mxu0 0
    %331 = vmatpush1.bf16.msra.mxu0 %v274
    %332 = vmatprep.subr.bf16.mxu0 0
    %333 = vmatpush1.bf16.msra.mxu0 %v275
    %334 = vmatprep.subr.bf16.mxu0 0
    %335 = vmatpush1.bf16.msra.mxu0 %v276
    %336 = vmatprep.subr.bf16.mxu0 0
    %337 = vmatpush1.bf16.msra.mxu0 %v277
    %338 = vmatprep.subr.bf16.mxu0 0
    %339 = vmatpush1.bf16.msra.mxu0 %v278
    %340 = vmatprep.subr.bf16.mxu0 0
    %341 = vmatpush1.bf16.msra.mxu0 %v279
    %342 = vmatprep.subr.bf16.mxu0 0
    %343 = vmatpush1.bf16.msra.mxu0 %v280
    %344 = vmatprep.subr.bf16.mxu0 0
    %345 = vmatpush1.bf16.msra.mxu0 %v281
    %346 = vmatprep.mubr.bf16.mxu0 %v113
    %347 = vmatmul.mubr.bf16.gmra.mrb[0].mxu0 %v112
    %v348 = vpop.f32.mrb[0].mxu0
    %v349 = vadd.f32 %v168, %v348
    %v350 = vpop.f32.mrb[0].mxu0
    %v351 = vpop.f32.mrb[0].mxu0
    %v352 = vadd.f32 %v168, %v351
    %v353 = vpop.f32.mrb[0].mxu0
    %354 = vdwg.mxu0
    %355 = vmatprep.subr.bf16.mxu0 0
    %356 = vmatpush1.bf16.msra.mxu0 %v282
    %357 = vmatprep.subr.bf16.mxu0 0
    %358 = vmatpush1.bf16.msra.mxu0 %v283
    %359 = vmatprep.subr.bf16.mxu0 0
    %360 = vmatpush1.bf16.msra.mxu0 %v284
    %361 = vmatprep.subr.bf16.mxu0 0
    %362 = vmatpush1.bf16.msra.mxu0 %v285
    %363 = vmatprep.subr.bf16.mxu0 0
    %364 = vmatpush1.bf16.msra.mxu0 %v286
    %365 = vmatprep.subr.bf16.mxu0 0
    %366 = vmatpush1.bf16.msra.mxu0 %v287
    %367 = vmatprep.subr.bf16.mxu0 0
    %368 = vmatpush1.bf16.msra.mxu0 %v288
    %369 = vmatprep.subr.bf16.mxu0 0
    %370 = vmatpush1.bf16.msra.mxu0 %v289
    %371 = vmatprep.subr.bf16.mxu0 0
    %372 = vmatpush1.bf16.msra.mxu0 0
    %373 = vmatprep.subr.bf16.mxu0 0
    %374 = vmatpush1.bf16.msra.mxu0 0
    %375 = vmatprep.subr.bf16.mxu0 0
    %376 = vmatpush1.bf16.msra.mxu0 0
    %377 = vmatprep.subr.bf16.mxu0 0
    %378 = vmatpush1.bf16.msra.mxu0 0
    %379 = vmatprep.subr.bf16.mxu0 0
    %380 = vmatpush1.bf16.msra.mxu0 0
    %381 = vmatprep.subr.bf16.mxu0 0
    %382 = vmatpush1.bf16.msra.mxu0 0
    %383 = vmatprep.subr.bf16.mxu0 0
    %384 = vmatpush1.bf16.msra.mxu0 0
    %385 = vmatprep.subr.bf16.mxu0 0
    %386 = vmatpush1.bf16.msra.mxu0 0
    %387 = vmatprep.mubr.bf16.mxu0 0
    %388 = vmatmul.mubr.bf16.gmra.mrb[0].mxu0 %v114
    %v389 = vpop.f32.mrb[0].mxu0
    %v390 = vadd.f32 %v349, %v389
    %v391 = vpop.f32.mrb[0].mxu0
    %v392 = vpop.f32.mrb[0].mxu0
    %v393 = vadd.f32 %v352, %v392
    %v394 = vpop.f32.mrb[0].mxu0
    %395 = vdwg.mxu0
    %v396 = vmax.f32 %v390, 0.0
    %v397 = vmax.f32 %v393, 0.0
    %400 = vrot.lane.b32.xlu0 %v390, 124
    %v401 = vpop.permute.xlu0 %400
    %402 = vrot.lane.b32.xlu0 %v393, 124
    %v403 = vpop.permute.xlu0 %402
    %404 = vrot.lane.b32.xlu0 %v390, 120
    %v405 = vpop.permute.xlu0 %404
    %406 = vrot.lane.b32.xlu0 %v393, 120
    %v407 = vpop.permute.xlu0 %406
    %408 = vrot.lane.b32.xlu0 %v390, 116
    %v409 = vpop.permute.xlu0 %408
    %410 = vrot.lane.b32.xlu0 %v393, 116
    %v411 = vpop.permute.xlu0 %410
    %412 = vrot.lane.b32.xlu0 %v390, 112
    %v413 = vpop.permute.xlu0 %412
    %414 = vrot.lane.b32.xlu0 %v393, 112
    %v415 = vpop.permute.xlu0 %414
    %416 = vrot.lane.b32.xlu0 %v390, 108
    %v417 = vpop.permute.xlu0 %416
    %418 = vrot.lane.b32.xlu0 %v393, 108
    %v419 = vpop.permute.xlu0 %418
    %420 = vrot.lane.b32.xlu0 %v390, 104
    %v421 = vpop.permute.xlu0 %420
    %422 = vrot.lane.b32.xlu0 %v393, 104
    %v423 = vpop.permute.xlu0 %422
    %424 = vrot.lane.b32.xlu0 %v390, 100
    %v425 = vpop.permute.xlu0 %424
    %426 = vrot.lane.b32.xlu0 %v393, 100
    %v427 = vpop.permute.xlu0 %426
    %428 = vrot.lane.b32.xlu0 %v390, 96
    %v429 = vpop.permute.xlu0 %428
    %vm430 = vcmask 31744
    %v431 = vsel %vm430, %v390, 0
    %v433 = vsel %vm430, %v429, 0
    %435 = vmatprep.subr.mxu0 0.0
    %436 = vmatpush1.xpose.msra.mxu0 %v433
    %437 = vmatprep.subr.mxu0 0.0
    %438 = vmatpush1.xpose.msra.mxu0 0.0
    %439 = vmatprep.subr.mxu0 0.0
    %440 = vmatpush1.xpose.msra.mxu0 0.0
    %441 = vmatprep.subr.mxu0 0.0
    %442 = vmatpush1.xpose.msra.mxu0 0.0
    %443 = vmatprep.subr.mxu0 0.0
    %444 = vmatpush1.xpose.msra.mxu0 0.0
    %445 = vmatprep.subr.mxu0 0.0
    %446 = vmatpush1.xpose.msra.mxu0 0.0
    %447 = vmatprep.subr.mxu0 0.0
    %448 = vmatpush1.xpose.msra.mxu0 0.0
    %449 = vmatprep.subr.mxu0 0.0
    %450 = vmatpush1.xpose.msra.mxu0 0.0
    %451 = vmatprep.subr.mxu0 0.0
    %452 = vmatpush1.xpose.msra.mxu0 0.0
    %453 = vmatprep.subr.mxu0 0.0
    %454 = vmatpush1.xpose.msra.mxu0 0.0
    %455 = vmatprep.subr.mxu0 0.0
    %456 = vmatpush1.xpose.msra.mxu0 0.0
    %457 = vmatprep.subr.mxu0 0.0
    %458 = vmatpush1.xpose.msra.mxu0 0.0
    %459 = vmatprep.subr.mxu0 0.0
    %460 = vmatpush1.xpose.msra.mxu0 0.0
    %461 = vmatprep.subr.mxu0 0.0
    %462 = vmatpush1.xpose.msra.mxu0 0.0
    %463 = vmatprep.subr.mxu0 0.0
    %464 = vmatpush1.xpose.msra.mxu0 0.0
    %465 = vmatprep.subr.mxu0 0.0
    %466 = vmatpush1.xpose.msra.mxu0 0.0
    %467 = vmatprep.subr.mxu0 0.0
    %468 = vmatpush1.xpose.msra.mxu0 0.0
    %469 = vmatprep.subr.mxu0 0.0
    %470 = vmatpush1.xpose.msra.mxu0 0.0
    %471 = vmatprep.subr.mxu0 0.0
    %472 = vmatpush1.xpose.msra.mxu0 0.0
    %473 = vmatprep.subr.mxu0 0.0
    %474 = vmatpush1.xpose.msra.mxu0 0.0
    %475 = vmatprep.subr.mxu0 0.0
    %476 = vmatpush1.xpose.msra.mxu0 0.0
    %477 = vmatprep.subr.mxu0 0.0
    %478 = vmatpush1.xpose.msra.mxu0 0.0
    %479 = vmatprep.subr.mxu0 0.0
    %480 = vmatpush1.xpose.msra.mxu0 0.0
    %481 = vmatprep.subr.mxu0 0.0
    %482 = vmatpush1.xpose.msra.mxu0 0.0
    %483 = vmatprep.subr.mxu0 0.0
    %484 = vmatpush1.xpose.msra.mxu0 0.0
    %485 = vmatprep.subr.mxu0 0.0
    %486 = vmatpush1.xpose.msra.mxu0 0.0
    %487 = vmatprep.subr.mxu0 0.0
    %488 = vmatpush1.xpose.msra.mxu0 0.0
    %489 = vmatprep.subr.mxu0 0.0
    %490 = vmatpush1.xpose.msra.mxu0 0.0
    %491 = vmatprep.subr.mxu0 0.0
    %492 = vmatpush1.xpose.msra.mxu0 0.0
    %493 = vmatprep.subr.mxu0 0.0
    %494 = vmatpush1.xpose.msra.mxu0 0.0
    %495 = vmatprep.subr.mxu0 0.0
    %496 = vmatpush1.xpose.msra.mxu0 0.0
    %497 = vmatprep.subr.mxu0 0.0
    %498 = vmatpush1.xpose.msra.mxu0 0.0
    %499 = vmatprep.mubr.f32.mxu0 0.0
    %500 = vmatmul.mubr.f32.gmra.mrb[0].mxu0 %v431
    %v501 = vpop.f32.mrb[0].mxu0
    %v502 = vadd.f32 0.0, %v501
    %v503 = vpop.f32.mrb[0].mxu0
    %504 = vdwg.mxu0
    %505 = vrot.lane.b32.xlu0 %v393, 96
    %v506 = vpop.permute.xlu0 %505
    %v507 = vsel %vm430, %v393, 0
    %v509 = vsel %vm430, %v506, 0
    %511 = vmatprep.subr.mxu0 0.0
    %512 = vmatpush1.xpose.msra.mxu0 %v509
    %513 = vmatprep.subr.mxu0 0.0
    %514 = vmatpush1.xpose.msra.mxu0 0.0
    %515 = vmatprep.subr.mxu0 0.0
    %516 = vmatpush1.xpose.msra.mxu0 0.0
    %517 = vmatprep.subr.mxu0 0.0
    %518 = vmatpush1.xpose.msra.mxu0 0.0
    %519 = vmatprep.subr.mxu0 0.0
    %520 = vmatpush1.xpose.msra.mxu0 0.0
    %521 = vmatprep.subr.mxu0 0.0
    %522 = vmatpush1.xpose.msra.mxu0 0.0
    %523 = vmatprep.subr.mxu0 0.0
    %524 = vmatpush1.xpose.msra.mxu0 0.0
    %525 = vmatprep.subr.mxu0 0.0
    %526 = vmatpush1.xpose.msra.mxu0 0.0
    %527 = vmatprep.subr.mxu0 0.0
    %528 = vmatpush1.xpose.msra.mxu0 0.0
    %529 = vmatprep.subr.mxu0 0.0
    %530 = vmatpush1.xpose.msra.mxu0 0.0
    %531 = vmatprep.subr.mxu0 0.0
    %532 = vmatpush1.xpose.msra.mxu0 0.0
    %533 = vmatprep.subr.mxu0 0.0
    %534 = vmatpush1.xpose.msra.mxu0 0.0
    %535 = vmatprep.subr.mxu0 0.0
    %536 = vmatpush1.xpose.msra.mxu0 0.0
    %537 = vmatprep.subr.mxu0 0.0
    %538 = vmatpush1.xpose.msra.mxu0 0.0
    %539 = vmatprep.subr.mxu0 0.0
    %540 = vmatpush1.xpose.msra.mxu0 0.0
    %541 = vmatprep.subr.mxu0 0.0
    %542 = vmatpush1.xpose.msra.mxu0 0.0
    %543 = vmatprep.subr.mxu0 0.0
    %544 = vmatpush1.xpose.msra.mxu0 0.0
    %545 = vmatprep.subr.mxu0 0.0
    %546 = vmatpush1.xpose.msra.mxu0 0.0
    %547 = vmatprep.subr.mxu0 0.0
    %548 = vmatpush1.xpose.msra.mxu0 0.0
    %549 = vmatprep.subr.mxu0 0.0
    %550 = vmatpush1.xpose.msra.mxu0 0.0
    %551 = vmatprep.subr.mxu0 0.0
    %552 = vmatpush1.xpose.msra.mxu0 0.0
    %553 = vmatprep.subr.mxu0 0.0
    %554 = vmatpush1.xpose.msra.mxu0 0.0
    %555 = vmatprep.subr.mxu0 0.0
    %556 = vmatpush1.xpose.msra.mxu0 0.0
    %557 = vmatprep.subr.mxu0 0.0
    %558 = vmatpush1.xpose.msra.mxu0 0.0
    %559 = vmatprep.subr.mxu0 0.0
    %560 = vmatpush1.xpose.msra.mxu0 0.0
    %561 = vmatprep.subr.mxu0 0.0
    %562 = vmatpush1.xpose.msra.mxu0 0.0
    %563 = vmatprep.subr.mxu0 0.0
    %564 = vmatpush1.xpose.msra.mxu0 0.0
    %565 = vmatprep.subr.mxu0 0.0
    %566 = vmatpush1.xpose.msra.mxu0 0.0
    %567 = vmatprep.subr.mxu0 0.0
    %568 = vmatpush1.xpose.msra.mxu0 0.0
    %569 = vmatprep.subr.mxu0 0.0
    %570 = vmatpush1.xpose.msra.mxu0 0.0
    %571 = vmatprep.subr.mxu0 0.0
    %572 = vmatpush1.xpose.msra.mxu0 0.0
    %573 = vmatprep.subr.mxu0 0.0
    %574 = vmatpush1.xpose.msra.mxu0 0.0
    %575 = vmatprep.mubr.f32.mxu0 0.0
    %576 = vmatmul.mubr.f32.gmra.mrb[0].mxu0 %v507
    %v577 = vpop.f32.mrb[0].mxu0
    %v578 = vadd.f32 0.0, %v577
    %v579 = vpop.f32.mrb[0].mxu0
    %580 = vdwg.mxu0
    %581 = vrot.lane.b32.xlu0 %v401, 96
    %v582 = vpop.permute.xlu0 %581
    %v583 = vsel %vm430, %v401, 0
    %v585 = vsel %vm430, %v582, 0
    %587 = vmatprep.subr.mxu0 0.0
    %588 = vmatpush1.xpose.msra.mxu0 %v585
    %589 = vmatprep.subr.mxu0 0.0
    %590 = vmatpush1.xpose.msra.mxu0 0.0
    %591 = vmatprep.subr.mxu0 0.0
    %592 = vmatpush1.xpose.msra.mxu0 0.0
    %593 = vmatprep.subr.mxu0 0.0
    %594 = vmatpush1.xpose.msra.mxu0 0.0
    %595 = vmatprep.subr.mxu0 0.0
    %596 = vmatpush1.xpose.msra.mxu0 0.0
    %597 = vmatprep.subr.mxu0 0.0
    %598 = vmatpush1.xpose.msra.mxu0 0.0
    %599 = vmatprep.subr.mxu0 0.0
    %600 = vmatpush1.xpose.msra.mxu0 0.0
    %601 = vmatprep.subr.mxu0 0.0
    %602 = vmatpush1.xpose.msra.mxu0 0.0
    %603 = vmatprep.subr.mxu0 0.0
    %604 = vmatpush1.xpose.msra.mxu0 0.0
    %605 = vmatprep.subr.mxu0 0.0
    %606 = vmatpush1.xpose.msra.mxu0 0.0
    %607 = vmatprep.subr.mxu0 0.0
    %608 = vmatpush1.xpose.msra.mxu0 0.0
    %609 = vmatprep.subr.mxu0 0.0
    %610 = vmatpush1.xpose.msra.mxu0 0.0
    %611 = vmatprep.subr.mxu0 0.0
    %612 = vmatpush1.xpose.msra.mxu0 0.0
    %613 = vmatprep.subr.mxu0 0.0
    %614 = vmatpush1.xpose.msra.mxu0 0.0
    %615 = vmatprep.subr.mxu0 0.0
    %616 = vmatpush1.xpose.msra.mxu0 0.0
    %617 = vmatprep.subr.mxu0 0.0
    %618 = vmatpush1.xpose.msra.mxu0 0.0
    %619 = vmatprep.subr.mxu0 0.0
    %620 = vmatpush1.xpose.msra.mxu0 0.0
    %621 = vmatprep.subr.mxu0 0.0
    %622 = vmatpush1.xpose.msra.mxu0 0.0
    %623 = vmatprep.subr.mxu0 0.0
    %624 = vmatpush1.xpose.msra.mxu0 0.0
    %625 = vmatprep.subr.mxu0 0.0
    %626 = vmatpush1.xpose.msra.mxu0 0.0
    %627 = vmatprep.subr.mxu0 0.0
    %628 = vmatpush1.xpose.msra.mxu0 0.0
    %629 = vmatprep.subr.mxu0 0.0
    %630 = vmatpush1.xpose.msra.mxu0 0.0
    %631 = vmatprep.subr.mxu0 0.0
    %632 = vmatpush1.xpose.msra.mxu0 0.0
    %633 = vmatprep.subr.mxu0 0.0
    %634 = vmatpush1.xpose.msra.mxu0 0.0
    %635 = vmatprep.subr.mxu0 0.0
    %636 = vmatpush1.xpose.msra.mxu0 0.0
    %637 = vmatprep.subr.mxu0 0.0
    %638 = vmatpush1.xpose.msra.mxu0 0.0
    %639 = vmatprep.subr.mxu0 0.0
    %640 = vmatpush1.xpose.msra.mxu0 0.0
    %641 = vmatprep.subr.mxu0 0.0
    %642 = vmatpush1.xpose.msra.mxu0 0.0
    %643 = vmatprep.subr.mxu0 0.0
    %644 = vmatpush1.xpose.msra.mxu0 0.0
    %645 = vmatprep.subr.mxu0 0.0
    %646 = vmatpush1.xpose.msra.mxu0 0.0
    %647 = vmatprep.subr.mxu0 0.0
    %648 = vmatpush1.xpose.msra.mxu0 0.0
    %649 = vmatprep.subr.mxu0 0.0
    %650 = vmatpush1.xpose.msra.mxu0 0.0
    %651 = vmatprep.mubr.f32.mxu0 0.0
    %652 = vmatmul.mubr.f32.gmra.mrb[0].mxu0 %v583
    %v653 = vpop.f32.mrb[0].mxu0
    %v654 = vadd.f32 0.0, %v653
    %v655 = vpop.f32.mrb[0].mxu0
    %656 = vdwg.mxu0
    %657 = vrot.lane.b32.xlu0 %v403, 96
    %v658 = vpop.permute.xlu0 %657
    %v659 = vsel %vm430, %v403, 0
    %v661 = vsel %vm430, %v658, 0
    %663 = vmatprep.subr.mxu0 0.0
    %664 = vmatpush1.xpose.msra.mxu0 %v661
    %665 = vmatprep.subr.mxu0 0.0
    %666 = vmatpush1.xpose.msra.mxu0 0.0
    %667 = vmatprep.subr.mxu0 0.0
    %668 = vmatpush1.xpose.msra.mxu0 0.0
    %669 = vmatprep.subr.mxu0 0.0
    %670 = vmatpush1.xpose.msra.mxu0 0.0
    %671 = vmatprep.subr.mxu0 0.0
    %672 = vmatpush1.xpose.msra.mxu0 0.0
    %673 = vmatprep.subr.mxu0 0.0
    %674 = vmatpush1.xpose.msra.mxu0 0.0
    %675 = vmatprep.subr.mxu0 0.0
    %676 = vmatpush1.xpose.msra.mxu0 0.0
    %677 = vmatprep.subr.mxu0 0.0
    %678 = vmatpush1.xpose.msra.mxu0 0.0
    %679 = vmatprep.subr.mxu0 0.0
    %680 = vmatpush1.xpose.msra.mxu0 0.0
    %681 = vmatprep.subr.mxu0 0.0
    %682 = vmatpush1.xpose.msra.mxu0 0.0
    %683 = vmatprep.subr.mxu0 0.0
    %684 = vmatpush1.xpose.msra.mxu0 0.0
    %685 = vmatprep.subr.mxu0 0.0
    %686 = vmatpush1.xpose.msra.mxu0 0.0
    %687 = vmatprep.subr.mxu0 0.0
    %688 = vmatpush1.xpose.msra.mxu0 0.0
    %689 = vmatprep.subr.mxu0 0.0
    %690 = vmatpush1.xpose.msra.mxu0 0.0
    %691 = vmatprep.subr.mxu0 0.0
    %692 = vmatpush1.xpose.msra.mxu0 0.0
    %693 = vmatprep.subr.mxu0 0.0
    %694 = vmatpush1.xpose.msra.mxu0 0.0
    %695 = vmatprep.subr.mxu0 0.0
    %696 = vmatpush1.xpose.msra.mxu0 0.0
    %697 = vmatprep.subr.mxu0 0.0
    %698 = vmatpush1.xpose.msra.mxu0 0.0
    %699 = vmatprep.subr.mxu0 0.0
    %700 = vmatpush1.xpose.msra.mxu0 0.0
    %701 = vmatprep.subr.mxu0 0.0
    %702 = vmatpush1.xpose.msra.mxu0 0.0
    %703 = vmatprep.subr.mxu0 0.0
    %704 = vmatpush1.xpose.msra.mxu0 0.0
    %705 = vmatprep.subr.mxu0 0.0
    %706 = vmatpush1.xpose.msra.mxu0 0.0
    %707 = vmatprep.subr.mxu0 0.0
    %708 = vmatpush1.xpose.msra.mxu0 0.0
    %709 = vmatprep.subr.mxu0 0.0
    %710 = vmatpush1.xpose.msra.mxu0 0.0
    %711 = vmatprep.subr.mxu0 0.0
    %712 = vmatpush1.xpose.msra.mxu0 0.0
    %713 = vmatprep.subr.mxu0 0.0
    %714 = vmatpush1.xpose.msra.mxu0 0.0
    %715 = vmatprep.subr.mxu0 0.0
    %716 = vmatpush1.xpose.msra.mxu0 0.0
    %717 = vmatprep.subr.mxu0 0.0
    %718 = vmatpush1.xpose.msra.mxu0 0.0
    %719 = vmatprep.subr.mxu0 0.0
    %720 = vmatpush1.xpose.msra.mxu0 0.0
    %721 = vmatprep.subr.mxu0 0.0
    %722 = vmatpush1.xpose.msra.mxu0 0.0
    %723 = vmatprep.subr.mxu0 0.0
    %724 = vmatpush1.xpose.msra.mxu0 0.0
    %725 = vmatprep.subr.mxu0 0.0
    %726 = vmatpush1.xpose.msra.mxu0 0.0
    %727 = vmatprep.mubr.f32.mxu0 0.0
    %728 = vmatmul.mubr.f32.gmra.mrb[0].mxu0 %v659
    %v729 = vpop.f32.mrb[0].mxu0
    %v730 = vadd.f32 0.0, %v729
    %v731 = vpop.f32.mrb[0].mxu0
    %732 = vdwg.mxu0
    %733 = vrot.lane.b32.xlu0 %v405, 96
    %v734 = vpop.permute.xlu0 %733
    %v735 = vsel %vm430, %v405, 0
    %v737 = vsel %vm430, %v734, 0
    %739 = vmatprep.subr.mxu0 0.0
    %740 = vmatpush1.xpose.msra.mxu0 %v737
    %741 = vmatprep.subr.mxu0 0.0
    %742 = vmatpush1.xpose.msra.mxu0 0.0
    %743 = vmatprep.subr.mxu0 0.0
    %744 = vmatpush1.xpose.msra.mxu0 0.0
    %745 = vmatprep.subr.mxu0 0.0
    %746 = vmatpush1.xpose.msra.mxu0 0.0
    %747 = vmatprep.subr.mxu0 0.0
    %748 = vmatpush1.xpose.msra.mxu0 0.0
    %749 = vmatprep.subr.mxu0 0.0
    %750 = vmatpush1.xpose.msra.mxu0 0.0
    %751 = vmatprep.subr.mxu0 0.0
    %752 = vmatpush1.xpose.msra.mxu0 0.0
    %753 = vmatprep.subr.mxu0 0.0
    %754 = vmatpush1.xpose.msra.mxu0 0.0
    %755 = vmatprep.subr.mxu0 0.0
    %756 = vmatpush1.xpose.msra.mxu0 0.0
    %757 = vmatprep.subr.mxu0 0.0
    %758 = vmatpush1.xpose.msra.mxu0 0.0
    %759 = vmatprep.subr.mxu0 0.0
    %760 = vmatpush1.xpose.msra.mxu0 0.0
    %761 = vmatprep.subr.mxu0 0.0
    %762 = vmatpush1.xpose.msra.mxu0 0.0
    %763 = vmatprep.subr.mxu0 0.0
    %764 = vmatpush1.xpose.msra.mxu0 0.0
    %765 = vmatprep.subr.mxu0 0.0
    %766 = vmatpush1.xpose.msra.mxu0 0.0
    %767 = vmatprep.subr.mxu0 0.0
    %768 = vmatpush1.xpose.msra.mxu0 0.0
    %769 = vmatprep.subr.mxu0 0.0
    %770 = vmatpush1.xpose.msra.mxu0 0.0
    %771 = vmatprep.subr.mxu0 0.0
    %772 = vmatpush1.xpose.msra.mxu0 0.0
    %773 = vmatprep.subr.mxu0 0.0
    %774 = vmatpush1.xpose.msra.mxu0 0.0
    %775 = vmatprep.subr.mxu0 0.0
    %776 = vmatpush1.xpose.msra.mxu0 0.0
    %777 = vmatprep.subr.mxu0 0.0
    %778 = vmatpush1.xpose.msra.mxu0 0.0
    %779 = vmatprep.subr.mxu0 0.0
    %780 = vmatpush1.xpose.msra.mxu0 0.0
    %781 = vmatprep.subr.mxu0 0.0
    %782 = vmatpush1.xpose.msra.mxu0 0.0
    %783 = vmatprep.subr.mxu0 0.0
    %784 = vmatpush1.xpose.msra.mxu0 0.0
    %785 = vmatprep.subr.mxu0 0.0
    %786 = vmatpush1.xpose.msra.mxu0 0.0
    %787 = vmatprep.subr.mxu0 0.0
    %788 = vmatpush1.xpose.msra.mxu0 0.0
    %789 = vmatprep.subr.mxu0 0.0
    %790 = vmatpush1.xpose.msra.mxu0 0.0
    %791 = vmatprep.subr.mxu0 0.0
    %792 = vmatpush1.xpose.msra.mxu0 0.0
    %793 = vmatprep.subr.mxu0 0.0
    %794 = vmatpush1.xpose.msra.mxu0 0.0
    %795 = vmatprep.subr.mxu0 0.0
    %796 = vmatpush1.xpose.msra.mxu0 0.0
    %797 = vmatprep.subr.mxu0 0.0
    %798 = vmatpush1.xpose.msra.mxu0 0.0
    %799 = vmatprep.subr.mxu0 0.0
    %800 = vmatpush1.xpose.msra.mxu0 0.0
    %801 = vmatprep.subr.mxu0 0.0
    %802 = vmatpush1.xpose.msra.mxu0 0.0
    %803 = vmatprep.mubr.f32.mxu0 0.0
    %804 = vmatmul.mubr.f32.gmra.mrb[0].mxu0 %v735
    %v805 = vpop.f32.mrb[0].mxu0
    %v806 = vadd.f32 0.0, %v805
    %v807 = vpop.f32.mrb[0].mxu0
    %808 = vdwg.mxu0
    %809 = vrot.lane.b32.xlu0 %v407, 96
    %v810 = vpop.permute.xlu0 %809
    %v811 = vsel %vm430, %v407, 0
    %v813 = vsel %vm430, %v810, 0
    %815 = vmatprep.subr.mxu0 0.0
    %816 = vmatpush1.xpose.msra.mxu0 %v813
    %817 = vmatprep.subr.mxu0 0.0
    %818 = vmatpush1.xpose.msra.mxu0 0.0
    %819 = vmatprep.subr.mxu0 0.0
    %820 = vmatpush1.xpose.msra.mxu0 0.0
    %821 = vmatprep.subr.mxu0 0.0
    %822 = vmatpush1.xpose.msra.mxu0 0.0
    %823 = vmatprep.subr.mxu0 0.0
    %824 = vmatpush1.xpose.msra.mxu0 0.0
    %825 = vmatprep.subr.mxu0 0.0
    %826 = vmatpush1.xpose.msra.mxu0 0.0
    %827 = vmatprep.subr.mxu0 0.0
    %828 = vmatpush1.xpose.msra.mxu0 0.0
    %829 = vmatprep.subr.mxu0 0.0
    %830 = vmatpush1.xpose.msra.mxu0 0.0
    %831 = vmatprep.subr.mxu0 0.0
    %832 = vmatpush1.xpose.msra.mxu0 0.0
    %833 = vmatprep.subr.mxu0 0.0
    %834 = vmatpush1.xpose.msra.mxu0 0.0
    %835 = vmatprep.subr.mxu0 0.0
    %836 = vmatpush1.xpose.msra.mxu0 0.0
    %837 = vmatprep.subr.mxu0 0.0
    %838 = vmatpush1.xpose.msra.mxu0 0.0
    %839 = vmatprep.subr.mxu0 0.0
    %840 = vmatpush1.xpose.msra.mxu0 0.0
    %841 = vmatprep.subr.mxu0 0.0
    %842 = vmatpush1.xpose.msra.mxu0 0.0
    %843 = vmatprep.subr.mxu0 0.0
    %844 = vmatpush1.xpose.msra.mxu0 0.0
    %845 = vmatprep.subr.mxu0 0.0
    %846 = vmatpush1.xpose.msra.mxu0 0.0
    %847 = vmatprep.subr.mxu0 0.0
    %848 = vmatpush1.xpose.msra.mxu0 0.0
    %849 = vmatprep.subr.mxu0 0.0
    %850 = vmatpush1.xpose.msra.mxu0 0.0
    %851 = vmatprep.subr.mxu0 0.0
    %852 = vmatpush1.xpose.msra.mxu0 0.0
    %853 = vmatprep.subr.mxu0 0.0
    %854 = vmatpush1.xpose.msra.mxu0 0.0
    %855 = vmatprep.subr.mxu0 0.0
    %856 = vmatpush1.xpose.msra.mxu0 0.0
    %857 = vmatprep.subr.mxu0 0.0
    %858 = vmatpush1.xpose.msra.mxu0 0.0
    %859 = vmatprep.subr.mxu0 0.0
    %860 = vmatpush1.xpose.msra.mxu0 0.0
    %861 = vmatprep.subr.mxu0 0.0
    %862 = vmatpush1.xpose.msra.mxu0 0.0
    %863 = vmatprep.subr.mxu0 0.0
    %864 = vmatpush1.xpose.msra.mxu0 0.0
    %865 = vmatprep.subr.mxu0 0.0
    %866 = vmatpush1.xpose.msra.mxu0 0.0
    %867 = vmatprep.subr.mxu0 0.0
    %868 = vmatpush1.xpose.msra.mxu0 0.0
    %869 = vmatprep.subr.mxu0 0.0
    %870 = vmatpush1.xpose.msra.mxu0 0.0
    %871 = vmatprep.subr.mxu0 0.0
    %872 = vmatpush1.xpose.msra.mxu0 0.0
    %873 = vmatprep.subr.mxu0 0.0
    %874 = vmatpush1.xpose.msra.mxu0 0.0
    %875 = vmatprep.subr.mxu0 0.0
    %876 = vmatpush1.xpose.msra.mxu0 0.0
    %877 = vmatprep.subr.mxu0 0.0
    %878 = vmatpush1.xpose.msra.mxu0 0.0
    %879 = vmatprep.mubr.f32.mxu0 0.0
    %880 = vmatmul.mubr.f32.gmra.mrb[0].mxu0 %v811
    %v881 = vpop.f32.mrb[0].mxu0
    %v882 = vadd.f32 0.0, %v881
    %v883 = vpop.f32.mrb[0].mxu0
    %884 = vdwg.mxu0
    %885 = vrot.lane.b32.xlu0 %v409, 96
    %v886 = vpop.permute.xlu0 %885
    %v887 = vsel %vm430, %v409, 0
    %v889 = vsel %vm430, %v886, 0
    %891 = vmatprep.subr.mxu0 0.0
    %892 = vmatpush1.xpose.msra.mxu0 %v889
    %893 = vmatprep.subr.mxu0 0.0
    %894 = vmatpush1.xpose.msra.mxu0 0.0
    %895 = vmatprep.subr.mxu0 0.0
    %896 = vmatpush1.xpose.msra.mxu0 0.0
    %897 = vmatprep.subr.mxu0 0.0
    %898 = vmatpush1.xpose.msra.mxu0 0.0
    %899 = vmatprep.subr.mxu0 0.0
    %900 = vmatpush1.xpose.msra.mxu0 0.0
    %901 = vmatprep.subr.mxu0 0.0
    %902 = vmatpush1.xpose.msra.mxu0 0.0
    %903 = vmatprep.subr.mxu0 0.0
    %904 = vmatpush1.xpose.msra.mxu0 0.0
    %905 = vmatprep.subr.mxu0 0.0
    %906 = vmatpush1.xpose.msra.mxu0 0.0
    %907 = vmatprep.subr.mxu0 0.0
    %908 = vmatpush1.xpose.msra.mxu0 0.0
    %909 = vmatprep.subr.mxu0 0.0
    %910 = vmatpush1.xpose.msra.mxu0 0.0
    %911 = vmatprep.subr.mxu0 0.0
    %912 = vmatpush1.xpose.msra.mxu0 0.0
    %913 = vmatprep.subr.mxu0 0.0
    %914 = vmatpush1.xpose.msra.mxu0 0.0
    %915 = vmatprep.subr.mxu0 0.0
    %916 = vmatpush1.xpose.msra.mxu0 0.0
    %917 = vmatprep.subr.mxu0 0.0
    %918 = vmatpush1.xpose.msra.mxu0 0.0
    %919 = vmatprep.subr.mxu0 0.0
    %920 = vmatpush1.xpose.msra.mxu0 0.0
    %921 = vmatprep.subr.mxu0 0.0
    %922 = vmatpush1.xpose.msra.mxu0 0.0
    %923 = vmatprep.subr.mxu0 0.0
    %924 = vmatpush1.xpose.msra.mxu0 0.0
    %925 = vmatprep.subr.mxu0 0.0
    %926 = vmatpush1.xpose.msra.mxu0 0.0
    %927 = vmatprep.subr.mxu0 0.0
    %928 = vmatpush1.xpose.msra.mxu0 0.0
    %929 = vmatprep.subr.mxu0 0.0
    %930 = vmatpush1.xpose.msra.mxu0 0.0
    %931 = vmatprep.subr.mxu0 0.0
    %932 = vmatpush1.xpose.msra.mxu0 0.0
    %933 = vmatprep.subr.mxu0 0.0
    %934 = vmatpush1.xpose.msra.mxu0 0.0
    %935 = vmatprep.subr.mxu0 0.0
    %936 = vmatpush1.xpose.msra.mxu0 0.0
    %937 = vmatprep.subr.mxu0 0.0
    %938 = vmatpush1.xpose.msra.mxu0 0.0
    %939 = vmatprep.subr.mxu0 0.0
    %940 = vmatpush1.xpose.msra.mxu0 0.0
    %941 = vmatprep.subr.mxu0 0.0
    %942 = vmatpush1.xpose.msra.mxu0 0.0
    %943 = vmatprep.subr.mxu0 0.0
    %944 = vmatpush1.xpose.msra.mxu0 0.0
    %945 = vmatprep.subr.mxu0 0.0
    %946 = vmatpush1.xpose.msra.mxu0 0.0
    %947 = vmatprep.subr.mxu0 0.0
    %948 = vmatpush1.xpose.msra.mxu0 0.0
    %949 = vmatprep.subr.mxu0 0.0
    %950 = vmatpush1.xpose.msra.mxu0 0.0
    %951 = vmatprep.subr.mxu0 0.0
    %952 = vmatpush1.xpose.msra.mxu0 0.0
    %953 = vmatprep.subr.mxu0 0.0
    %954 = vmatpush1.xpose.msra.mxu0 0.0
    %955 = vmatprep.mubr.f32.mxu0 0.0
    %956 = vmatmul.mubr.f32.gmra.mrb[0].mxu0 %v887
    %v957 = vpop.f32.mrb[0].mxu0
    %v958 = vadd.f32 0.0, %v957
    %v959 = vpop.f32.mrb[0].mxu0
    %960 = vdwg.mxu0
    %961 = vrot.lane.b32.xlu0 %v411, 96
    %v962 = vpop.permute.xlu0 %961
    %v963 = vsel %vm430, %v411, 0
    %v965 = vsel %vm430, %v962, 0
    %967 = vmatprep.subr.mxu0 0.0
    %968 = vmatpush1.xpose.msra.mxu0 %v965
    %969 = vmatprep.subr.mxu0 0.0
    %970 = vmatpush1.xpose.msra.mxu0 0.0
    %971 = vmatprep.subr.mxu0 0.0
    %972 = vmatpush1.xpose.msra.mxu0 0.0
    %973 = vmatprep.subr.mxu0 0.0
    %974 = vmatpush1.xpose.msra.mxu0 0.0
    %975 = vmatprep.subr.mxu0 0.0
    %976 = vmatpush1.xpose.msra.mxu0 0.0
    %977 = vmatprep.subr.mxu0 0.0
    %978 = vmatpush1.xpose.msra.mxu0 0.0
    %979 = vmatprep.subr.mxu0 0.0
    %980 = vmatpush1.xpose.msra.mxu0 0.0
    %981 = vmatprep.subr.mxu0 0.0
    %982 = vmatpush1.xpose.msra.mxu0 0.0
    %983 = vmatprep.subr.mxu0 0.0
    %984 = vmatpush1.xpose.msra.mxu0 0.0
    %985 = vmatprep.subr.mxu0 0.0
    %986 = vmatpush1.xpose.msra.mxu0 0.0
    %987 = vmatprep.subr.mxu0 0.0
    %988 = vmatpush1.xpose.msra.mxu0 0.0
    %989 = vmatprep.subr.mxu0 0.0
    %990 = vmatpush1.xpose.msra.mxu0 0.0
    %991 = vmatprep.subr.mxu0 0.0
    %992 = vmatpush1.xpose.msra.mxu0 0.0
    %993 = vmatprep.subr.mxu0 0.0
    %994 = vmatpush1.xpose.msra.mxu0 0.0
    %995 = vmatprep.subr.mxu0 0.0
    %996 = vmatpush1.xpose.msra.mxu0 0.0
    %997 = vmatprep.subr.mxu0 0.0
    %998 = vmatpush1.xpose.msra.mxu0 0.0
    %999 = vmatprep.subr.mxu0 0.0
    %1000 = vmatpush1.xpose.msra.mxu0 0.0
    %1001 = vmatprep.subr.mxu0 0.0
    %1002 = vmatpush1.xpose.msra.mxu0 0.0
    %1003 = vmatprep.subr.mxu0 0.0
    %1004 = vmatpush1.xpose.msra.mxu0 0.0
    %1005 = vmatprep.subr.mxu0 0.0
    %1006 = vmatpush1.xpose.msra.mxu0 0.0
    %1007 = vmatprep.subr.mxu0 0.0
    %1008 = vmatpush1.xpose.msra.mxu0 0.0
    %1009 = vmatprep.subr.mxu0 0.0
    %1010 = vmatpush1.xpose.msra.mxu0 0.0
    %1011 = vmatprep.subr.mxu0 0.0
    %1012 = vmatpush1.xpose.msra.mxu0 0.0
    %1013 = vmatprep.subr.mxu0 0.0
    %1014 = vmatpush1.xpose.msra.mxu0 0.0
    %1015 = vmatprep.subr.mxu0 0.0
    %1016 = vmatpush1.xpose.msra.mxu0 0.0
    %1017 = vmatprep.subr.mxu0 0.0
    %1018 = vmatpush1.xpose.msra.mxu0 0.0
    %1019 = vmatprep.subr.mxu0 0.0
    %1020 = vmatpush1.xpose.msra.mxu0 0.0
    %1021 = vmatprep.subr.mxu0 0.0
    %1022 = vmatpush1.xpose.msra.mxu0 0.0
    %1023 = vmatprep.subr.mxu0 0.0
    %1024 = vmatpush1.xpose.msra.mxu0 0.0
    %1025 = vmatprep.subr.mxu0 0.0
    %1026 = vmatpush1.xpose.msra.mxu0 0.0
    %1027 = vmatprep.subr.mxu0 0.0
    %1028 = vmatpush1.xpose.msra.mxu0 0.0
    %1029 = vmatprep.subr.mxu0 0.0
    %1030 = vmatpush1.xpose.msra.mxu0 0.0
    %1031 = vmatprep.mubr.f32.mxu0 0.0
    %1032 = vmatmul.mubr.f32.gmra.mrb[0].mxu0 %v963
    %v1033 = vpop.f32.mrb[0].mxu0
    %v1034 = vadd.f32 0.0, %v1033
    %v1035 = vpop.f32.mrb[0].mxu0
    %1036 = vdwg.mxu0
    %1037 = vrot.lane.b32.xlu0 %v413, 96
    %v1038 = vpop.permute.xlu0 %1037
    %v1039 = vsel %vm430, %v413, 0
    %v1041 = vsel %vm430, %v1038, 0
    %1043 = vmatprep.subr.mxu0 0.0
    %1044 = vmatpush1.xpose.msra.mxu0 %v1041
    %1045 = vmatprep.subr.mxu0 0.0
    %1046 = vmatpush1.xpose.msra.mxu0 0.0
    %1047 = vmatprep.subr.mxu0 0.0
    %1048 = vmatpush1.xpose.msra.mxu0 0.0
    %1049 = vmatprep.subr.mxu0 0.0
    %1050 = vmatpush1.xpose.msra.mxu0 0.0
    %1051 = vmatprep.subr.mxu0 0.0
    %1052 = vmatpush1.xpose.msra.mxu0 0.0
    %1053 = vmatprep.subr.mxu0 0.0
    %1054 = vmatpush1.xpose.msra.mxu0 0.0
    %1055 = vmatprep.subr.mxu0 0.0
    %1056 = vmatpush1.xpose.msra.mxu0 0.0
    %1057 = vmatprep.subr.mxu0 0.0
    %1058 = vmatpush1.xpose.msra.mxu0 0.0
    %1059 = vmatprep.subr.mxu0 0.0
    %1060 = vmatpush1.xpose.msra.mxu0 0.0
    %1061 = vmatprep.subr.mxu0 0.0
    %1062 = vmatpush1.xpose.msra.mxu0 0.0
    %1063 = vmatprep.subr.mxu0 0.0
    %1064 = vmatpush1.xpose.msra.mxu0 0.0
    %1065 = vmatprep.subr.mxu0 0.0
    %1066 = vmatpush1.xpose.msra.mxu0 0.0
    %1067 = vmatprep.subr.mxu0 0.0
    %1068 = vmatpush1.xpose.msra.mxu0 0.0
    %1069 = vmatprep.subr.mxu0 0.0
    %1070 = vmatpush1.xpose.msra.mxu0 0.0
    %1071 = vmatprep.subr.mxu0 0.0
    %1072 = vmatpush1.xpose.msra.mxu0 0.0
    %1073 = vmatprep.subr.mxu0 0.0
    %1074 = vmatpush1.xpose.msra.mxu0 0.0
    %1075 = vmatprep.subr.mxu0 0.0
    %1076 = vmatpush1.xpose.msra.mxu0 0.0
    %1077 = vmatprep.subr.mxu0 0.0
    %1078 = vmatpush1.xpose.msra.mxu0 0.0
    %1079 = vmatprep.subr.mxu0 0.0
    %1080 = vmatpush1.xpose.msra.mxu0 0.0
    %1081 = vmatprep.subr.mxu0 0.0
    %1082 = vmatpush1.xpose.msra.mxu0 0.0
    %1083 = vmatprep.subr.mxu0 0.0
    %1084 = vmatpush1.xpose.msra.mxu0 0.0
    %1085 = vmatprep.subr.mxu0 0.0
    %1086 = vmatpush1.xpose.msra.mxu0 0.0
    %1087 = vmatprep.subr.mxu0 0.0
    %1088 = vmatpush1.xpose.msra.mxu0 0.0
    %1089 = vmatprep.subr.mxu0 0.0
    %1090 = vmatpush1.xpose.msra.mxu0 0.0
    %1091 = vmatprep.subr.mxu0 0.0
    %1092 = vmatpush1.xpose.msra.mxu0 0.0
    %1093 = vmatprep.subr.mxu0 0.0
    %1094 = vmatpush1.xpose.msra.mxu0 0.0
    %1095 = vmatprep.subr.mxu0 0.0
    %1096 = vmatpush1.xpose.msra.mxu0 0.0
    %1097 = vmatprep.subr.mxu0 0.0
    %1098 = vmatpush1.xpose.msra.mxu0 0.0
    %1099 = vmatprep.subr.mxu0 0.0
    %1100 = vmatpush1.xpose.msra.mxu0 0.0
    %1101 = vmatprep.subr.mxu0 0.0
    %1102 = vmatpush1.xpose.msra.mxu0 0.0
    %1103 = vmatprep.subr.mxu0 0.0
    %1104 = vmatpush1.xpose.msra.mxu0 0.0
    %1105 = vmatprep.subr.mxu0 0.0
    %1106 = vmatpush1.xpose.msra.mxu0 0.0
    %1107 = vmatprep.mubr.f32.mxu0 0.0
    %1108 = vmatmul.mubr.f32.gmra.mrb[0].mxu0 %v1039
    %v1109 = vpop.f32.mrb[0].mxu0
    %v1110 = vadd.f32 0.0, %v1109
    %v1111 = vpop.f32.mrb[0].mxu0
    %1112 = vdwg.mxu0
    %1113 = vrot.lane.b32.xlu0 %v415, 96
    %v1114 = vpop.permute.xlu0 %1113
    %v1115 = vsel %vm430, %v415, 0
    %v1117 = vsel %vm430, %v1114, 0
    %1119 = vmatprep.subr.mxu0 0.0
    %1120 = vmatpush1.xpose.msra.mxu0 %v1117
    %1121 = vmatprep.subr.mxu0 0.0
    %1122 = vmatpush1.xpose.msra.mxu0 0.0
    %1123 = vmatprep.subr.mxu0 0.0
    %1124 = vmatpush1.xpose.msra.mxu0 0.0
    %1125 = vmatprep.subr.mxu0 0.0
    %1126 = vmatpush1.xpose.msra.mxu0 0.0
    %1127 = vmatprep.subr.mxu0 0.0
    %1128 = vmatpush1.xpose.msra.mxu0 0.0
    %1129 = vmatprep.subr.mxu0 0.0
    %1130 = vmatpush1.xpose.msra.mxu0 0.0
    %1131 = vmatprep.subr.mxu0 0.0
    %1132 = vmatpush1.xpose.msra.mxu0 0.0
    %1133 = vmatprep.subr.mxu0 0.0
    %1134 = vmatpush1.xpose.msra.mxu0 0.0
    %1135 = vmatprep.subr.mxu0 0.0
    %1136 = vmatpush1.xpose.msra.mxu0 0.0
    %1137 = vmatprep.subr.mxu0 0.0
    %1138 = vmatpush1.xpose.msra.mxu0 0.0
    %1139 = vmatprep.subr.mxu0 0.0
    %1140 = vmatpush1.xpose.msra.mxu0 0.0
    %1141 = vmatprep.subr.mxu0 0.0
    %1142 = vmatpush1.xpose.msra.mxu0 0.0
    %1143 = vmatprep.subr.mxu0 0.0
    %1144 = vmatpush1.xpose.msra.mxu0 0.0
    %1145 = vmatprep.subr.mxu0 0.0
    %1146 = vmatpush1.xpose.msra.mxu0 0.0
    %1147 = vmatprep.subr.mxu0 0.0
    %1148 = vmatpush1.xpose.msra.mxu0 0.0
    %1149 = vmatprep.subr.mxu0 0.0
    %1150 = vmatpush1.xpose.msra.mxu0 0.0
    %1151 = vmatprep.subr.mxu0 0.0
    %1152 = vmatpush1.xpose.msra.mxu0 0.0
    %1153 = vmatprep.subr.mxu0 0.0
    %1154 = vmatpush1.xpose.msra.mxu0 0.0
    %1155 = vmatprep.subr.mxu0 0.0
    %1156 = vmatpush1.xpose.msra.mxu0 0.0
    %1157 = vmatprep.subr.mxu0 0.0
    %1158 = vmatpush1.xpose.msra.mxu0 0.0
    %1159 = vmatprep.subr.mxu0 0.0
    %1160 = vmatpush1.xpose.msra.mxu0 0.0
    %1161 = vmatprep.subr.mxu0 0.0
    %1162 = vmatpush1.xpose.msra.mxu0 0.0
    %1163 = vmatprep.subr.mxu0 0.0
    %1164 = vmatpush1.xpose.msra.mxu0 0.0
    %1165 = vmatprep.subr.mxu0 0.0
    %1166 = vmatpush1.xpose.msra.mxu0 0.0
    %1167 = vmatprep.subr.mxu0 0.0
    %1168 = vmatpush1.xpose.msra.mxu0 0.0
    %1169 = vmatprep.subr.mxu0 0.0
    %1170 = vmatpush1.xpose.msra.mxu0 0.0
    %1171 = vmatprep.subr.mxu0 0.0
    %1172 = vmatpush1.xpose.msra.mxu0 0.0
    %1173 = vmatprep.subr.mxu0 0.0
    %1174 = vmatpush1.xpose.msra.mxu0 0.0
    %1175 = vmatprep.subr.mxu0 0.0
    %1176 = vmatpush1.xpose.msra.mxu0 0.0
    %1177 = vmatprep.subr.mxu0 0.0
    %1178 = vmatpush1.xpose.msra.mxu0 0.0
    %1179 = vmatprep.subr.mxu0 0.0
    %1180 = vmatpush1.xpose.msra.mxu0 0.0
    %1181 = vmatprep.subr.mxu0 0.0
    %1182 = vmatpush1.xpose.msra.mxu0 0.0
    %1183 = vmatprep.mubr.f32.mxu0 0.0
    %1184 = vmatmul.mubr.f32.gmra.mrb[0].mxu0 %v1115
    %v1185 = vpop.f32.mrb[0].mxu0
    %v1186 = vadd.f32 0.0, %v1185
    %v1187 = vpop.f32.mrb[0].mxu0
    %1188 = vdwg.mxu0
    %1189 = vrot.lane.b32.xlu0 %v417, 96
    %v1190 = vpop.permute.xlu0 %1189
    %v1191 = vsel %vm430, %v417, 0
    %v1193 = vsel %vm430, %v1190, 0
    %1195 = vmatprep.subr.mxu0 0.0
    %1196 = vmatpush1.xpose.msra.mxu0 %v1193
    %1197 = vmatprep.subr.mxu0 0.0
    %1198 = vmatpush1.xpose.msra.mxu0 0.0
    %1199 = vmatprep.subr.mxu0 0.0
    %1200 = vmatpush1.xpose.msra.mxu0 0.0
    %1201 = vmatprep.subr.mxu0 0.0
    %1202 = vmatpush1.xpose.msra.mxu0 0.0
    %1203 = vmatprep.subr.mxu0 0.0
    %1204 = vmatpush1.xpose.msra.mxu0 0.0
    %1205 = vmatprep.subr.mxu0 0.0
    %1206 = vmatpush1.xpose.msra.mxu0 0.0
    %1207 = vmatprep.subr.mxu0 0.0
    %1208 = vmatpush1.xpose.msra.mxu0 0.0
    %1209 = vmatprep.subr.mxu0 0.0
    %1210 = vmatpush1.xpose.msra.mxu0 0.0
    %1211 = vmatprep.subr.mxu0 0.0
    %1212 = vmatpush1.xpose.msra.mxu0 0.0
    %1213 = vmatprep.subr.mxu0 0.0
    %1214 = vmatpush1.xpose.msra.mxu0 0.0
    %1215 = vmatprep.subr.mxu0 0.0
    %1216 = vmatpush1.xpose.msra.mxu0 0.0
    %1217 = vmatprep.subr.mxu0 0.0
    %1218 = vmatpush1.xpose.msra.mxu0 0.0
    %1219 = vmatprep.subr.mxu0 0.0
    %1220 = vmatpush1.xpose.msra.mxu0 0.0
    %1221 = vmatprep.subr.mxu0 0.0
    %1222 = vmatpush1.xpose.msra.mxu0 0.0
    %1223 = vmatprep.subr.mxu0 0.0
    %1224 = vmatpush1.xpose.msra.mxu0 0.0
    %1225 = vmatprep.subr.mxu0 0.0
    %1226 = vmatpush1.xpose.msra.mxu0 0.0
    %1227 = vmatprep.subr.mxu0 0.0
    %1228 = vmatpush1.xpose.msra.mxu0 0.0
    %1229 = vmatprep.subr.mxu0 0.0
    %1230 = vmatpush1.xpose.msra.mxu0 0.0
    %1231 = vmatprep.subr.mxu0 0.0
    %1232 = vmatpush1.xpose.msra.mxu0 0.0
    %1233 = vmatprep.subr.mxu0 0.0
    %1234 = vmatpush1.xpose.msra.mxu0 0.0
    %1235 = vmatprep.subr.mxu0 0.0
    %1236 = vmatpush1.xpose.msra.mxu0 0.0
    %1237 = vmatprep.subr.mxu0 0.0
    %1238 = vmatpush1.xpose.msra.mxu0 0.0
    %1239 = vmatprep.subr.mxu0 0.0
    %1240 = vmatpush1.xpose.msra.mxu0 0.0
    %1241 = vmatprep.subr.mxu0 0.0
    %1242 = vmatpush1.xpose.msra.mxu0 0.0
    %1243 = vmatprep.subr.mxu0 0.0
    %1244 = vmatpush1.xpose.msra.mxu0 0.0
    %1245 = vmatprep.subr.mxu0 0.0
    %1246 = vmatpush1.xpose.msra.mxu0 0.0
    %1247 = vmatprep.subr.mxu0 0.0
    %1248 = vmatpush1.xpose.msra.mxu0 0.0
    %1249 = vmatprep.subr.mxu0 0.0
    %1250 = vmatpush1.xpose.msra.mxu0 0.0
    %1251 = vmatprep.subr.mxu0 0.0
    %1252 = vmatpush1.xpose.msra.mxu0 0.0
    %1253 = vmatprep.subr.mxu0 0.0
    %1254 = vmatpush1.xpose.msra.mxu0 0.0
    %1255 = vmatprep.subr.mxu0 0.0
    %1256 = vmatpush1.xpose.msra.mxu0 0.0
    %1257 = vmatprep.subr.mxu0 0.0
    %1258 = vmatpush1.xpose.msra.mxu0 0.0
    %1259 = vmatprep.mubr.f32.mxu0 0.0
    %1260 = vmatmul.mubr.f32.gmra.mrb[0].mxu0 %v1191
    %v1261 = vpop.f32.mrb[0].mxu0
    %v1262 = vadd.f32 0.0, %v1261
    %v1263 = vpop.f32.mrb[0].mxu0
    %1264 = vdwg.mxu0
    %1265 = vrot.lane.b32.xlu0 %v419, 96
    %v1266 = vpop.permute.xlu0 %1265
    %v1267 = vsel %vm430, %v419, 0
    %v1269 = vsel %vm430, %v1266, 0
    %1271 = vmatprep.subr.mxu0 0.0
    %1272 = vmatpush1.xpose.msra.mxu0 %v1269
    %1273 = vmatprep.subr.mxu0 0.0
    %1274 = vmatpush1.xpose.msra.mxu0 0.0
    %1275 = vmatprep.subr.mxu0 0.0
    %1276 = vmatpush1.xpose.msra.mxu0 0.0
    %1277 = vmatprep.subr.mxu0 0.0
    %1278 = vmatpush1.xpose.msra.mxu0 0.0
    %1279 = vmatprep.subr.mxu0 0.0
    %1280 = vmatpush1.xpose.msra.mxu0 0.0
    %1281 = vmatprep.subr.mxu0 0.0
    %1282 = vmatpush1.xpose.msra.mxu0 0.0
    %1283 = vmatprep.subr.mxu0 0.0
    %1284 = vmatpush1.xpose.msra.mxu0 0.0
    %1285 = vmatprep.subr.mxu0 0.0
    %1286 = vmatpush1.xpose.msra.mxu0 0.0
    %1287 = vmatprep.subr.mxu0 0.0
    %1288 = vmatpush1.xpose.msra.mxu0 0.0
    %1289 = vmatprep.subr.mxu0 0.0
    %1290 = vmatpush1.xpose.msra.mxu0 0.0
    %1291 = vmatprep.subr.mxu0 0.0
    %1292 = vmatpush1.xpose.msra.mxu0 0.0
    %1293 = vmatprep.subr.mxu0 0.0
    %1294 = vmatpush1.xpose.msra.mxu0 0.0
    %1295 = vmatprep.subr.mxu0 0.0
    %1296 = vmatpush1.xpose.msra.mxu0 0.0
    %1297 = vmatprep.subr.mxu0 0.0
    %1298 = vmatpush1.xpose.msra.mxu0 0.0
    %1299 = vmatprep.subr.mxu0 0.0
    %1300 = vmatpush1.xpose.msra.mxu0 0.0
    %1301 = vmatprep.subr.mxu0 0.0
    %1302 = vmatpush1.xpose.msra.mxu0 0.0
    %1303 = vmatprep.subr.mxu0 0.0
    %1304 = vmatpush1.xpose.msra.mxu0 0.0
    %1305 = vmatprep.subr.mxu0 0.0
    %1306 = vmatpush1.xpose.msra.mxu0 0.0
    %1307 = vmatprep.subr.mxu0 0.0
    %1308 = vmatpush1.xpose.msra.mxu0 0.0
    %1309 = vmatprep.subr.mxu0 0.0
    %1310 = vmatpush1.xpose.msra.mxu0 0.0
    %1311 = vmatprep.subr.mxu0 0.0
    %1312 = vmatpush1.xpose.msra.mxu0 0.0
    %1313 = vmatprep.subr.mxu0 0.0
    %1314 = vmatpush1.xpose.msra.mxu0 0.0
    %1315 = vmatprep.subr.mxu0 0.0
    %1316 = vmatpush1.xpose.msra.mxu0 0.0
    %1317 = vmatprep.subr.mxu0 0.0
    %1318 = vmatpush1.xpose.msra.mxu0 0.0
    %1319 = vmatprep.subr.mxu0 0.0
    %1320 = vmatpush1.xpose.msra.mxu0 0.0
    %1321 = vmatprep.subr.mxu0 0.0
    %1322 = vmatpush1.xpose.msra.mxu0 0.0
    %1323 = vmatprep.subr.mxu0 0.0
    %1324 = vmatpush1.xpose.msra.mxu0 0.0
    %1325 = vmatprep.subr.mxu0 0.0
    %1326 = vmatpush1.xpose.msra.mxu0 0.0
    %1327 = vmatprep.subr.mxu0 0.0
    %1328 = vmatpush1.xpose.msra.mxu0 0.0
    %1329 = vmatprep.subr.mxu0 0.0
    %1330 = vmatpush1.xpose.msra.mxu0 0.0
    %1331 = vmatprep.subr.mxu0 0.0
    %1332 = vmatpush1.xpose.msra.mxu0 0.0
    %1333 = vmatprep.subr.mxu0 0.0
    %1334 = vmatpush1.xpose.msra.mxu0 0.0
    %1335 = vmatprep.mubr.f32.mxu0 0.0
    %1336 = vmatmul.mubr.f32.gmra.mrb[0].mxu0 %v1267
    %v1337 = vpop.f32.mrb[0].mxu0
    %v1338 = vadd.f32 0.0, %v1337
    %v1339 = vpop.f32.mrb[0].mxu0
    %1340 = vdwg.mxu0
    %1341 = vrot.lane.b32.xlu0 %v421, 96
    %v1342 = vpop.permute.xlu0 %1341
    %v1343 = vsel %vm430, %v421, 0
    %v1345 = vsel %vm430, %v1342, 0
    %1347 = vmatprep.subr.mxu0 0.0
    %1348 = vmatpush1.xpose.msra.mxu0 %v1345
    %1349 = vmatprep.subr.mxu0 0.0
    %1350 = vmatpush1.xpose.msra.mxu0 0.0
    %1351 = vmatprep.subr.mxu0 0.0
    %1352 = vmatpush1.xpose.msra.mxu0 0.0
    %1353 = vmatprep.subr.mxu0 0.0
    %1354 = vmatpush1.xpose.msra.mxu0 0.0
    %1355 = vmatprep.subr.mxu0 0.0
    %1356 = vmatpush1.xpose.msra.mxu0 0.0
    %1357 = vmatprep.subr.mxu0 0.0
    %1358 = vmatpush1.xpose.msra.mxu0 0.0
    %1359 = vmatprep.subr.mxu0 0.0
    %1360 = vmatpush1.xpose.msra.mxu0 0.0
    %1361 = vmatprep.subr.mxu0 0.0
    %1362 = vmatpush1.xpose.msra.mxu0 0.0
    %1363 = vmatprep.subr.mxu0 0.0
    %1364 = vmatpush1.xpose.msra.mxu0 0.0
    %1365 = vmatprep.subr.mxu0 0.0
    %1366 = vmatpush1.xpose.msra.mxu0 0.0
    %1367 = vmatprep.subr.mxu0 0.0
    %1368 = vmatpush1.xpose.msra.mxu0 0.0
    %1369 = vmatprep.subr.mxu0 0.0
    %1370 = vmatpush1.xpose.msra.mxu0 0.0
    %1371 = vmatprep.subr.mxu0 0.0
    %1372 = vmatpush1.xpose.msra.mxu0 0.0
    %1373 = vmatprep.subr.mxu0 0.0
    %1374 = vmatpush1.xpose.msra.mxu0 0.0
    %1375 = vmatprep.subr.mxu0 0.0
    %1376 = vmatpush1.xpose.msra.mxu0 0.0
    %1377 = vmatprep.subr.mxu0 0.0
    %1378 = vmatpush1.xpose.msra.mxu0 0.0
    %1379 = vmatprep.subr.mxu0 0.0
    %1380 = vmatpush1.xpose.msra.mxu0 0.0
    %1381 = vmatprep.subr.mxu0 0.0
    %1382 = vmatpush1.xpose.msra.mxu0 0.0
    %1383 = vmatprep.subr.mxu0 0.0
    %1384 = vmatpush1.xpose.msra.mxu0 0.0
    %1385 = vmatprep.subr.mxu0 0.0
    %1386 = vmatpush1.xpose.msra.mxu0 0.0
    %1387 = vmatprep.subr.mxu0 0.0
    %1388 = vmatpush1.xpose.msra.mxu0 0.0
    %1389 = vmatprep.subr.mxu0 0.0
    %1390 = vmatpush1.xpose.msra.mxu0 0.0
    %1391 = vmatprep.subr.mxu0 0.0
    %1392 = vmatpush1.xpose.msra.mxu0 0.0
    %1393 = vmatprep.subr.mxu0 0.0
    %1394 = vmatpush1.xpose.msra.mxu0 0.0
    %1395 = vmatprep.subr.mxu0 0.0
    %1396 = vmatpush1.xpose.msra.mxu0 0.0
    %1397 = vmatprep.subr.mxu0 0.0
    %1398 = vmatpush1.xpose.msra.mxu0 0.0
    %1399 = vmatprep.subr.mxu0 0.0
    %1400 = vmatpush1.xpose.msra.mxu0 0.0
    %1401 = vmatprep.subr.mxu0 0.0
    %1402 = vmatpush1.xpose.msra.mxu0 0.0
    %1403 = vmatprep.subr.mxu0 0.0
    %1404 = vmatpush1.xpose.msra.mxu0 0.0
    %1405 = vmatprep.subr.mxu0 0.0
    %1406 = vmatpush1.xpose.msra.mxu0 0.0
    %1407 = vmatprep.subr.mxu0 0.0
    %1408 = vmatpush1.xpose.msra.mxu0 0.0
    %1409 = vmatprep.subr.mxu0 0.0
    %1410 = vmatpush1.xpose.msra.mxu0 0.0
    %1411 = vmatprep.mubr.f32.mxu0 0.0
    %1412 = vmatmul.mubr.f32.gmra.mrb[0].mxu0 %v1343
    %v1413 = vpop.f32.mrb[0].mxu0
    %v1414 = vadd.f32 0.0, %v1413
    %v1415 = vpop.f32.mrb[0].mxu0
    %1416 = vdwg.mxu0
    %1417 = vrot.lane.b32.xlu0 %v423, 96
    %v1418 = vpop.permute.xlu0 %1417
    %v1419 = vsel %vm430, %v423, 0
    %v1421 = vsel %vm430, %v1418, 0
    %1423 = vmatprep.subr.mxu0 0.0
    %1424 = vmatpush1.xpose.msra.mxu0 %v1421
    %1425 = vmatprep.subr.mxu0 0.0
    %1426 = vmatpush1.xpose.msra.mxu0 0.0
    %1427 = vmatprep.subr.mxu0 0.0
    %1428 = vmatpush1.xpose.msra.mxu0 0.0
    %1429 = vmatprep.subr.mxu0 0.0
    %1430 = vmatpush1.xpose.msra.mxu0 0.0
    %1431 = vmatprep.subr.mxu0 0.0
    %1432 = vmatpush1.xpose.msra.mxu0 0.0
    %1433 = vmatprep.subr.mxu0 0.0
    %1434 = vmatpush1.xpose.msra.mxu0 0.0
    %1435 = vmatprep.subr.mxu0 0.0
    %1436 = vmatpush1.xpose.msra.mxu0 0.0
    %1437 = vmatprep.subr.mxu0 0.0
    %1438 = vmatpush1.xpose.msra.mxu0 0.0
    %1439 = vmatprep.subr.mxu0 0.0
    %1440 = vmatpush1.xpose.msra.mxu0 0.0
    %1441 = vmatprep.subr.mxu0 0.0
    %1442 = vmatpush1.xpose.msra.mxu0 0.0
    %1443 = vmatprep.subr.mxu0 0.0
    %1444 = vmatpush1.xpose.msra.mxu0 0.0
    %1445 = vmatprep.subr.mxu0 0.0
    %1446 = vmatpush1.xpose.msra.mxu0 0.0
    %1447 = vmatprep.subr.mxu0 0.0
    %1448 = vmatpush1.xpose.msra.mxu0 0.0
    %1449 = vmatprep.subr.mxu0 0.0
    %1450 = vmatpush1.xpose.msra.mxu0 0.0
    %1451 = vmatprep.subr.mxu0 0.0
    %1452 = vmatpush1.xpose.msra.mxu0 0.0
    %1453 = vmatprep.subr.mxu0 0.0
    %1454 = vmatpush1.xpose.msra.mxu0 0.0
    %1455 = vmatprep.subr.mxu0 0.0
    %1456 = vmatpush1.xpose.msra.mxu0 0.0
    %1457 = vmatprep.subr.mxu0 0.0
    %1458 = vmatpush1.xpose.msra.mxu0 0.0
    %1459 = vmatprep.subr.mxu0 0.0
    %1460 = vmatpush1.xpose.msra.mxu0 0.0
    %1461 = vmatprep.subr.mxu0 0.0
    %1462 = vmatpush1.xpose.msra.mxu0 0.0
    %1463 = vmatprep.subr.mxu0 0.0
    %1464 = vmatpush1.xpose.msra.mxu0 0.0
    %1465 = vmatprep.subr.mxu0 0.0
    %1466 = vmatpush1.xpose.msra.mxu0 0.0
    %1467 = vmatprep.subr.mxu0 0.0
    %1468 = vmatpush1.xpose.msra.mxu0 0.0
    %1469 = vmatprep.subr.mxu0 0.0
    %1470 = vmatpush1.xpose.msra.mxu0 0.0
    %1471 = vmatprep.subr.mxu0 0.0
    %1472 = vmatpush1.xpose.msra.mxu0 0.0
    %1473 = vmatprep.subr.mxu0 0.0
    %1474 = vmatpush1.xpose.msra.mxu0 0.0
    %1475 = vmatprep.subr.mxu0 0.0
    %1476 = vmatpush1.xpose.msra.mxu0 0.0
    %1477 = vmatprep.subr.mxu0 0.0
    %1478 = vmatpush1.xpose.msra.mxu0 0.0
    %1479 = vmatprep.subr.mxu0 0.0
    %1480 = vmatpush1.xpose.msra.mxu0 0.0
    %1481 = vmatprep.subr.mxu0 0.0
    %1482 = vmatpush1.xpose.msra.mxu0 0.0
    %1483 = vmatprep.subr.mxu0 0.0
    %1484 = vmatpush1.xpose.msra.mxu0 0.0
    %1485 = vmatprep.subr.mxu0 0.0
    %1486 = vmatpush1.xpose.msra.mxu0 0.0
    %1487 = vmatprep.mubr.f32.mxu0 0.0
    %1488 = vmatmul.mubr.f32.gmra.mrb[0].mxu0 %v1419
    %v1489 = vpop.f32.mrb[0].mxu0
    %v1490 = vadd.f32 0.0, %v1489
    %v1491 = vpop.f32.mrb[0].mxu0
    %1492 = vdwg.mxu0
    %1493 = vrot.lane.b32.xlu0 %v425, 96
    %v1494 = vpop.permute.xlu0 %1493
    %v1495 = vsel %vm430, %v425, 0
    %v1497 = vsel %vm430, %v1494, 0
    %1499 = vmatprep.subr.mxu0 0.0
    %1500 = vmatpush1.xpose.msra.mxu0 %v1497
    %1501 = vmatprep.subr.mxu0 0.0
    %1502 = vmatpush1.xpose.msra.mxu0 0.0
    %1503 = vmatprep.subr.mxu0 0.0
    %1504 = vmatpush1.xpose.msra.mxu0 0.0
    %1505 = vmatprep.subr.mxu0 0.0
    %1506 = vmatpush1.xpose.msra.mxu0 0.0
    %1507 = vmatprep.subr.mxu0 0.0
    %1508 = vmatpush1.xpose.msra.mxu0 0.0
    %1509 = vmatprep.subr.mxu0 0.0
    %1510 = vmatpush1.xpose.msra.mxu0 0.0
    %1511 = vmatprep.subr.mxu0 0.0
    %1512 = vmatpush1.xpose.msra.mxu0 0.0
    %1513 = vmatprep.subr.mxu0 0.0
    %1514 = vmatpush1.xpose.msra.mxu0 0.0
    %1515 = vmatprep.subr.mxu0 0.0
    %1516 = vmatpush1.xpose.msra.mxu0 0.0
    %1517 = vmatprep.subr.mxu0 0.0
    %1518 = vmatpush1.xpose.msra.mxu0 0.0
    %1519 = vmatprep.subr.mxu0 0.0
    %1520 = vmatpush1.xpose.msra.mxu0 0.0
    %1521 = vmatprep.subr.mxu0 0.0
    %1522 = vmatpush1.xpose.msra.mxu0 0.0
    %1523 = vmatprep.subr.mxu0 0.0
    %1524 = vmatpush1.xpose.msra.mxu0 0.0
    %1525 = vmatprep.subr.mxu0 0.0
    %1526 = vmatpush1.xpose.msra.mxu0 0.0
    %1527 = vmatprep.subr.mxu0 0.0
    %1528 = vmatpush1.xpose.msra.mxu0 0.0
    %1529 = vmatprep.subr.mxu0 0.0
    %1530 = vmatpush1.xpose.msra.mxu0 0.0
    %1531 = vmatprep.subr.mxu0 0.0
    %1532 = vmatpush1.xpose.msra.mxu0 0.0
    %1533 = vmatprep.subr.mxu0 0.0
    %1534 = vmatpush1.xpose.msra.mxu0 0.0
    %1535 = vmatprep.subr.mxu0 0.0
    %1536 = vmatpush1.xpose.msra.mxu0 0.0
    %1537 = vmatprep.subr.mxu0 0.0
    %1538 = vmatpush1.xpose.msra.mxu0 0.0
    %1539 = vmatprep.subr.mxu0 0.0
    %1540 = vmatpush1.xpose.msra.mxu0 0.0
    %1541 = vmatprep.subr.mxu0 0.0
    %1542 = vmatpush1.xpose.msra.mxu0 0.0
    %1543 = vmatprep.subr.mxu0 0.0
    %1544 = vmatpush1.xpose.msra.mxu0 0.0
    %1545 = vmatprep.subr.mxu0 0.0
    %1546 = vmatpush1.xpose.msra.mxu0 0.0
    %1547 = vmatprep.subr.mxu0 0.0
    %1548 = vmatpush1.xpose.msra.mxu0 0.0
    %1549 = vmatprep.subr.mxu0 0.0
    %1550 = vmatpush1.xpose.msra.mxu0 0.0
    %1551 = vmatprep.subr.mxu0 0.0
    %1552 = vmatpush1.xpose.msra.mxu0 0.0
    %1553 = vmatprep.subr.mxu0 0.0
    %1554 = vmatpush1.xpose.msra.mxu0 0.0
    %1555 = vmatprep.subr.mxu0 0.0
    %1556 = vmatpush1.xpose.msra.mxu0 0.0
    %1557 = vmatprep.subr.mxu0 0.0
    %1558 = vmatpush1.xpose.msra.mxu0 0.0
    %1559 = vmatprep.subr.mxu0 0.0
    %1560 = vmatpush1.xpose.msra.mxu0 0.0
    %1561 = vmatprep.subr.mxu0 0.0
    %1562 = vmatpush1.xpose.msra.mxu0 0.0
    %1563 = vmatprep.mubr.f32.mxu0 0.0
    %1564 = vmatmul.mubr.f32.gmra.mrb[0].mxu0 %v1495
    %v1565 = vpop.f32.mrb[0].mxu0
    %v1566 = vadd.f32 0.0, %v1565
    %v1567 = vpop.f32.mrb[0].mxu0
    %1568 = vdwg.mxu0
    %1569 = vrot.lane.b32.xlu0 %v427, 96
    %v1570 = vpop.permute.xlu0 %1569
    %v1571 = vsel %vm430, %v427, 0
    %v1573 = vsel %vm430, %v1570, 0
    %1575 = vmatprep.subr.mxu0 0.0
    %1576 = vmatpush1.xpose.msra.mxu0 %v1573
    %1577 = vmatprep.subr.mxu0 0.0
    %1578 = vmatpush1.xpose.msra.mxu0 0.0
    %1579 = vmatprep.subr.mxu0 0.0
    %1580 = vmatpush1.xpose.msra.mxu0 0.0
    %1581 = vmatprep.subr.mxu0 0.0
    %1582 = vmatpush1.xpose.msra.mxu0 0.0
    %1583 = vmatprep.subr.mxu0 0.0
    %1584 = vmatpush1.xpose.msra.mxu0 0.0
    %1585 = vmatprep.subr.mxu0 0.0
    %1586 = vmatpush1.xpose.msra.mxu0 0.0
    %1587 = vmatprep.subr.mxu0 0.0
    %1588 = vmatpush1.xpose.msra.mxu0 0.0
    %1589 = vmatprep.subr.mxu0 0.0
    %1590 = vmatpush1.xpose.msra.mxu0 0.0
    %1591 = vmatprep.subr.mxu0 0.0
    %1592 = vmatpush1.xpose.msra.mxu0 0.0
    %1593 = vmatprep.subr.mxu0 0.0
    %1594 = vmatpush1.xpose.msra.mxu0 0.0
    %1595 = vmatprep.subr.mxu0 0.0
    %1596 = vmatpush1.xpose.msra.mxu0 0.0
    %1597 = vmatprep.subr.mxu0 0.0
    %1598 = vmatpush1.xpose.msra.mxu0 0.0
    %1599 = vmatprep.subr.mxu0 0.0
    %1600 = vmatpush1.xpose.msra.mxu0 0.0
    %1601 = vmatprep.subr.mxu0 0.0
    %1602 = vmatpush1.xpose.msra.mxu0 0.0
    %1603 = vmatprep.subr.mxu0 0.0
    %1604 = vmatpush1.xpose.msra.mxu0 0.0
    %1605 = vmatprep.subr.mxu0 0.0
    %1606 = vmatpush1.xpose.msra.mxu0 0.0
    %1607 = vmatprep.subr.mxu0 0.0
    %1608 = vmatpush1.xpose.msra.mxu0 0.0
    %1609 = vmatprep.subr.mxu0 0.0
    %1610 = vmatpush1.xpose.msra.mxu0 0.0
    %1611 = vmatprep.subr.mxu0 0.0
    %1612 = vmatpush1.xpose.msra.mxu0 0.0
    %1613 = vmatprep.subr.mxu0 0.0
    %1614 = vmatpush1.xpose.msra.mxu0 0.0
    %1615 = vmatprep.subr.mxu0 0.0
    %1616 = vmatpush1.xpose.msra.mxu0 0.0
    %1617 = vmatprep.subr.mxu0 0.0
    %1618 = vmatpush1.xpose.msra.mxu0 0.0
    %1619 = vmatprep.subr.mxu0 0.0
    %1620 = vmatpush1.xpose.msra.mxu0 0.0
    %1621 = vmatprep.subr.mxu0 0.0
    %1622 = vmatpush1.xpose.msra.mxu0 0.0
    %1623 = vmatprep.subr.mxu0 0.0
    %1624 = vmatpush1.xpose.msra.mxu0 0.0
    %1625 = vmatprep.subr.mxu0 0.0
    %1626 = vmatpush1.xpose.msra.mxu0 0.0
    %1627 = vmatprep.subr.mxu0 0.0
    %1628 = vmatpush1.xpose.msra.mxu0 0.0
    %1629 = vmatprep.subr.mxu0 0.0
    %1630 = vmatpush1.xpose.msra.mxu0 0.0
    %1631 = vmatprep.subr.mxu0 0.0
    %1632 = vmatpush1.xpose.msra.mxu0 0.0
    %1633 = vmatprep.subr.mxu0 0.0
    %1634 = vmatpush1.xpose.msra.mxu0 0.0
    %1635 = vmatprep.subr.mxu0 0.0
    %1636 = vmatpush1.xpose.msra.mxu0 0.0
    %1637 = vmatprep.subr.mxu0 0.0
    %1638 = vmatpush1.xpose.msra.mxu0 0.0
    %1639 = vmatprep.mubr.f32.mxu0 0.0
    %1640 = vmatmul.mubr.f32.gmra.mrb[0].mxu0 %v1571
    %v1641 = vpop.f32.mrb[0].mxu0
    %v1642 = vadd.f32 0.0, %v1641
    %v1643 = vpop.f32.mrb[0].mxu0
    %1644 = vdwg.mxu0
    %v1645 = vlaneseq
    %v1646 = vshrl.u32 %v1645, 7
    %v1647 = vlaneseq
    %v1648 = vand.u32 %v1647, 127
    %vm1649 = vcmp.gt.s32.totalorder %v1648, %v1646
    %v1650 = vsel %vm1649, 1, 0
    %vm1651 = vcmp.eq.s32.totalorder %v1650, 1
    %v1652 = vsel %vm1651, -3.4028235e+38, %v502
    %v1653 = vsel %vm1651, -3.4028235e+38, %v578
    %v1654 = vsel %vm1651, -3.4028235e+38, %v654
    %v1655 = vsel %vm1651, -3.4028235e+38, %v730
    %v1656 = vsel %vm1651, -3.4028235e+38, %v806
    %v1657 = vsel %vm1651, -3.4028235e+38, %v882
    %v1658 = vsel %vm1651, -3.4028235e+38, %v958
    %v1659 = vsel %vm1651, -3.4028235e+38, %v1034
    %v1660 = vsel %vm1651, -3.4028235e+38, %v1110
    %v1661 = vsel %vm1651, -3.4028235e+38, %v1186
    %v1662 = vsel %vm1651, -3.4028235e+38, %v1262
    %v1663 = vsel %vm1651, -3.4028235e+38, %v1338
    %v1664 = vsel %vm1651, -3.4028235e+38, %v1414
    %v1665 = vsel %vm1651, -3.4028235e+38, %v1490
    %v1666 = vsel %vm1651, -3.4028235e+38, %v1566
    %v1667 = vsel %vm1651, -3.4028235e+38, %v1642
    %vm1668 = vcmask 64512
    %v1669 = vsel %vm1668, %v1652, -inf
    %1670 = vmax.xlane.f32.xlu0 %v1669
    %v1671 = vpop.xlane.xlu0 %1670
    %v1672 = vsel %vm1668, %v1653, -inf
    %1673 = vmax.xlane.f32.xlu0 %v1672
    %v1674 = vpop.xlane.xlu0 %1673
    %v1675 = vsel %vm1668, %v1654, -inf
    %1676 = vmax.xlane.f32.xlu0 %v1675
    %v1677 = vpop.xlane.xlu0 %1676
    %v1678 = vsel %vm1668, %v1655, -inf
    %1679 = vmax.xlane.f32.xlu0 %v1678
    %v1680 = vpop.xlane.xlu0 %1679
    %v1681 = vsel %vm1668, %v1656, -inf
    %1682 = vmax.xlane.f32.xlu0 %v1681
    %v1683 = vpop.xlane.xlu0 %1682
    %v1684 = vsel %vm1668, %v1657, -inf
    %1685 = vmax.xlane.f32.xlu0 %v1684
    %v1686 = vpop.xlane.xlu0 %1685
    %v1687 = vsel %vm1668, %v1658, -inf
    %1688 = vmax.xlane.f32.xlu0 %v1687
    %v1689 = vpop.xlane.xlu0 %1688
    %v1690 = vsel %vm1668, %v1659, -inf
    %1691 = vmax.xlane.f32.xlu0 %v1690
    %v1692 = vpop.xlane.xlu0 %1691
    %v1693 = vsel %vm1668, %v1660, -inf
    %1694 = vmax.xlane.f32.xlu0 %v1693
    %v1695 = vpop.xlane.xlu0 %1694
    %v1696 = vsel %vm1668, %v1661, -inf
    %1697 = vmax.xlane.f32.xlu0 %v1696
    %v1698 = vpop.xlane.xlu0 %1697
    %v1699 = vsel %vm1668, %v1662, -inf
    %1700 = vmax.xlane.f32.xlu0 %v1699
    %v1701 = vpop.xlane.xlu0 %1700
    %v1702 = vsel %vm1668, %v1663, -inf
    %1703 = vmax.xlane.f32.xlu0 %v1702
    %v1704 = vpop.xlane.xlu0 %1703
    %v1705 = vsel %vm1668, %v1664, -inf
    %1706 = vmax.xlane.f32.xlu0 %v1705
    %v1707 = vpop.xlane.xlu0 %1706
    %v1708 = vsel %vm1668, %v1665, -inf
    %1709 = vmax.xlane.f32.xlu0 %v1708
    %v1710 = vpop.xlane.xlu0 %1709
    %v1711 = vsel %vm1668, %v1666, -inf
    %1712 = vmax.xlane.f32.xlu0 %v1711
    %v1713 = vpop.xlane.xlu0 %1712
    %v1714 = vsel %vm1668, %v1667, -inf
    %1715 = vmax.xlane.f32.xlu0 %v1714
    %v1716 = vpop.xlane.xlu0 %1715
    %v1717 = vsub.f32 %v1652, %v1671
    %v1718 = vsub.f32 %v1653, %v1674
    %v1719 = vsub.f32 %v1654, %v1677
    %v1720 = vsub.f32 %v1655, %v1680
    %v1721 = vsub.f32 %v1656, %v1683
    %v1722 = vsub.f32 %v1657, %v1686
    %v1723 = vsub.f32 %v1658, %v1689
    %v1724 = vsub.f32 %v1659, %v1692
    %v1725 = vsub.f32 %v1660, %v1695
    %v1726 = vsub.f32 %v1661, %v1698
    %v1727 = vsub.f32 %v1662, %v1701
    %v1728 = vsub.f32 %v1663, %v1704
    %v1729 = vsub.f32 %v1664, %v1707
    %v1730 = vsub.f32 %v1665, %v1710
    %v1731 = vsub.f32 %v1666, %v1713
    %v1732 = vsub.f32 %v1667, %v1716
    %v1733 = vmul.f32 %v1717, 1.442695
    %v1734 = vpow.pop %v1733
    %v1735 = vmul.f32 %v1718, 1.442695
    %v1736 = vpow.pop %v1735
    %v1737 = vmul.f32 %v1719, 1.442695
    %v1738 = vpow.pop %v1737
    %v1739 = vmul.f32 %v1720, 1.442695
    %v1740 = vpow.pop %v1739
    %v1741 = vmul.f32 %v1721, 1.442695
    %v1742 = vpow.pop %v1741
    %v1743 = vmul.f32 %v1722, 1.442695
    %v1744 = vpow.pop %v1743
    %v1745 = vmul.f32 %v1723, 1.442695
    %v1746 = vpow.pop %v1745
    %v1747 = vmul.f32 %v1724, 1.442695
    %v1748 = vpow.pop %v1747
    %v1749 = vmul.f32 %v1725, 1.442695
    %v1750 = vpow.pop %v1749
    %v1751 = vmul.f32 %v1726, 1.442695
    %v1752 = vpow.pop %v1751
    %v1753 = vmul.f32 %v1727, 1.442695
    %v1754 = vpow.pop %v1753
    %v1755 = vmul.f32 %v1728, 1.442695
    %v1756 = vpow.pop %v1755
    %v1757 = vmul.f32 %v1729, 1.442695
    %v1758 = vpow.pop %v1757
    %v1759 = vmul.f32 %v1730, 1.442695
    %v1760 = vpow.pop %v1759
    %v1761 = vmul.f32 %v1731, 1.442695
    %v1762 = vpow.pop %v1761
    %v1763 = vmul.f32 %v1732, 1.442695
    %v1764 = vpow.pop %v1763
    %v1765 = vsel %vm1668, %v1734, 0.0
    %1766 = vadd.xlane.f32.xlu0 %v1765
    %v1767 = vpop.xlane.xlu0 %1766
    %v1768 = vsel %vm1668, %v1736, 0.0
    %1769 = vadd.xlane.f32.xlu0 %v1768
    %v1770 = vpop.xlane.xlu0 %1769
    %v1771 = vsel %vm1668, %v1738, 0.0
    %1772 = vadd.xlane.f32.xlu0 %v1771
    %v1773 = vpop.xlane.xlu0 %1772
    %v1774 = vsel %vm1668, %v1740, 0.0
    %1775 = vadd.xlane.f32.xlu0 %v1774
    %v1776 = vpop.xlane.xlu0 %1775
    %v1777 = vsel %vm1668, %v1742, 0.0
    %1778 = vadd.xlane.f32.xlu0 %v1777
    %v1779 = vpop.xlane.xlu0 %1778
    %v1780 = vsel %vm1668, %v1744, 0.0
    %1781 = vadd.xlane.f32.xlu0 %v1780
    %v1782 = vpop.xlane.xlu0 %1781
    %v1783 = vsel %vm1668, %v1746, 0.0
    %1784 = vadd.xlane.f32.xlu0 %v1783
    %v1785 = vpop.xlane.xlu0 %1784
    %v1786 = vsel %vm1668, %v1748, 0.0
    %1787 = vadd.xlane.f32.xlu0 %v1786
    %v1788 = vpop.xlane.xlu0 %1787
    %v1789 = vsel %vm1668, %v1750, 0.0
    %1790 = vadd.xlane.f32.xlu0 %v1789
    %v1791 = vpop.xlane.xlu0 %1790
    %v1792 = vsel %vm1668, %v1752, 0.0
    %1793 = vadd.xlane.f32.xlu0 %v1792
    %v1794 = vpop.xlane.xlu0 %1793
    %v1795 = vsel %vm1668, %v1754, 0.0
    %1796 = vadd.xlane.f32.xlu0 %v1795
    %v1797 = vpop.xlane.xlu0 %1796
    %v1798 = vsel %vm1668, %v1756, 0.0
    %1799 = vadd.xlane.f32.xlu0 %v1798
    %v1800 = vpop.xlane.xlu0 %1799
    %v1801 = vsel %vm1668, %v1758, 0.0
    %1802 = vadd.xlane.f32.xlu0 %v1801
    %v1803 = vpop.xlane.xlu0 %1802
    %v1804 = vsel %vm1668, %v1760, 0.0
    %1805 = vadd.xlane.f32.xlu0 %v1804
    %v1806 = vpop.xlane.xlu0 %1805
    %v1807 = vsel %vm1668, %v1762, 0.0
    %1808 = vadd.xlane.f32.xlu0 %v1807
    %v1809 = vpop.xlane.xlu0 %1808
    %v1810 = vsel %vm1668, %v1764, 0.0
    %1811 = vadd.xlane.f32.xlu0 %v1810
    %v1812 = vpop.xlane.xlu0 %1811
    %v1813 = vrcp.pop %v1767
    %v1814 = vrcp.pop %v1770
    %v1815 = vrcp.pop %v1773
    %v1816 = vrcp.pop %v1776
    %v1817 = vrcp.pop %v1779
    %v1818 = vrcp.pop %v1782
    %v1819 = vrcp.pop %v1785
    %v1820 = vrcp.pop %v1788
    %v1821 = vrcp.pop %v1791
    %v1822 = vrcp.pop %v1794
    %v1823 = vrcp.pop %v1797
    %v1824 = vrcp.pop %v1800
    %v1825 = vrcp.pop %v1803
    %v1826 = vrcp.pop %v1806
    %v1827 = vrcp.pop %v1809
    %v1828 = vrcp.pop %v1812
    %v1829 = vmul.f32 %v1734, %v1813
    %v1830 = vmul.f32 %v1736, %v1814
    %v1831 = vmul.f32 %v1738, %v1815
    %v1832 = vmul.f32 %v1740, %v1816
    %v1833 = vmul.f32 %v1742, %v1817
    %v1834 = vmul.f32 %v1744, %v1818
    %v1835 = vmul.f32 %v1746, %v1819
    %v1836 = vmul.f32 %v1748, %v1820
    %v1837 = vmul.f32 %v1750, %v1821
    %v1838 = vmul.f32 %v1752, %v1822
    %v1839 = vmul.f32 %v1754, %v1823
    %v1840 = vmul.f32 %v1756, %v1824
    %v1841 = vmul.f32 %v1758, %v1825
    %v1842 = vmul.f32 %v1760, %v1826
    %v1843 = vmul.f32 %v1762, %v1827
    %v1844 = vmul.f32 %v1764, %v1828
    %1845 = vrot.lane.b32.xlu0 %v390, 64
    %v1846 = vpop.permute.xlu0 %1845
    %v1849 = vsel %vm1668, %v1829, 0
    %1851 = vmatprep.subr.mxu0 0.0
    %1852 = vmatpush1.msra.mxu0 %v1846
    %1853 = vmatprep.subr.mxu0 0.0
    %1854 = vmatpush1.msra.mxu0 0.0
    %1855 = vmatprep.subr.mxu0 0.0
    %1856 = vmatpush1.msra.mxu0 0.0
    %1857 = vmatprep.subr.mxu0 0.0
    %1858 = vmatpush1.msra.mxu0 0.0
    %1859 = vmatprep.subr.mxu0 0.0
    %1860 = vmatpush1.msra.mxu0 0.0
    %1861 = vmatprep.subr.mxu0 0.0
    %1862 = vmatpush1.msra.mxu0 0.0
    %1863 = vmatprep.subr.mxu0 0.0
    %1864 = vmatpush1.msra.mxu0 0.0
    %1865 = vmatprep.subr.mxu0 0.0
    %1866 = vmatpush1.msra.mxu0 0.0
    %1867 = vmatprep.subr.mxu0 0.0
    %1868 = vmatpush1.msra.mxu0 0.0
    %1869 = vmatprep.subr.mxu0 0.0
    %1870 = vmatpush1.msra.mxu0 0.0
    %1871 = vmatprep.subr.mxu0 0.0
    %1872 = vmatpush1.msra.mxu0 0.0
    %1873 = vmatprep.subr.mxu0 0.0
    %1874 = vmatpush1.msra.mxu0 0.0
    %1875 = vmatprep.subr.mxu0 0.0
    %1876 = vmatpush1.msra.mxu0 0.0
    %1877 = vmatprep.subr.mxu0 0.0
    %1878 = vmatpush1.msra.mxu0 0.0
    %1879 = vmatprep.subr.mxu0 0.0
    %1880 = vmatpush1.msra.mxu0 0.0
    %1881 = vmatprep.subr.mxu0 0.0
    %1882 = vmatpush1.msra.mxu0 0.0
    %1883 = vmatprep.subr.mxu0 0.0
    %1884 = vmatpush1.msra.mxu0 0.0
    %1885 = vmatprep.subr.mxu0 0.0
    %1886 = vmatpush1.msra.mxu0 0.0
    %1887 = vmatprep.subr.mxu0 0.0
    %1888 = vmatpush1.msra.mxu0 0.0
    %1889 = vmatprep.subr.mxu0 0.0
    %1890 = vmatpush1.msra.mxu0 0.0
    %1891 = vmatprep.subr.mxu0 0.0
    %1892 = vmatpush1.msra.mxu0 0.0
    %1893 = vmatprep.subr.mxu0 0.0
    %1894 = vmatpush1.msra.mxu0 0.0
    %1895 = vmatprep.subr.mxu0 0.0
    %1896 = vmatpush1.msra.mxu0 0.0
    %1897 = vmatprep.subr.mxu0 0.0
    %1898 = vmatpush1.msra.mxu0 0.0
    %1899 = vmatprep.subr.mxu0 0.0
    %1900 = vmatpush1.msra.mxu0 0.0
    %1901 = vmatprep.subr.mxu0 0.0
    %1902 = vmatpush1.msra.mxu0 0.0
    %1903 = vmatprep.subr.mxu0 0.0
    %1904 = vmatpush1.msra.mxu0 0.0
    %1905 = vmatprep.subr.mxu0 0.0
    %1906 = vmatpush1.msra.mxu0 0.0
    %1907 = vmatprep.subr.mxu0 0.0
    %1908 = vmatpush1.msra.mxu0 0.0
    %1909 = vmatprep.subr.mxu0 0.0
    %1910 = vmatpush1.msra.mxu0 0.0
    %1911 = vmatprep.subr.mxu0 0.0
    %1912 = vmatpush1.msra.mxu0 0.0
    %1913 = vmatprep.subr.mxu0 0.0
    %1914 = vmatpush1.msra.mxu0 0.0
    %1915 = vmatprep.mubr.f32.mxu0 0.0
    %1916 = vmatmul.mubr.f32.gmra.mrb[0].mxu0 %v1849
    %v1917 = vpop.f32.mrb[0].mxu0
    %v1918 = vadd.f32 0.0, %v1917
    %v1919 = vpop.f32.mrb[0].mxu0
    %1920 = vdwg.mxu0
    %1921 = vrot.lane.b32.xlu0 %v393, 64
    %v1922 = vpop.permute.xlu0 %1921
    %v1925 = vsel %vm1668, %v1830, 0
    %1927 = vmatprep.subr.mxu0 0.0
    %1928 = vmatpush1.msra.mxu0 %v1922
    %1929 = vmatprep.subr.mxu0 0.0
    %1930 = vmatpush1.msra.mxu0 0.0
    %1931 = vmatprep.subr.mxu0 0.0
    %1932 = vmatpush1.msra.mxu0 0.0
    %1933 = vmatprep.subr.mxu0 0.0
    %1934 = vmatpush1.msra.mxu0 0.0
    %1935 = vmatprep.subr.mxu0 0.0
    %1936 = vmatpush1.msra.mxu0 0.0
    %1937 = vmatprep.subr.mxu0 0.0
    %1938 = vmatpush1.msra.mxu0 0.0
    %1939 = vmatprep.subr.mxu0 0.0
    %1940 = vmatpush1.msra.mxu0 0.0
    %1941 = vmatprep.subr.mxu0 0.0
    %1942 = vmatpush1.msra.mxu0 0.0
    %1943 = vmatprep.subr.mxu0 0.0
    %1944 = vmatpush1.msra.mxu0 0.0
    %1945 = vmatprep.subr.mxu0 0.0
    %1946 = vmatpush1.msra.mxu0 0.0
    %1947 = vmatprep.subr.mxu0 0.0
    %1948 = vmatpush1.msra.mxu0 0.0
    %1949 = vmatprep.subr.mxu0 0.0
    %1950 = vmatpush1.msra.mxu0 0.0
    %1951 = vmatprep.subr.mxu0 0.0
    %1952 = vmatpush1.msra.mxu0 0.0
    %1953 = vmatprep.subr.mxu0 0.0
    %1954 = vmatpush1.msra.mxu0 0.0
    %1955 = vmatprep.subr.mxu0 0.0
    %1956 = vmatpush1.msra.mxu0 0.0
    %1957 = vmatprep.subr.mxu0 0.0
    %1958 = vmatpush1.msra.mxu0 0.0
    %1959 = vmatprep.subr.mxu0 0.0
    %1960 = vmatpush1.msra.mxu0 0.0
    %1961 = vmatprep.subr.mxu0 0.0
    %1962 = vmatpush1.msra.mxu0 0.0
    %1963 = vmatprep.subr.mxu0 0.0
    %1964 = vmatpush1.msra.mxu0 0.0
    %1965 = vmatprep.subr.mxu0 0.0
    %1966 = vmatpush1.msra.mxu0 0.0
    %1967 = vmatprep.subr.mxu0 0.0
    %1968 = vmatpush1.msra.mxu0 0.0
    %1969 = vmatprep.subr.mxu0 0.0
    %1970 = vmatpush1.msra.mxu0 0.0
    %1971 = vmatprep.subr.mxu0 0.0
    %1972 = vmatpush1.msra.mxu0 0.0
    %1973 = vmatprep.subr.mxu0 0.0
    %1974 = vmatpush1.msra.mxu0 0.0
    %1975 = vmatprep.subr.mxu0 0.0
    %1976 = vmatpush1.msra.mxu0 0.0
    %1977 = vmatprep.subr.mxu0 0.0
    %1978 = vmatpush1.msra.mxu0 0.0
    %1979 = vmatprep.subr.mxu0 0.0
    %1980 = vmatpush1.msra.mxu0 0.0
    %1981 = vmatprep.subr.mxu0 0.0
    %1982 = vmatpush1.msra.mxu0 0.0
    %1983 = vmatprep.subr.mxu0 0.0
    %1984 = vmatpush1.msra.mxu0 0.0
    %1985 = vmatprep.subr.mxu0 0.0
    %1986 = vmatpush1.msra.mxu0 0.0
    %1987 = vmatprep.subr.mxu0 0.0
    %1988 = vmatpush1.msra.mxu0 0.0
    %1989 = vmatprep.subr.mxu0 0.0
    %1990 = vmatpush1.msra.mxu0 0.0
    %1991 = vmatprep.mubr.f32.mxu0 0.0
    %1992 = vmatmul.mubr.f32.gmra.mrb[0].mxu0 %v1925
    %v1993 = vpop.f32.mrb[0].mxu0
    %v1994 = vadd.f32 0.0, %v1993
    %v1995 = vpop.f32.mrb[0].mxu0
    %1996 = vdwg.mxu0
    %1997 = vrot.lane.b32.xlu0 %v401, 64
    %v1998 = vpop.permute.xlu0 %1997
    %v2001 = vsel %vm1668, %v1831, 0
    %2003 = vmatprep.subr.mxu0 0.0
    %2004 = vmatpush1.msra.mxu0 %v1998
    %2005 = vmatprep.subr.mxu0 0.0
    %2006 = vmatpush1.msra.mxu0 0.0
    %2007 = vmatprep.subr.mxu0 0.0
    %2008 = vmatpush1.msra.mxu0 0.0
    %2009 = vmatprep.subr.mxu0 0.0
    %2010 = vmatpush1.msra.mxu0 0.0
    %2011 = vmatprep.subr.mxu0 0.0
    %2012 = vmatpush1.msra.mxu0 0.0
    %2013 = vmatprep.subr.mxu0 0.0
    %2014 = vmatpush1.msra.mxu0 0.0
    %2015 = vmatprep.subr.mxu0 0.0
    %2016 = vmatpush1.msra.mxu0 0.0
    %2017 = vmatprep.subr.mxu0 0.0
    %2018 = vmatpush1.msra.mxu0 0.0
    %2019 = vmatprep.subr.mxu0 0.0
    %2020 = vmatpush1.msra.mxu0 0.0
    %2021 = vmatprep.subr.mxu0 0.0
    %2022 = vmatpush1.msra.mxu0 0.0
    %2023 = vmatprep.subr.mxu0 0.0
    %2024 = vmatpush1.msra.mxu0 0.0
    %2025 = vmatprep.subr.mxu0 0.0
    %2026 = vmatpush1.msra.mxu0 0.0
    %2027 = vmatprep.subr.mxu0 0.0
    %2028 = vmatpush1.msra.mxu0 0.0
    %2029 = vmatprep.subr.mxu0 0.0
    %2030 = vmatpush1.msra.mxu0 0.0
    %2031 = vmatprep.subr.mxu0 0.0
    %2032 = vmatpush1.msra.mxu0 0.0
    %2033 = vmatprep.subr.mxu0 0.0
    %2034 = vmatpush1.msra.mxu0 0.0
    %2035 = vmatprep.subr.mxu0 0.0
    %2036 = vmatpush1.msra.mxu0 0.0
    %2037 = vmatprep.subr.mxu0 0.0
    %2038 = vmatpush1.msra.mxu0 0.0
    %2039 = vmatprep.subr.mxu0 0.0
    %2040 = vmatpush1.msra.mxu0 0.0
    %2041 = vmatprep.subr.mxu0 0.0
    %2042 = vmatpush1.msra.mxu0 0.0
    %2043 = vmatprep.subr.mxu0 0.0
    %2044 = vmatpush1.msra.mxu0 0.0
    %2045 = vmatprep.subr.mxu0 0.0
    %2046 = vmatpush1.msra.mxu0 0.0
    %2047 = vmatprep.subr.mxu0 0.0
    %2048 = vmatpush1.msra.mxu0 0.0
    %2049 = vmatprep.subr.mxu0 0.0
    %2050 = vmatpush1.msra.mxu0 0.0
    %2051 = vmatprep.subr.mxu0 0.0
    %2052 = vmatpush1.msra.mxu0 0.0
    %2053 = vmatprep.subr.mxu0 0.0
    %2054 = vmatpush1.msra.mxu0 0.0
    %2055 = vmatprep.subr.mxu0 0.0
    %2056 = vmatpush1.msra.mxu0 0.0
    %2057 = vmatprep.subr.mxu0 0.0
    %2058 = vmatpush1.msra.mxu0 0.0
    %2059 = vmatprep.subr.mxu0 0.0
    %2060 = vmatpush1.msra.mxu0 0.0
    %2061 = vmatprep.subr.mxu0 0.0
    %2062 = vmatpush1.msra.mxu0 0.0
    %2063 = vmatprep.subr.mxu0 0.0
    %2064 = vmatpush1.msra.mxu0 0.0
    %2065 = vmatprep.subr.mxu0 0.0
    %2066 = vmatpush1.msra.mxu0 0.0
    %2067 = vmatprep.mubr.f32.mxu0 0.0
    %2068 = vmatmul.mubr.f32.gmra.mrb[0].mxu0 %v2001
    %v2069 = vpop.f32.mrb[0].mxu0
    %v2070 = vadd.f32 0.0, %v2069
    %v2071 = vpop.f32.mrb[0].mxu0
    %2072 = vdwg.mxu0
    %2073 = vrot.lane.b32.xlu0 %v403, 64
    %v2074 = vpop.permute.xlu0 %2073
    %v2077 = vsel %vm1668, %v1832, 0
    %2079 = vmatprep.subr.mxu0 0.0
    %2080 = vmatpush1.msra.mxu0 %v2074
    %2081 = vmatprep.subr.mxu0 0.0
    %2082 = vmatpush1.msra.mxu0 0.0
    %2083 = vmatprep.subr.mxu0 0.0
    %2084 = vmatpush1.msra.mxu0 0.0
    %2085 = vmatprep.subr.mxu0 0.0
    %2086 = vmatpush1.msra.mxu0 0.0
    %2087 = vmatprep.subr.mxu0 0.0
    %2088 = vmatpush1.msra.mxu0 0.0
    %2089 = vmatprep.subr.mxu0 0.0
    %2090 = vmatpush1.msra.mxu0 0.0
    %2091 = vmatprep.subr.mxu0 0.0
    %2092 = vmatpush1.msra.mxu0 0.0
    %2093 = vmatprep.subr.mxu0 0.0
    %2094 = vmatpush1.msra.mxu0 0.0
    %2095 = vmatprep.subr.mxu0 0.0
    %2096 = vmatpush1.msra.mxu0 0.0
    %2097 = vmatprep.subr.mxu0 0.0
    %2098 = vmatpush1.msra.mxu0 0.0
    %2099 = vmatprep.subr.mxu0 0.0
    %2100 = vmatpush1.msra.mxu0 0.0
    %2101 = vmatprep.subr.mxu0 0.0
    %2102 = vmatpush1.msra.mxu0 0.0
    %2103 = vmatprep.subr.mxu0 0.0
    %2104 = vmatpush1.msra.mxu0 0.0
    %2105 = vmatprep.subr.mxu0 0.0
    %2106 = vmatpush1.msra.mxu0 0.0
    %2107 = vmatprep.subr.mxu0 0.0
    %2108 = vmatpush1.msra.mxu0 0.0
    %2109 = vmatprep.subr.mxu0 0.0
    %2110 = vmatpush1.msra.mxu0 0.0
    %2111 = vmatprep.subr.mxu0 0.0
    %2112 = vmatpush1.msra.mxu0 0.0
    %2113 = vmatprep.subr.mxu0 0.0
    %2114 = vmatpush1.msra.mxu0 0.0
    %2115 = vmatprep.subr.mxu0 0.0
    %2116 = vmatpush1.msra.mxu0 0.0
    %2117 = vmatprep.subr.mxu0 0.0
    %2118 = vmatpush1.msra.mxu0 0.0
    %2119 = vmatprep.subr.mxu0 0.0
    %2120 = vmatpush1.msra.mxu0 0.0
    %2121 = vmatprep.subr.mxu0 0.0
    %2122 = vmatpush1.msra.mxu0 0.0
    %2123 = vmatprep.subr.mxu0 0.0
    %2124 = vmatpush1.msra.mxu0 0.0
    %2125 = vmatprep.subr.mxu0 0.0
    %2126 = vmatpush1.msra.mxu0 0.0
    %2127 = vmatprep.subr.mxu0 0.0
    %2128 = vmatpush1.msra.mxu0 0.0
    %2129 = vmatprep.subr.mxu0 0.0
    %2130 = vmatpush1.msra.mxu0 0.0
    %2131 = vmatprep.subr.mxu0 0.0
    %2132 = vmatpush1.msra.mxu0 0.0
    %2133 = vmatprep.subr.mxu0 0.0
    %2134 = vmatpush1.msra.mxu0 0.0
    %2135 = vmatprep.subr.mxu0 0.0
    %2136 = vmatpush1.msra.mxu0 0.0
    %2137 = vmatprep.subr.mxu0 0.0
    %2138 = vmatpush1.msra.mxu0 0.0
    %2139 = vmatprep.subr.mxu0 0.0
    %2140 = vmatpush1.msra.mxu0 0.0
    %2141 = vmatprep.subr.mxu0 0.0
    %2142 = vmatpush1.msra.mxu0 0.0
    %2143 = vmatprep.mubr.f32.mxu0 0.0
    %2144 = vmatmul.mubr.f32.gmra.mrb[0].mxu0 %v2077
    %v2145 = vpop.f32.mrb[0].mxu0
    %v2146 = vadd.f32 0.0, %v2145
    %v2147 = vpop.f32.mrb[0].mxu0
    %2148 = vdwg.mxu0
    %2149 = vrot.lane.b32.xlu0 %v405, 64
    %v2150 = vpop.permute.xlu0 %2149
    %v2153 = vsel %vm1668, %v1833, 0
    %2155 = vmatprep.subr.mxu0 0.0
    %2156 = vmatpush1.msra.mxu0 %v2150
    %2157 = vmatprep.subr.mxu0 0.0
    %2158 = vmatpush1.msra.mxu0 0.0
    %2159 = vmatprep.subr.mxu0 0.0
    %2160 = vmatpush1.msra.mxu0 0.0
    %2161 = vmatprep.subr.mxu0 0.0
    %2162 = vmatpush1.msra.mxu0 0.0
    %2163 = vmatprep.subr.mxu0 0.0
    %2164 = vmatpush1.msra.mxu0 0.0
    %2165 = vmatprep.subr.mxu0 0.0
    %2166 = vmatpush1.msra.mxu0 0.0
    %2167 = vmatprep.subr.mxu0 0.0
    %2168 = vmatpush1.msra.mxu0 0.0
    %2169 = vmatprep.subr.mxu0 0.0
    %2170 = vmatpush1.msra.mxu0 0.0
    %2171 = vmatprep.subr.mxu0 0.0
    %2172 = vmatpush1.msra.mxu0 0.0
    %2173 = vmatprep.subr.mxu0 0.0
    %2174 = vmatpush1.msra.mxu0 0.0
    %2175 = vmatprep.subr.mxu0 0.0
    %2176 = vmatpush1.msra.mxu0 0.0
    %2177 = vmatprep.subr.mxu0 0.0
    %2178 = vmatpush1.msra.mxu0 0.0
    %2179 = vmatprep.subr.mxu0 0.0
    %2180 = vmatpush1.msra.mxu0 0.0
    %2181 = vmatprep.subr.mxu0 0.0
    %2182 = vmatpush1.msra.mxu0 0.0
    %2183 = vmatprep.subr.mxu0 0.0
    %2184 = vmatpush1.msra.mxu0 0.0
    %2185 = vmatprep.subr.mxu0 0.0
    %2186 = vmatpush1.msra.mxu0 0.0
    %2187 = vmatprep.subr.mxu0 0.0
    %2188 = vmatpush1.msra.mxu0 0.0
    %2189 = vmatprep.subr.mxu0 0.0
    %2190 = vmatpush1.msra.mxu0 0.0
    %2191 = vmatprep.subr.mxu0 0.0
    %2192 = vmatpush1.msra.mxu0 0.0
    %2193 = vmatprep.subr.mxu0 0.0
    %2194 = vmatpush1.msra.mxu0 0.0
    %2195 = vmatprep.subr.mxu0 0.0
    %2196 = vmatpush1.msra.mxu0 0.0
    %2197 = vmatprep.subr.mxu0 0.0
    %2198 = vmatpush1.msra.mxu0 0.0
    %2199 = vmatprep.subr.mxu0 0.0
    %2200 = vmatpush1.msra.mxu0 0.0
    %2201 = vmatprep.subr.mxu0 0.0
    %2202 = vmatpush1.msra.mxu0 0.0
    %2203 = vmatprep.subr.mxu0 0.0
    %2204 = vmatpush1.msra.mxu0 0.0
    %2205 = vmatprep.subr.mxu0 0.0
    %2206 = vmatpush1.msra.mxu0 0.0
    %2207 = vmatprep.subr.mxu0 0.0
    %2208 = vmatpush1.msra.mxu0 0.0
    %2209 = vmatprep.subr.mxu0 0.0
    %2210 = vmatpush1.msra.mxu0 0.0
    %2211 = vmatprep.subr.mxu0 0.0
    %2212 = vmatpush1.msra.mxu0 0.0
    %2213 = vmatprep.subr.mxu0 0.0
    %2214 = vmatpush1.msra.mxu0 0.0
    %2215 = vmatprep.subr.mxu0 0.0
    %2216 = vmatpush1.msra.mxu0 0.0
    %2217 = vmatprep.subr.mxu0 0.0
    %2218 = vmatpush1.msra.mxu0 0.0
    %2219 = vmatprep.mubr.f32.mxu0 0.0
    %2220 = vmatmul.mubr.f32.gmra.mrb[0].mxu0 %v2153
    %v2221 = vpop.f32.mrb[0].mxu0
    %v2222 = vadd.f32 0.0, %v2221
    %v2223 = vpop.f32.mrb[0].mxu0
    %2224 = vdwg.mxu0
    %2225 = vrot.lane.b32.xlu0 %v407, 64
    %v2226 = vpop.permute.xlu0 %2225
    %v2229 = vsel %vm1668, %v1834, 0
    %2231 = vmatprep.subr.mxu0 0.0
    %2232 = vmatpush1.msra.mxu0 %v2226
    %2233 = vmatprep.subr.mxu0 0.0
    %2234 = vmatpush1.msra.mxu0 0.0
    %2235 = vmatprep.subr.mxu0 0.0
    %2236 = vmatpush1.msra.mxu0 0.0
    %2237 = vmatprep.subr.mxu0 0.0
    %2238 = vmatpush1.msra.mxu0 0.0
    %2239 = vmatprep.subr.mxu0 0.0
    %2240 = vmatpush1.msra.mxu0 0.0
    %2241 = vmatprep.subr.mxu0 0.0
    %2242 = vmatpush1.msra.mxu0 0.0
    %2243 = vmatprep.subr.mxu0 0.0
    %2244 = vmatpush1.msra.mxu0 0.0
    %2245 = vmatprep.subr.mxu0 0.0
    %2246 = vmatpush1.msra.mxu0 0.0
    %2247 = vmatprep.subr.mxu0 0.0
    %2248 = vmatpush1.msra.mxu0 0.0
    %2249 = vmatprep.subr.mxu0 0.0
    %2250 = vmatpush1.msra.mxu0 0.0
    %2251 = vmatprep.subr.mxu0 0.0
    %2252 = vmatpush1.msra.mxu0 0.0
    %2253 = vmatprep.subr.mxu0 0.0
    %2254 = vmatpush1.msra.mxu0 0.0
    %2255 = vmatprep.subr.mxu0 0.0
    %2256 = vmatpush1.msra.mxu0 0.0
    %2257 = vmatprep.subr.mxu0 0.0
    %2258 = vmatpush1.msra.mxu0 0.0
    %2259 = vmatprep.subr.mxu0 0.0
    %2260 = vmatpush1.msra.mxu0 0.0
    %2261 = vmatprep.subr.mxu0 0.0
    %2262 = vmatpush1.msra.mxu0 0.0
    %2263 = vmatprep.subr.mxu0 0.0
    %2264 = vmatpush1.msra.mxu0 0.0
    %2265 = vmatprep.subr.mxu0 0.0
    %2266 = vmatpush1.msra.mxu0 0.0
    %2267 = vmatprep.subr.mxu0 0.0
    %2268 = vmatpush1.msra.mxu0 0.0
    %2269 = vmatprep.subr.mxu0 0.0
    %2270 = vmatpush1.msra.mxu0 0.0
    %2271 = vmatprep.subr.mxu0 0.0
    %2272 = vmatpush1.msra.mxu0 0.0
    %2273 = vmatprep.subr.mxu0 0.0
    %2274 = vmatpush1.msra.mxu0 0.0
    %2275 = vmatprep.subr.mxu0 0.0
    %2276 = vmatpush1.msra.mxu0 0.0
    %2277 = vmatprep.subr.mxu0 0.0
    %2278 = vmatpush1.msra.mxu0 0.0
    %2279 = vmatprep.subr.mxu0 0.0
    %2280 = vmatpush1.msra.mxu0 0.0
    %2281 = vmatprep.subr.mxu0 0.0
    %2282 = vmatpush1.msra.mxu0 0.0
    %2283 = vmatprep.subr.mxu0 0.0
    %2284 = vmatpush1.msra.mxu0 0.0
    %2285 = vmatprep.subr.mxu0 0.0
    %2286 = vmatpush1.msra.mxu0 0.0
    %2287 = vmatprep.subr.mxu0 0.0
    %2288 = vmatpush1.msra.mxu0 0.0
    %2289 = vmatprep.subr.mxu0 0.0
    %2290 = vmatpush1.msra.mxu0 0.0
    %2291 = vmatprep.subr.mxu0 0.0
    %2292 = vmatpush1.msra.mxu0 0.0
    %2293 = vmatprep.subr.mxu0 0.0
    %2294 = vmatpush1.msra.mxu0 0.0
    %2295 = vmatprep.mubr.f32.mxu0 0.0
    %2296 = vmatmul.mubr.f32.gmra.mrb[0].mxu0 %v2229
    %v2297 = vpop.f32.mrb[0].mxu0
    %v2298 = vadd.f32 0.0, %v2297
    %v2299 = vpop.f32.mrb[0].mxu0
    %2300 = vdwg.mxu0
    %2301 = vrot.lane.b32.xlu0 %v409, 64
    %v2302 = vpop.permute.xlu0 %2301
    %v2305 = vsel %vm1668, %v1835, 0
    %2307 = vmatprep.subr.mxu0 0.0
    %2308 = vmatpush1.msra.mxu0 %v2302
    %2309 = vmatprep.subr.mxu0 0.0
    %2310 = vmatpush1.msra.mxu0 0.0
    %2311 = vmatprep.subr.mxu0 0.0
    %2312 = vmatpush1.msra.mxu0 0.0
    %2313 = vmatprep.subr.mxu0 0.0
    %2314 = vmatpush1.msra.mxu0 0.0
    %2315 = vmatprep.subr.mxu0 0.0
    %2316 = vmatpush1.msra.mxu0 0.0
    %2317 = vmatprep.subr.mxu0 0.0
    %2318 = vmatpush1.msra.mxu0 0.0
    %2319 = vmatprep.subr.mxu0 0.0
    %2320 = vmatpush1.msra.mxu0 0.0
    %2321 = vmatprep.subr.mxu0 0.0
    %2322 = vmatpush1.msra.mxu0 0.0
    %2323 = vmatprep.subr.mxu0 0.0
    %2324 = vmatpush1.msra.mxu0 0.0
    %2325 = vmatprep.subr.mxu0 0.0
    %2326 = vmatpush1.msra.mxu0 0.0
    %2327 = vmatprep.subr.mxu0 0.0
    %2328 = vmatpush1.msra.mxu0 0.0
    %2329 = vmatprep.subr.mxu0 0.0
    %2330 = vmatpush1.msra.mxu0 0.0
    %2331 = vmatprep.subr.mxu0 0.0
    %2332 = vmatpush1.msra.mxu0 0.0
    %2333 = vmatprep.subr.mxu0 0.0
    %2334 = vmatpush1.msra.mxu0 0.0
    %2335 = vmatprep.subr.mxu0 0.0
    %2336 = vmatpush1.msra.mxu0 0.0
    %2337 = vmatprep.subr.mxu0 0.0
    %2338 = vmatpush1.msra.mxu0 0.0
    %2339 = vmatprep.subr.mxu0 0.0
    %2340 = vmatpush1.msra.mxu0 0.0
    %2341 = vmatprep.subr.mxu0 0.0
    %2342 = vmatpush1.msra.mxu0 0.0
    %2343 = vmatprep.subr.mxu0 0.0
    %2344 = vmatpush1.msra.mxu0 0.0
    %2345 = vmatprep.subr.mxu0 0.0
    %2346 = vmatpush1.msra.mxu0 0.0
    %2347 = vmatprep.subr.mxu0 0.0
    %2348 = vmatpush1.msra.mxu0 0.0
    %2349 = vmatprep.subr.mxu0 0.0
    %2350 = vmatpush1.msra.mxu0 0.0
    %2351 = vmatprep.subr.mxu0 0.0
    %2352 = vmatpush1.msra.mxu0 0.0
    %2353 = vmatprep.subr.mxu0 0.0
    %2354 = vmatpush1.msra.mxu0 0.0
    %2355 = vmatprep.subr.mxu0 0.0
    %2356 = vmatpush1.msra.mxu0 0.0
    %2357 = vmatprep.subr.mxu0 0.0
    %2358 = vmatpush1.msra.mxu0 0.0
    %2359 = vmatprep.subr.mxu0 0.0
    %2360 = vmatpush1.msra.mxu0 0.0
    %2361 = vmatprep.subr.mxu0 0.0
    %2362 = vmatpush1.msra.mxu0 0.0
    %2363 = vmatprep.subr.mxu0 0.0
    %2364 = vmatpush1.msra.mxu0 0.0
    %2365 = vmatprep.subr.mxu0 0.0
    %2366 = vmatpush1.msra.mxu0 0.0
    %2367 = vmatprep.subr.mxu0 0.0
    %2368 = vmatpush1.msra.mxu0 0.0
    %2369 = vmatprep.subr.mxu0 0.0
    %2370 = vmatpush1.msra.mxu0 0.0
    %2371 = vmatprep.mubr.f32.mxu0 0.0
    %2372 = vmatmul.mubr.f32.gmra.mrb[0].mxu0 %v2305
    %v2373 = vpop.f32.mrb[0].mxu0
    %v2374 = vadd.f32 0.0, %v2373
    %v2375 = vpop.f32.mrb[0].mxu0
    %2376 = vdwg.mxu0
    %2377 = vrot.lane.b32.xlu0 %v411, 64
    %v2378 = vpop.permute.xlu0 %2377
    %v2381 = vsel %vm1668, %v1836, 0
    %2383 = vmatprep.subr.mxu0 0.0
    %2384 = vmatpush1.msra.mxu0 %v2378
    %2385 = vmatprep.subr.mxu0 0.0
    %2386 = vmatpush1.msra.mxu0 0.0
    %2387 = vmatprep.subr.mxu0 0.0
    %2388 = vmatpush1.msra.mxu0 0.0
    %2389 = vmatprep.subr.mxu0 0.0
    %2390 = vmatpush1.msra.mxu0 0.0
    %2391 = vmatprep.subr.mxu0 0.0
    %2392 = vmatpush1.msra.mxu0 0.0
    %2393 = vmatprep.subr.mxu0 0.0
    %2394 = vmatpush1.msra.mxu0 0.0
    %2395 = vmatprep.subr.mxu0 0.0
    %2396 = vmatpush1.msra.mxu0 0.0
    %2397 = vmatprep.subr.mxu0 0.0
    %2398 = vmatpush1.msra.mxu0 0.0
    %2399 = vmatprep.subr.mxu0 0.0
    %2400 = vmatpush1.msra.mxu0 0.0
    %2401 = vmatprep.subr.mxu0 0.0
    %2402 = vmatpush1.msra.mxu0 0.0
    %2403 = vmatprep.subr.mxu0 0.0
    %2404 = vmatpush1.msra.mxu0 0.0
    %2405 = vmatprep.subr.mxu0 0.0
    %2406 = vmatpush1.msra.mxu0 0.0
    %2407 = vmatprep.subr.mxu0 0.0
    %2408 = vmatpush1.msra.mxu0 0.0
    %2409 = vmatprep.subr.mxu0 0.0
    %2410 = vmatpush1.msra.mxu0 0.0
    %2411 = vmatprep.subr.mxu0 0.0
    %2412 = vmatpush1.msra.mxu0 0.0
    %2413 = vmatprep.subr.mxu0 0.0
    %2414 = vmatpush1.msra.mxu0 0.0
    %2415 = vmatprep.subr.mxu0 0.0
    %2416 = vmatpush1.msra.mxu0 0.0
    %2417 = vmatprep.subr.mxu0 0.0
    %2418 = vmatpush1.msra.mxu0 0.0
    %2419 = vmatprep.subr.mxu0 0.0
    %2420 = vmatpush1.msra.mxu0 0.0
    %2421 = vmatprep.subr.mxu0 0.0
    %2422 = vmatpush1.msra.mxu0 0.0
    %2423 = vmatprep.subr.mxu0 0.0
    %2424 = vmatpush1.msra.mxu0 0.0
    %2425 = vmatprep.subr.mxu0 0.0
    %2426 = vmatpush1.msra.mxu0 0.0
    %2427 = vmatprep.subr.mxu0 0.0
    %2428 = vmatpush1.msra.mxu0 0.0
    %2429 = vmatprep.subr.mxu0 0.0
    %2430 = vmatpush1.msra.mxu0 0.0
    %2431 = vmatprep.subr.mxu0 0.0
    %2432 = vmatpush1.msra.mxu0 0.0
    %2433 = vmatprep.subr.mxu0 0.0
    %2434 = vmatpush1.msra.mxu0 0.0
    %2435 = vmatprep.subr.mxu0 0.0
    %2436 = vmatpush1.msra.mxu0 0.0
    %2437 = vmatprep.subr.mxu0 0.0
    %2438 = vmatpush1.msra.mxu0 0.0
    %2439 = vmatprep.subr.mxu0 0.0
    %2440 = vmatpush1.msra.mxu0 0.0
    %2441 = vmatprep.subr.mxu0 0.0
    %2442 = vmatpush1.msra.mxu0 0.0
    %2443 = vmatprep.subr.mxu0 0.0
    %2444 = vmatpush1.msra.mxu0 0.0
    %2445 = vmatprep.subr.mxu0 0.0
    %2446 = vmatpush1.msra.mxu0 0.0
    %2447 = vmatprep.mubr.f32.mxu0 0.0
    %2448 = vmatmul.mubr.f32.gmra.mrb[0].mxu0 %v2381
    %v2449 = vpop.f32.mrb[0].mxu0
    %v2450 = vadd.f32 0.0, %v2449
    %v2451 = vpop.f32.mrb[0].mxu0
    %2452 = vdwg.mxu0
    %2453 = vrot.lane.b32.xlu0 %v413, 64
    %v2454 = vpop.permute.xlu0 %2453
    %v2457 = vsel %vm1668, %v1837, 0
    %2459 = vmatprep.subr.mxu0 0.0
    %2460 = vmatpush1.msra.mxu0 %v2454
    %2461 = vmatprep.subr.mxu0 0.0
    %2462 = vmatpush1.msra.mxu0 0.0
    %2463 = vmatprep.subr.mxu0 0.0
    %2464 = vmatpush1.msra.mxu0 0.0
    %2465 = vmatprep.subr.mxu0 0.0
    %2466 = vmatpush1.msra.mxu0 0.0
    %2467 = vmatprep.subr.mxu0 0.0
    %2468 = vmatpush1.msra.mxu0 0.0
    %2469 = vmatprep.subr.mxu0 0.0
    %2470 = vmatpush1.msra.mxu0 0.0
    %2471 = vmatprep.subr.mxu0 0.0
    %2472 = vmatpush1.msra.mxu0 0.0
    %2473 = vmatprep.subr.mxu0 0.0
    %2474 = vmatpush1.msra.mxu0 0.0
    %2475 = vmatprep.subr.mxu0 0.0
    %2476 = vmatpush1.msra.mxu0 0.0
    %2477 = vmatprep.subr.mxu0 0.0
    %2478 = vmatpush1.msra.mxu0 0.0
    %2479 = vmatprep.subr.mxu0 0.0
    %2480 = vmatpush1.msra.mxu0 0.0
    %2481 = vmatprep.subr.mxu0 0.0
    %2482 = vmatpush1.msra.mxu0 0.0
    %2483 = vmatprep.subr.mxu0 0.0
    %2484 = vmatpush1.msra.mxu0 0.0
    %2485 = vmatprep.subr.mxu0 0.0
    %2486 = vmatpush1.msra.mxu0 0.0
    %2487 = vmatprep.subr.mxu0 0.0
    %2488 = vmatpush1.msra.mxu0 0.0
    %2489 = vmatprep.subr.mxu0 0.0
    %2490 = vmatpush1.msra.mxu0 0.0
    %2491 = vmatprep.subr.mxu0 0.0
    %2492 = vmatpush1.msra.mxu0 0.0
    %2493 = vmatprep.subr.mxu0 0.0
    %2494 = vmatpush1.msra.mxu0 0.0
    %2495 = vmatprep.subr.mxu0 0.0
    %2496 = vmatpush1.msra.mxu0 0.0
    %2497 = vmatprep.subr.mxu0 0.0
    %2498 = vmatpush1.msra.mxu0 0.0
    %2499 = vmatprep.subr.mxu0 0.0
    %2500 = vmatpush1.msra.mxu0 0.0
    %2501 = vmatprep.subr.mxu0 0.0
    %2502 = vmatpush1.msra.mxu0 0.0
    %2503 = vmatprep.subr.mxu0 0.0
    %2504 = vmatpush1.msra.mxu0 0.0
    %2505 = vmatprep.subr.mxu0 0.0
    %2506 = vmatpush1.msra.mxu0 0.0
    %2507 = vmatprep.subr.mxu0 0.0
    %2508 = vmatpush1.msra.mxu0 0.0
    %2509 = vmatprep.subr.mxu0 0.0
    %2510 = vmatpush1.msra.mxu0 0.0
    %2511 = vmatprep.subr.mxu0 0.0
    %2512 = vmatpush1.msra.mxu0 0.0
    %2513 = vmatprep.subr.mxu0 0.0
    %2514 = vmatpush1.msra.mxu0 0.0
    %2515 = vmatprep.subr.mxu0 0.0
    %2516 = vmatpush1.msra.mxu0 0.0
    %2517 = vmatprep.subr.mxu0 0.0
    %2518 = vmatpush1.msra.mxu0 0.0
    %2519 = vmatprep.subr.mxu0 0.0
    %2520 = vmatpush1.msra.mxu0 0.0
    %2521 = vmatprep.subr.mxu0 0.0
    %2522 = vmatpush1.msra.mxu0 0.0
    %2523 = vmatprep.mubr.f32.mxu0 0.0
    %2524 = vmatmul.mubr.f32.gmra.mrb[0].mxu0 %v2457
    %v2525 = vpop.f32.mrb[0].mxu0
    %v2526 = vadd.f32 0.0, %v2525
    %v2527 = vpop.f32.mrb[0].mxu0
    %2528 = vdwg.mxu0
    %2529 = vrot.lane.b32.xlu0 %v415, 64
    %v2530 = vpop.permute.xlu0 %2529
    %v2533 = vsel %vm1668, %v1838, 0
    %2535 = vmatprep.subr.mxu0 0.0
    %2536 = vmatpush1.msra.mxu0 %v2530
    %2537 = vmatprep.subr.mxu0 0.0
    %2538 = vmatpush1.msra.mxu0 0.0
    %2539 = vmatprep.subr.mxu0 0.0
    %2540 = vmatpush1.msra.mxu0 0.0
    %2541 = vmatprep.subr.mxu0 0.0
    %2542 = vmatpush1.msra.mxu0 0.0
    %2543 = vmatprep.subr.mxu0 0.0
    %2544 = vmatpush1.msra.mxu0 0.0
    %2545 = vmatprep.subr.mxu0 0.0
    %2546 = vmatpush1.msra.mxu0 0.0
    %2547 = vmatprep.subr.mxu0 0.0
    %2548 = vmatpush1.msra.mxu0 0.0
    %2549 = vmatprep.subr.mxu0 0.0
    %2550 = vmatpush1.msra.mxu0 0.0
    %2551 = vmatprep.subr.mxu0 0.0
    %2552 = vmatpush1.msra.mxu0 0.0
    %2553 = vmatprep.subr.mxu0 0.0
    %2554 = vmatpush1.msra.mxu0 0.0
    %2555 = vmatprep.subr.mxu0 0.0
    %2556 = vmatpush1.msra.mxu0 0.0
    %2557 = vmatprep.subr.mxu0 0.0
    %2558 = vmatpush1.msra.mxu0 0.0
    %2559 = vmatprep.subr.mxu0 0.0
    %2560 = vmatpush1.msra.mxu0 0.0
    %2561 = vmatprep.subr.mxu0 0.0
    %2562 = vmatpush1.msra.mxu0 0.0
    %2563 = vmatprep.subr.mxu0 0.0
    %2564 = vmatpush1.msra.mxu0 0.0
    %2565 = vmatprep.subr.mxu0 0.0
    %2566 = vmatpush1.msra.mxu0 0.0
    %2567 = vmatprep.subr.mxu0 0.0
    %2568 = vmatpush1.msra.mxu0 0.0
    %2569 = vmatprep.subr.mxu0 0.0
    %2570 = vmatpush1.msra.mxu0 0.0
    %2571 = vmatprep.subr.mxu0 0.0
    %2572 = vmatpush1.msra.mxu0 0.0
    %2573 = vmatprep.subr.mxu0 0.0
    %2574 = vmatpush1.msra.mxu0 0.0
    %2575 = vmatprep.subr.mxu0 0.0
    %2576 = vmatpush1.msra.mxu0 0.0
    %2577 = vmatprep.subr.mxu0 0.0
    %2578 = vmatpush1.msra.mxu0 0.0
    %2579 = vmatprep.subr.mxu0 0.0
    %2580 = vmatpush1.msra.mxu0 0.0
    %2581 = vmatprep.subr.mxu0 0.0
    %2582 = vmatpush1.msra.mxu0 0.0
    %2583 = vmatprep.subr.mxu0 0.0
    %2584 = vmatpush1.msra.mxu0 0.0
    %2585 = vmatprep.subr.mxu0 0.0
    %2586 = vmatpush1.msra.mxu0 0.0
    %2587 = vmatprep.subr.mxu0 0.0
    %2588 = vmatpush1.msra.mxu0 0.0
    %2589 = vmatprep.subr.mxu0 0.0
    %2590 = vmatpush1.msra.mxu0 0.0
    %2591 = vmatprep.subr.mxu0 0.0
    %2592 = vmatpush1.msra.mxu0 0.0
    %2593 = vmatprep.subr.mxu0 0.0
    %2594 = vmatpush1.msra.mxu0 0.0
    %2595 = vmatprep.subr.mxu0 0.0
    %2596 = vmatpush1.msra.mxu0 0.0
    %2597 = vmatprep.subr.mxu0 0.0
    %2598 = vmatpush1.msra.mxu0 0.0
    %2599 = vmatprep.mubr.f32.mxu0 0.0
    %2600 = vmatmul.mubr.f32.gmra.mrb[0].mxu0 %v2533
    %v2601 = vpop.f32.mrb[0].mxu0
    %v2602 = vadd.f32 0.0, %v2601
    %v2603 = vpop.f32.mrb[0].mxu0
    %2604 = vdwg.mxu0
    %2605 = vrot.lane.b32.xlu0 %v417, 64
    %v2606 = vpop.permute.xlu0 %2605
    %v2609 = vsel %vm1668, %v1839, 0
    %2611 = vmatprep.subr.mxu0 0.0
    %2612 = vmatpush1.msra.mxu0 %v2606
    %2613 = vmatprep.subr.mxu0 0.0
    %2614 = vmatpush1.msra.mxu0 0.0
    %2615 = vmatprep.subr.mxu0 0.0
    %2616 = vmatpush1.msra.mxu0 0.0
    %2617 = vmatprep.subr.mxu0 0.0
    %2618 = vmatpush1.msra.mxu0 0.0
    %2619 = vmatprep.subr.mxu0 0.0
    %2620 = vmatpush1.msra.mxu0 0.0
    %2621 = vmatprep.subr.mxu0 0.0
    %2622 = vmatpush1.msra.mxu0 0.0
    %2623 = vmatprep.subr.mxu0 0.0
    %2624 = vmatpush1.msra.mxu0 0.0
    %2625 = vmatprep.subr.mxu0 0.0
    %2626 = vmatpush1.msra.mxu0 0.0
    %2627 = vmatprep.subr.mxu0 0.0
    %2628 = vmatpush1.msra.mxu0 0.0
    %2629 = vmatprep.subr.mxu0 0.0
    %2630 = vmatpush1.msra.mxu0 0.0
    %2631 = vmatprep.subr.mxu0 0.0
    %2632 = vmatpush1.msra.mxu0 0.0
    %2633 = vmatprep.subr.mxu0 0.0
    %2634 = vmatpush1.msra.mxu0 0.0
    %2635 = vmatprep.subr.mxu0 0.0
    %2636 = vmatpush1.msra.mxu0 0.0
    %2637 = vmatprep.subr.mxu0 0.0
    %2638 = vmatpush1.msra.mxu0 0.0
    %2639 = vmatprep.subr.mxu0 0.0
    %2640 = vmatpush1.msra.mxu0 0.0
    %2641 = vmatprep.subr.mxu0 0.0
    %2642 = vmatpush1.msra.mxu0 0.0
    %2643 = vmatprep.subr.mxu0 0.0
    %2644 = vmatpush1.msra.mxu0 0.0
    %2645 = vmatprep.subr.mxu0 0.0
    %2646 = vmatpush1.msra.mxu0 0.0
    %2647 = vmatprep.subr.mxu0 0.0
    %2648 = vmatpush1.msra.mxu0 0.0
    %2649 = vmatprep.subr.mxu0 0.0
    %2650 = vmatpush1.msra.mxu0 0.0
    %2651 = vmatprep.subr.mxu0 0.0
    %2652 = vmatpush1.msra.mxu0 0.0
    %2653 = vmatprep.subr.mxu0 0.0
    %2654 = vmatpush1.msra.mxu0 0.0
    %2655 = vmatprep.subr.mxu0 0.0
    %2656 = vmatpush1.msra.mxu0 0.0
    %2657 = vmatprep.subr.mxu0 0.0
    %2658 = vmatpush1.msra.mxu0 0.0
    %2659 = vmatprep.subr.mxu0 0.0
    %2660 = vmatpush1.msra.mxu0 0.0
    %2661 = vmatprep.subr.mxu0 0.0
    %2662 = vmatpush1.msra.mxu0 0.0
    %2663 = vmatprep.subr.mxu0 0.0
    %2664 = vmatpush1.msra.mxu0 0.0
    %2665 = vmatprep.subr.mxu0 0.0
    %2666 = vmatpush1.msra.mxu0 0.0
    %2667 = vmatprep.subr.mxu0 0.0
    %2668 = vmatpush1.msra.mxu0 0.0
    %2669 = vmatprep.subr.mxu0 0.0
    %2670 = vmatpush1.msra.mxu0 0.0
    %2671 = vmatprep.subr.mxu0 0.0
    %2672 = vmatpush1.msra.mxu0 0.0
    %2673 = vmatprep.subr.mxu0 0.0
    %2674 = vmatpush1.msra.mxu0 0.0
    %2675 = vmatprep.mubr.f32.mxu0 0.0
    %2676 = vmatmul.mubr.f32.gmra.mrb[0].mxu0 %v2609
    %v2677 = vpop.f32.mrb[0].mxu0
    %v2678 = vadd.f32 0.0, %v2677
    %v2679 = vpop.f32.mrb[0].mxu0
    %2680 = vdwg.mxu0
    %2681 = vrot.lane.b32.xlu0 %v419, 64
    %v2682 = vpop.permute.xlu0 %2681
    %v2685 = vsel %vm1668, %v1840, 0
    %2687 = vmatprep.subr.mxu0 0.0
    %2688 = vmatpush1.msra.mxu0 %v2682
    %2689 = vmatprep.subr.mxu0 0.0
    %2690 = vmatpush1.msra.mxu0 0.0
    %2691 = vmatprep.subr.mxu0 0.0
    %2692 = vmatpush1.msra.mxu0 0.0
    %2693 = vmatprep.subr.mxu0 0.0
    %2694 = vmatpush1.msra.mxu0 0.0
    %2695 = vmatprep.subr.mxu0 0.0
    %2696 = vmatpush1.msra.mxu0 0.0
    %2697 = vmatprep.subr.mxu0 0.0
    %2698 = vmatpush1.msra.mxu0 0.0
    %2699 = vmatprep.subr.mxu0 0.0
    %2700 = vmatpush1.msra.mxu0 0.0
    %2701 = vmatprep.subr.mxu0 0.0
    %2702 = vmatpush1.msra.mxu0 0.0
    %2703 = vmatprep.subr.mxu0 0.0
    %2704 = vmatpush1.msra.mxu0 0.0
    %2705 = vmatprep.subr.mxu0 0.0
    %2706 = vmatpush1.msra.mxu0 0.0
    %2707 = vmatprep.subr.mxu0 0.0
    %2708 = vmatpush1.msra.mxu0 0.0
    %2709 = vmatprep.subr.mxu0 0.0
    %2710 = vmatpush1.msra.mxu0 0.0
    %2711 = vmatprep.subr.mxu0 0.0
    %2712 = vmatpush1.msra.mxu0 0.0
    %2713 = vmatprep.subr.mxu0 0.0
    %2714 = vmatpush1.msra.mxu0 0.0
    %2715 = vmatprep.subr.mxu0 0.0
    %2716 = vmatpush1.msra.mxu0 0.0
    %2717 = vmatprep.subr.mxu0 0.0
    %2718 = vmatpush1.msra.mxu0 0.0
    %2719 = vmatprep.subr.mxu0 0.0
    %2720 = vmatpush1.msra.mxu0 0.0
    %2721 = vmatprep.subr.mxu0 0.0
    %2722 = vmatpush1.msra.mxu0 0.0
    %2723 = vmatprep.subr.mxu0 0.0
    %2724 = vmatpush1.msra.mxu0 0.0
    %2725 = vmatprep.subr.mxu0 0.0
    %2726 = vmatpush1.msra.mxu0 0.0
    %2727 = vmatprep.subr.mxu0 0.0
    %2728 = vmatpush1.msra.mxu0 0.0
    %2729 = vmatprep.subr.mxu0 0.0
    %2730 = vmatpush1.msra.mxu0 0.0
    %2731 = vmatprep.subr.mxu0 0.0
    %2732 = vmatpush1.msra.mxu0 0.0
    %2733 = vmatprep.subr.mxu0 0.0
    %2734 = vmatpush1.msra.mxu0 0.0
    %2735 = vmatprep.subr.mxu0 0.0
    %2736 = vmatpush1.msra.mxu0 0.0
    %2737 = vmatprep.subr.mxu0 0.0
    %2738 = vmatpush1.msra.mxu0 0.0
    %2739 = vmatprep.subr.mxu0 0.0
    %2740 = vmatpush1.msra.mxu0 0.0
    %2741 = vmatprep.subr.mxu0 0.0
    %2742 = vmatpush1.msra.mxu0 0.0
    %2743 = vmatprep.subr.mxu0 0.0
    %2744 = vmatpush1.msra.mxu0 0.0
    %2745 = vmatprep.subr.mxu0 0.0
    %2746 = vmatpush1.msra.mxu0 0.0
    %2747 = vmatprep.subr.mxu0 0.0
    %2748 = vmatpush1.msra.mxu0 0.0
    %2749 = vmatprep.subr.mxu0 0.0
    %2750 = vmatpush1.msra.mxu0 0.0
    %2751 = vmatprep.mubr.f32.mxu0 0.0
    %2752 = vmatmul.mubr.f32.gmra.mrb[0].mxu0 %v2685
    %v2753 = vpop.f32.mrb[0].mxu0
    %v2754 = vadd.f32 0.0, %v2753
    %v2755 = vpop.f32.mrb[0].mxu0
    %2756 = vdwg.mxu0
    %2757 = vrot.lane.b32.xlu0 %v421, 64
    %v2758 = vpop.permute.xlu0 %2757
    %v2761 = vsel %vm1668, %v1841, 0
    %2763 = vmatprep.subr.mxu0 0.0
    %2764 = vmatpush1.msra.mxu0 %v2758
    %2765 = vmatprep.subr.mxu0 0.0
    %2766 = vmatpush1.msra.mxu0 0.0
    %2767 = vmatprep.subr.mxu0 0.0
    %2768 = vmatpush1.msra.mxu0 0.0
    %2769 = vmatprep.subr.mxu0 0.0
    %2770 = vmatpush1.msra.mxu0 0.0
    %2771 = vmatprep.subr.mxu0 0.0
    %2772 = vmatpush1.msra.mxu0 0.0
    %2773 = vmatprep.subr.mxu0 0.0
    %2774 = vmatpush1.msra.mxu0 0.0
    %2775 = vmatprep.subr.mxu0 0.0
    %2776 = vmatpush1.msra.mxu0 0.0
    %2777 = vmatprep.subr.mxu0 0.0
    %2778 = vmatpush1.msra.mxu0 0.0
    %2779 = vmatprep.subr.mxu0 0.0
    %2780 = vmatpush1.msra.mxu0 0.0
    %2781 = vmatprep.subr.mxu0 0.0
    %2782 = vmatpush1.msra.mxu0 0.0
    %2783 = vmatprep.subr.mxu0 0.0
    %2784 = vmatpush1.msra.mxu0 0.0
    %2785 = vmatprep.subr.mxu0 0.0
    %2786 = vmatpush1.msra.mxu0 0.0
    %2787 = vmatprep.subr.mxu0 0.0
    %2788 = vmatpush1.msra.mxu0 0.0
    %2789 = vmatprep.subr.mxu0 0.0
    %2790 = vmatpush1.msra.mxu0 0.0
    %2791 = vmatprep.subr.mxu0 0.0
    %2792 = vmatpush1.msra.mxu0 0.0
    %2793 = vmatprep.subr.mxu0 0.0
    %2794 = vmatpush1.msra.mxu0 0.0
    %2795 = vmatprep.subr.mxu0 0.0
    %2796 = vmatpush1.msra.mxu0 0.0
    %2797 = vmatprep.subr.mxu0 0.0
    %2798 = vmatpush1.msra.mxu0 0.0
    %2799 = vmatprep.subr.mxu0 0.0
    %2800 = vmatpush1.msra.mxu0 0.0
    %2801 = vmatprep.subr.mxu0 0.0
    %2802 = vmatpush1.msra.mxu0 0.0
    %2803 = vmatprep.subr.mxu0 0.0
    %2804 = vmatpush1.msra.mxu0 0.0
    %2805 = vmatprep.subr.mxu0 0.0
    %2806 = vmatpush1.msra.mxu0 0.0
    %2807 = vmatprep.subr.mxu0 0.0
    %2808 = vmatpush1.msra.mxu0 0.0
    %2809 = vmatprep.subr.mxu0 0.0
    %2810 = vmatpush1.msra.mxu0 0.0
    %2811 = vmatprep.subr.mxu0 0.0
    %2812 = vmatpush1.msra.mxu0 0.0
    %2813 = vmatprep.subr.mxu0 0.0
    %2814 = vmatpush1.msra.mxu0 0.0
    %2815 = vmatprep.subr.mxu0 0.0
    %2816 = vmatpush1.msra.mxu0 0.0
    %2817 = vmatprep.subr.mxu0 0.0
    %2818 = vmatpush1.msra.mxu0 0.0
    %2819 = vmatprep.subr.mxu0 0.0
    %2820 = vmatpush1.msra.mxu0 0.0
    %2821 = vmatprep.subr.mxu0 0.0
    %2822 = vmatpush1.msra.mxu0 0.0
    %2823 = vmatprep.subr.mxu0 0.0
    %2824 = vmatpush1.msra.mxu0 0.0
    %2825 = vmatprep.subr.mxu0 0.0
    %2826 = vmatpush1.msra.mxu0 0.0
    %2827 = vmatprep.mubr.f32.mxu0 0.0
    %2828 = vmatmul.mubr.f32.gmra.mrb[0].mxu0 %v2761
    %v2829 = vpop.f32.mrb[0].mxu0
    %v2830 = vadd.f32 0.0, %v2829
    %v2831 = vpop.f32.mrb[0].mxu0
    %2832 = vdwg.mxu0
    %2833 = vrot.lane.b32.xlu0 %v423, 64
    %v2834 = vpop.permute.xlu0 %2833
    %v2837 = vsel %vm1668, %v1842, 0
    %2839 = vmatprep.subr.mxu0 0.0
    %2840 = vmatpush1.msra.mxu0 %v2834
    %2841 = vmatprep.subr.mxu0 0.0
    %2842 = vmatpush1.msra.mxu0 0.0
    %2843 = vmatprep.subr.mxu0 0.0
    %2844 = vmatpush1.msra.mxu0 0.0
    %2845 = vmatprep.subr.mxu0 0.0
    %2846 = vmatpush1.msra.mxu0 0.0
    %2847 = vmatprep.subr.mxu0 0.0
    %2848 = vmatpush1.msra.mxu0 0.0
    %2849 = vmatprep.subr.mxu0 0.0
    %2850 = vmatpush1.msra.mxu0 0.0
    %2851 = vmatprep.subr.mxu0 0.0
    %2852 = vmatpush1.msra.mxu0 0.0
    %2853 = vmatprep.subr.mxu0 0.0
    %2854 = vmatpush1.msra.mxu0 0.0
    %2855 = vmatprep.subr.mxu0 0.0
    %2856 = vmatpush1.msra.mxu0 0.0
    %2857 = vmatprep.subr.mxu0 0.0
    %2858 = vmatpush1.msra.mxu0 0.0
    %2859 = vmatprep.subr.mxu0 0.0
    %2860 = vmatpush1.msra.mxu0 0.0
    %2861 = vmatprep.subr.mxu0 0.0
    %2862 = vmatpush1.msra.mxu0 0.0
    %2863 = vmatprep.subr.mxu0 0.0
    %2864 = vmatpush1.msra.mxu0 0.0
    %2865 = vmatprep.subr.mxu0 0.0
    %2866 = vmatpush1.msra.mxu0 0.0
    %2867 = vmatprep.subr.mxu0 0.0
    %2868 = vmatpush1.msra.mxu0 0.0
    %2869 = vmatprep.subr.mxu0 0.0
    %2870 = vmatpush1.msra.mxu0 0.0
    %2871 = vmatprep.subr.mxu0 0.0
    %2872 = vmatpush1.msra.mxu0 0.0
    %2873 = vmatprep.subr.mxu0 0.0
    %2874 = vmatpush1.msra.mxu0 0.0
    %2875 = vmatprep.subr.mxu0 0.0
    %2876 = vmatpush1.msra.mxu0 0.0
    %2877 = vmatprep.subr.mxu0 0.0
    %2878 = vmatpush1.msra.mxu0 0.0
    %2879 = vmatprep.subr.mxu0 0.0
    %2880 = vmatpush1.msra.mxu0 0.0
    %2881 = vmatprep.subr.mxu0 0.0
    %2882 = vmatpush1.msra.mxu0 0.0
    %2883 = vmatprep.subr.mxu0 0.0
    %2884 = vmatpush1.msra.mxu0 0.0
    %2885 = vmatprep.subr.mxu0 0.0
    %2886 = vmatpush1.msra.mxu0 0.0
    %2887 = vmatprep.subr.mxu0 0.0
    %2888 = vmatpush1.msra.mxu0 0.0
    %2889 = vmatprep.subr.mxu0 0.0
    %2890 = vmatpush1.msra.mxu0 0.0
    %2891 = vmatprep.subr.mxu0 0.0
    %2892 = vmatpush1.msra.mxu0 0.0
    %2893 = vmatprep.subr.mxu0 0.0
    %2894 = vmatpush1.msra.mxu0 0.0
    %2895 = vmatprep.subr.mxu0 0.0
    %2896 = vmatpush1.msra.mxu0 0.0
    %2897 = vmatprep.subr.mxu0 0.0
    %2898 = vmatpush1.msra.mxu0 0.0
    %2899 = vmatprep.subr.mxu0 0.0
    %2900 = vmatpush1.msra.mxu0 0.0
    %2901 = vmatprep.subr.mxu0 0.0
    %2902 = vmatpush1.msra.mxu0 0.0
    %2903 = vmatprep.mubr.f32.mxu0 0.0
    %2904 = vmatmul.mubr.f32.gmra.mrb[0].mxu0 %v2837
    %v2905 = vpop.f32.mrb[0].mxu0
    %v2906 = vadd.f32 0.0, %v2905
    %v2907 = vpop.f32.mrb[0].mxu0
    %2908 = vdwg.mxu0
    %2909 = vrot.lane.b32.xlu0 %v425, 64
    %v2910 = vpop.permute.xlu0 %2909
    %v2913 = vsel %vm1668, %v1843, 0
    %2915 = vmatprep.subr.mxu0 0.0
    %2916 = vmatpush1.msra.mxu0 %v2910
    %2917 = vmatprep.subr.mxu0 0.0
    %2918 = vmatpush1.msra.mxu0 0.0
    %2919 = vmatprep.subr.mxu0 0.0
    %2920 = vmatpush1.msra.mxu0 0.0
    %2921 = vmatprep.subr.mxu0 0.0
    %2922 = vmatpush1.msra.mxu0 0.0
    %2923 = vmatprep.subr.mxu0 0.0
    %2924 = vmatpush1.msra.mxu0 0.0
    %2925 = vmatprep.subr.mxu0 0.0
    %2926 = vmatpush1.msra.mxu0 0.0
    %2927 = vmatprep.subr.mxu0 0.0
    %2928 = vmatpush1.msra.mxu0 0.0
    %2929 = vmatprep.subr.mxu0 0.0
    %2930 = vmatpush1.msra.mxu0 0.0
    %2931 = vmatprep.subr.mxu0 0.0
    %2932 = vmatpush1.msra.mxu0 0.0
    %2933 = vmatprep.subr.mxu0 0.0
    %2934 = vmatpush1.msra.mxu0 0.0
    %2935 = vmatprep.subr.mxu0 0.0
    %2936 = vmatpush1.msra.mxu0 0.0
    %2937 = vmatprep.subr.mxu0 0.0
    %2938 = vmatpush1.msra.mxu0 0.0
    %2939 = vmatprep.subr.mxu0 0.0
    %2940 = vmatpush1.msra.mxu0 0.0
    %2941 = vmatprep.subr.mxu0 0.0
    %2942 = vmatpush1.msra.mxu0 0.0
    %2943 = vmatprep.subr.mxu0 0.0
    %2944 = vmatpush1.msra.mxu0 0.0
    %2945 = vmatprep.subr.mxu0 0.0
    %2946 = vmatpush1.msra.mxu0 0.0
    %2947 = vmatprep.subr.mxu0 0.0
    %2948 = vmatpush1.msra.mxu0 0.0
    %2949 = vmatprep.subr.mxu0 0.0
    %2950 = vmatpush1.msra.mxu0 0.0
    %2951 = vmatprep.subr.mxu0 0.0
    %2952 = vmatpush1.msra.mxu0 0.0
    %2953 = vmatprep.subr.mxu0 0.0
    %2954 = vmatpush1.msra.mxu0 0.0
    %2955 = vmatprep.subr.mxu0 0.0
    %2956 = vmatpush1.msra.mxu0 0.0
    %2957 = vmatprep.subr.mxu0 0.0
    %2958 = vmatpush1.msra.mxu0 0.0
    %2959 = vmatprep.subr.mxu0 0.0
    %2960 = vmatpush1.msra.mxu0 0.0
    %2961 = vmatprep.subr.mxu0 0.0
    %2962 = vmatpush1.msra.mxu0 0.0
    %2963 = vmatprep.subr.mxu0 0.0
    %2964 = vmatpush1.msra.mxu0 0.0
    %2965 = vmatprep.subr.mxu0 0.0
    %2966 = vmatpush1.msra.mxu0 0.0
    %2967 = vmatprep.subr.mxu0 0.0
    %2968 = vmatpush1.msra.mxu0 0.0
    %2969 = vmatprep.subr.mxu0 0.0
    %2970 = vmatpush1.msra.mxu0 0.0
    %2971 = vmatprep.subr.mxu0 0.0
    %2972 = vmatpush1.msra.mxu0 0.0
    %2973 = vmatprep.subr.mxu0 0.0
    %2974 = vmatpush1.msra.mxu0 0.0
    %2975 = vmatprep.subr.mxu0 0.0
    %2976 = vmatpush1.msra.mxu0 0.0
    %2977 = vmatprep.subr.mxu0 0.0
    %2978 = vmatpush1.msra.mxu0 0.0
    %2979 = vmatprep.mubr.f32.mxu0 0.0
    %2980 = vmatmul.mubr.f32.gmra.mrb[0].mxu0 %v2913
    %v2981 = vpop.f32.mrb[0].mxu0
    %v2982 = vadd.f32 0.0, %v2981
    %v2983 = vpop.f32.mrb[0].mxu0
    %2984 = vdwg.mxu0
    %2985 = vrot.lane.b32.xlu0 %v427, 64
    %v2986 = vpop.permute.xlu0 %2985
    %v2989 = vsel %vm1668, %v1844, 0
    %2991 = vmatprep.subr.mxu0 0.0
    %2992 = vmatpush1.msra.mxu0 %v2986
    %2993 = vmatprep.subr.mxu0 0.0
    %2994 = vmatpush1.msra.mxu0 0.0
    %2995 = vmatprep.subr.mxu0 0.0
    %2996 = vmatpush1.msra.mxu0 0.0
    %2997 = vmatprep.subr.mxu0 0.0
    %2998 = vmatpush1.msra.mxu0 0.0
    %2999 = vmatprep.subr.mxu0 0.0
    %3000 = vmatpush1.msra.mxu0 0.0
    %3001 = vmatprep.subr.mxu0 0.0
    %3002 = vmatpush1.msra.mxu0 0.0
    %3003 = vmatprep.subr.mxu0 0.0
    %3004 = vmatpush1.msra.mxu0 0.0
    %3005 = vmatprep.subr.mxu0 0.0
    %3006 = vmatpush1.msra.mxu0 0.0
    %3007 = vmatprep.subr.mxu0 0.0
    %3008 = vmatpush1.msra.mxu0 0.0
    %3009 = vmatprep.subr.mxu0 0.0
    %3010 = vmatpush1.msra.mxu0 0.0
    %3011 = vmatprep.subr.mxu0 0.0
    %3012 = vmatpush1.msra.mxu0 0.0
    %3013 = vmatprep.subr.mxu0 0.0
    %3014 = vmatpush1.msra.mxu0 0.0
    %3015 = vmatprep.subr.mxu0 0.0
    %3016 = vmatpush1.msra.mxu0 0.0
    %3017 = vmatprep.subr.mxu0 0.0
    %3018 = vmatpush1.msra.mxu0 0.0
    %3019 = vmatprep.subr.mxu0 0.0
    %3020 = vmatpush1.msra.mxu0 0.0
    %3021 = vmatprep.subr.mxu0 0.0
    %3022 = vmatpush1.msra.mxu0 0.0
    %3023 = vmatprep.subr.mxu0 0.0
    %3024 = vmatpush1.msra.mxu0 0.0
    %3025 = vmatprep.subr.mxu0 0.0
    %3026 = vmatpush1.msra.mxu0 0.0
    %3027 = vmatprep.subr.mxu0 0.0
    %3028 = vmatpush1.msra.mxu0 0.0
    %3029 = vmatprep.subr.mxu0 0.0
    %3030 = vmatpush1.msra.mxu0 0.0
    %3031 = vmatprep.subr.mxu0 0.0
    %3032 = vmatpush1.msra.mxu0 0.0
    %3033 = vmatprep.subr.mxu0 0.0
    %3034 = vmatpush1.msra.mxu0 0.0
    %3035 = vmatprep.subr.mxu0 0.0
    %3036 = vmatpush1.msra.mxu0 0.0
    %3037 = vmatprep.subr.mxu0 0.0
    %3038 = vmatpush1.msra.mxu0 0.0
    %3039 = vmatprep.subr.mxu0 0.0
    %3040 = vmatpush1.msra.mxu0 0.0
    %3041 = vmatprep.subr.mxu0 0.0
    %3042 = vmatpush1.msra.mxu0 0.0
    %3043 = vmatprep.subr.mxu0 0.0
    %3044 = vmatpush1.msra.mxu0 0.0
    %3045 = vmatprep.subr.mxu0 0.0
    %3046 = vmatpush1.msra.mxu0 0.0
    %3047 = vmatprep.subr.mxu0 0.0
    %3048 = vmatpush1.msra.mxu0 0.0
    %3049 = vmatprep.subr.mxu0 0.0
    %3050 = vmatpush1.msra.mxu0 0.0
    %3051 = vmatprep.subr.mxu0 0.0
    %3052 = vmatpush1.msra.mxu0 0.0
    %3053 = vmatprep.subr.mxu0 0.0
    %3054 = vmatpush1.msra.mxu0 0.0
    %3055 = vmatprep.mubr.f32.mxu0 0.0
    %3056 = vmatmul.mubr.f32.gmra.mrb[0].mxu0 %v2989
    %v3057 = vpop.f32.mrb[0].mxu0
    %v3058 = vadd.f32 0.0, %v3057
    %v3059 = vpop.f32.mrb[0].mxu0
    %3060 = vdwg.mxu0
    %3063 = vrot.lane.b32.xlu0 %v2070, 4
    %v3064 = vpop.permute.xlu0 %3063
    %3065 = vrot.lane.b32.xlu0 %v2146, 4
    %v3066 = vpop.permute.xlu0 %3065
    %3071 = vrot.lane.b32.xlu0 %v2222, 8
    %v3072 = vpop.permute.xlu0 %3071
    %3073 = vrot.lane.b32.xlu0 %v2298, 8
    %v3074 = vpop.permute.xlu0 %3073
    %3079 = vrot.lane.b32.xlu0 %v2374, 12
    %v3080 = vpop.permute.xlu0 %3079
    %3081 = vrot.lane.b32.xlu0 %v2450, 12
    %v3082 = vpop.permute.xlu0 %3081
    %3087 = vrot.lane.b32.xlu0 %v2526, 16
    %v3088 = vpop.permute.xlu0 %3087
    %3089 = vrot.lane.b32.xlu0 %v2602, 16
    %v3090 = vpop.permute.xlu0 %3089
    %3095 = vrot.lane.b32.xlu0 %v2678, 20
    %v3096 = vpop.permute.xlu0 %3095
    %3097 = vrot.lane.b32.xlu0 %v2754, 20
    %v3098 = vpop.permute.xlu0 %3097
    %3103 = vrot.lane.b32.xlu0 %v2830, 24
    %v3104 = vpop.permute.xlu0 %3103
    %3105 = vrot.lane.b32.xlu0 %v2906, 24
    %v3106 = vpop.permute.xlu0 %3105
    %3111 = vrot.lane.b32.xlu0 %v2982, 28
    %v3112 = vpop.permute.xlu0 %3111
    %3113 = vrot.lane.b32.xlu0 %v3058, 28
    %v3114 = vpop.permute.xlu0 %3113
    %v3117 = vsel %vm430, %v1918, %v3064
    %v3118 = vsel %vm430, %v1994, %v3066
    %v3119 = vsel %vm1668, %v3117, %v3072
    %v3120 = vsel %vm1668, %v3118, %v3074
    %vm3121 = vcmask 97280
    %v3122 = vsel %vm3121, %v3119, %v3080
    %v3123 = vsel %vm3121, %v3120, %v3082
    %vm3124 = vcmask 130048
    %v3125 = vsel %vm3124, %v3122, %v3088
    %v3126 = vsel %vm3124, %v3123, %v3090
    %vm3127 = vcmask 162816
    %v3128 = vsel %vm3127, %v3125, %v3096
    %v3129 = vsel %vm3127, %v3126, %v3098
    %vm3130 = vcmask 195584
    %v3131 = vsel %vm3130, %v3128, %v3104
    %v3132 = vsel %vm3130, %v3129, %v3106
    %vm3133 = vcmask 228352
    %v3134 = vsel %vm3133, %v3131, %v3112
    %v3135 = vsel %vm3133, %v3132, %v3114
    %3138 = vrot.lane.b32.xlu0 %v396, 64
    %v3139 = vpop.permute.xlu0 %3138
    %3140 = vrot.lane.b32.xlu0 %v397, 64
    %v3141 = vpop.permute.xlu0 %3140
    %vm3144 = vcmask 261120
    %v3145 = vsel %vm3144, %v3134, %v3139
    %v3146 = vsel %vm3144, %v3135, %v3141
    %v3147 = vpack.c.bf16 %v3146, %v3145
    %v3148 = vld [vmem:[#allocation7] sm:$0xff]
    %v3149 = vld [vmem:[#allocation7 + $0x8] sm:$0xf]
    %v3150 = vld [vmem:[#allocation7 + $0xc] sm:$0xff]
    %v3151 = vld [vmem:[#allocation7 + $0x14] sm:$0xf]
    %v3152 = vld [vmem:[#allocation7 + $0x18] sm:$0xff]
    %v3153 = vld [vmem:[#allocation7 + $0x20] sm:$0xf]
    %v3154 = vld [vmem:[#allocation7 + $0x24] sm:$0xff]
    %v3155 = vld [vmem:[#allocation7 + $0x2c] sm:$0xf]
    %v3156 = vld [vmem:[#allocation7 + $0x30] sm:$0xff]
    %v3157 = vld [vmem:[#allocation7 + $0x38] sm:$0xf]
    %v3158 = vld [vmem:[#allocation7 + $0x3c] sm:$0xff]
    %v3159 = vld [vmem:[#allocation7 + $0x44] sm:$0xf]
    %v3160 = vld [vmem:[#allocation7 + $0x48] sm:$0xff]
    %v3161 = vld [vmem:[#allocation7 + $0x50] sm:$0xf]
    %v3162 = vld [vmem:[#allocation7 + $0x54] sm:$0xff]
    %v3163 = vld [vmem:[#allocation7 + $0x5c] sm:$0xf]
    %v3164 = vld [vmem:[%s4] sm:$0x7]
    %v3166 = vlaneseq
    %v3167 = vshrl.u32 %v3166, 7
    %v3168 = vsub.s32 0, %v3167
    %v3169 = vrot.slane %v3164, %v3168
    %v3170 = vlaneseq
    %v3171 = vshrl.u32 %v3170, 7
    %v3172 = vsub.s32 1, %v3171
    %v3173 = vrot.slane %v3164, %v3172
    %v3174 = vlaneseq
    %v3175 = vshrl.u32 %v3174, 7
    %v3176 = vsub.s32 2, %v3175
    %v3177 = vrot.slane %v3164, %v3176
    %v3197 = vunpack.c.l.b16 %v3148
    %v3198 = vunpack.c.h.b16 %v3148
    %v3199 = vunpack.c.l.b16 %v3149
    %v3200 = vunpack.c.l.b16 %v3150
    %v3201 = vunpack.c.h.b16 %v3150
    %v3202 = vunpack.c.l.b16 %v3151
    %v3203 = vunpack.c.l.b16 %v3152
    %v3204 = vunpack.c.h.b16 %v3152
    %v3205 = vunpack.c.l.b16 %v3153
    %v3206 = vunpack.c.l.b16 %v3154
    %v3207 = vunpack.c.h.b16 %v3154
    %v3208 = vunpack.c.l.b16 %v3155
    %v3209 = vunpack.c.l.b16 %v3156
    %v3210 = vunpack.c.h.b16 %v3156
    %v3211 = vunpack.c.l.b16 %v3157
    %v3212 = vunpack.c.l.b16 %v3158
    %v3213 = vunpack.c.h.b16 %v3158
    %v3214 = vunpack.c.l.b16 %v3159
    %v3215 = vunpack.c.l.b16 %v3160
    %v3216 = vunpack.c.h.b16 %v3160
    %v3217 = vunpack.c.l.b16 %v3161
    %v3218 = vunpack.c.l.b16 %v3162
    %v3219 = vunpack.c.h.b16 %v3162
    %v3220 = vunpack.c.l.b16 %v3163
    %v3221 = vpack.c.b16 %v3200, %v3197
    %v3222 = vpack.c.b16 %v3201, %v3198
    %v3223 = vpack.c.b16 %v3202, %v3199
    %v3224 = vpack.c.b16 %v3206, %v3203
    %v3225 = vpack.c.b16 %v3207, %v3204
    %v3226 = vpack.c.b16 %v3208, %v3205
    %v3227 = vpack.c.b16 %v3212, %v3209
    %v3228 = vpack.c.b16 %v3213, %v3210
    %v3229 = vpack.c.b16 %v3214, %v3211
    %v3230 = vpack.c.b16 %v3218, %v3215
    %v3231 = vpack.c.b16 %v3219, %v3216
    %v3232 = vpack.c.b16 %v3220, %v3217
    %vm3245 = vcmask 523264
    %v3247 = vsel %vm3245, %v3147, 0
    %3249 = vmatprep.subr.bf16.mxu0 %v3222
    %3250 = vmatpush1.bf16.msra.mxu0 %v3221
    %3251 = vmatprep.subr.bf16.mxu0 %v3225
    %3252 = vmatpush1.bf16.msra.mxu0 %v3224
    %3253 = vmatprep.subr.bf16.mxu0 %v3228
    %3254 = vmatpush1.bf16.msra.mxu0 %v3227
    %3255 = vmatprep.subr.bf16.mxu0 %v3231
    %3256 = vmatpush1.bf16.msra.mxu0 %v3230
    %3257 = vmatprep.subr.bf16.mxu0 0
    %3258 = vmatpush1.bf16.msra.mxu0 0
    %3259 = vmatprep.subr.bf16.mxu0 0
    %3260 = vmatpush1.bf16.msra.mxu0 0
    %3261 = vmatprep.subr.bf16.mxu0 0
    %3262 = vmatpush1.bf16.msra.mxu0 0
    %3263 = vmatprep.subr.bf16.mxu0 0
    %3264 = vmatpush1.bf16.msra.mxu0 0
    %3265 = vmatprep.subr.bf16.mxu0 0
    %3266 = vmatpush1.bf16.msra.mxu0 0
    %3267 = vmatprep.subr.bf16.mxu0 0
    %3268 = vmatpush1.bf16.msra.mxu0 0
    %3269 = vmatprep.subr.bf16.mxu0 0
    %3270 = vmatpush1.bf16.msra.mxu0 0
    %3271 = vmatprep.subr.bf16.mxu0 0
    %3272 = vmatpush1.bf16.msra.mxu0 0
    %3273 = vmatprep.subr.bf16.mxu0 0
    %3274 = vmatpush1.bf16.msra.mxu0 0
    %3275 = vmatprep.subr.bf16.mxu0 0
    %3276 = vmatpush1.bf16.msra.mxu0 0
    %3277 = vmatprep.subr.bf16.mxu0 0
    %3278 = vmatpush1.bf16.msra.mxu0 0
    %3279 = vmatprep.subr.bf16.mxu0 0
    %3280 = vmatpush1.bf16.msra.mxu0 0
    %3281 = vmatprep.mubr.bf16.mxu0 0
    %3282 = vmatmul.mubr.bf16.gmra.mrb[0].mxu0 %v3247
    %v3283 = vpop.f32.mrb[0].mxu0
    %v3284 = vadd.f32 %v3169, %v3283
    %v3285 = vpop.f32.mrb[0].mxu0
    %v3286 = vadd.f32 %v3173, %v3285
    %v3287 = vpop.f32.mrb[0].mxu0
    %v3288 = vadd.f32 %v3169, %v3287
    %v3289 = vpop.f32.mrb[0].mxu0
    %v3290 = vadd.f32 %v3173, %v3289
    %3291 = vdwg.mxu0
    %3292 = vmatprep.subr.bf16.mxu0 0
    %3293 = vmatpush1.bf16.msra.mxu0 %v3223
    %3294 = vmatprep.subr.bf16.mxu0 0
    %3295 = vmatpush1.bf16.msra.mxu0 %v3226
    %3296 = vmatprep.subr.bf16.mxu0 0
    %3297 = vmatpush1.bf16.msra.mxu0 %v3229
    %3298 = vmatprep.subr.bf16.mxu0 0
    %3299 = vmatpush1.bf16.msra.mxu0 %v3232
    %3300 = vmatprep.subr.bf16.mxu0 0
    %3301 = vmatpush1.bf16.msra.mxu0 0
    %3302 = vmatprep.subr.bf16.mxu0 0
    %3303 = vmatpush1.bf16.msra.mxu0 0
    %3304 = vmatprep.subr.bf16.mxu0 0
    %3305 = vmatpush1.bf16.msra.mxu0 0
    %3306 = vmatprep.subr.bf16.mxu0 0
    %3307 = vmatpush1.bf16.msra.mxu0 0
    %3308 = vmatprep.subr.bf16.mxu0 0
    %3309 = vmatpush1.bf16.msra.mxu0 0
    %3310 = vmatprep.subr.bf16.mxu0 0
    %3311 = vmatpush1.bf16.msra.mxu0 0
    %3312 = vmatprep.subr.bf16.mxu0 0
    %3313 = vmatpush1.bf16.msra.mxu0 0
    %3314 = vmatprep.subr.bf16.mxu0 0
    %3315 = vmatpush1.bf16.msra.mxu0 0
    %3316 = vmatprep.subr.bf16.mxu0 0
    %3317 = vmatpush1.bf16.msra.mxu0 0
    %3318 = vmatprep.subr.bf16.mxu0 0
    %3319 = vmatpush1.bf16.msra.mxu0 0
    %3320 = vmatprep.subr.bf16.mxu0 0
    %3321 = vmatpush1.bf16.msra.mxu0 0
    %3322 = vmatprep.subr.bf16.mxu0 0
    %3323 = vmatpush1.bf16.msra.mxu0 0
    %3324 = vmatprep.mubr.bf16.mxu0 0
    %3325 = vmatmul.mubr.bf16.gmra.mrb[0].mxu0 %v3247
    %v3326 = vpop.f32.mrb[0].mxu0
    %v3327 = vadd.f32 %v3177, %v3326
    %v3328 = vpop.f32.mrb[0].mxu0
    %v3329 = vpop.f32.mrb[0].mxu0
    %v3330 = vadd.f32 %v3177, %v3329
    %v3331 = vpop.f32.mrb[0].mxu0
    %3332 = vdwg.mxu0
    %v3333 = vadd.f32 %v63, %v3284
    %v3334 = vadd.f32 %v64, %v3286
    %v3335 = vadd.f32 %v65, %v3327
    %v3336 = vadd.f32 %v66, %v3288
    %v3337 = vadd.f32 %v67, %v3290
    %v3338 = vadd.f32 %v68, %v3330
    %3339 = vst [vmem:[#allocation8] sm:$0xff] %v3333
    %3340 = vst [vmem:[#allocation8 + $0x8] sm:$0xff] %v3334
    %3341 = vst [vmem:[#allocation8 + $0x10] sm:$0xff] %v3335
    %3342 = vst [vmem:[#allocation8 + $0x18] sm:$0xff] %v3336
    %3343 = vst [vmem:[#allocation8 + $0x20] sm:$0xff] %v3337
    %3344 = vst [vmem:[#allocation8 + $0x28] sm:$0xff] %v3338
    // Predicated region
    $region34: #{tpu_custom_call.1} parent=1 // pred_check
      _
    $region35: #{tpu_custom_call.1} parent=1 // pred_check_branch
      %3346 = sbr.rel (0) target = $region37
    $region36: #{tpu_custom_call.1} parent=1 // pred_region
      %s3348 = ssub.s32 768, 768
      %3349 = vsyncadd [#allocation4], %s3348
      %s3350 = sshll.u32 [#allocation8], 4
      %s3351 = int_to_ptr.vmem [resolvable:$true] %s3350
      %3356 = dma.vmem_to_hbm [thread:$0]  %s3351, 768, %s5, [#allocation4], 384, 384, 24
    $region37: #{tpu_custom_call.1} parent=1 // pred_fallthru
      _
    // Predicated region
    $region38: #{tpu_custom_call.1} parent=1 // pred_check
      _
    $region39: #{tpu_custom_call.1} parent=1 // pred_check_branch
      %3358 = sbr.rel (0) target = $region41
    $region40: #{tpu_custom_call.1} parent=1 // pred_region
      %3359 = dma.done [#allocation4], 768
    $region41: #{tpu_custom_call.1} parent=1 // pred_fallthru
      _
    %3360 = vsyncpa [#allocation3], 1
    %3361 = vsyncpa [#allocation6], 1
    %3362 = vsyncpa [#allocation4], 1

</llo_original>
